<compile_context>
chip_gen: v5e
topology: v5e:2x2
jax: 0.10.0
libtpu: 0.0.40
codegen_flags: <defaults>
</compile_context>

<pallas_src>
import jax
import jax.numpy as jnp
from jax import lax
from jax.experimental import pallas as pl
from jax.experimental.pallas import tpu as pltpu


def _round_up(x, m):
    return (x + m - 1) // m * m


def resblock_kernel(x_ref, xp_ref, w1_ref, s1_ref, b1_ref,
                    w2_ref, s2_ref, b2_ref, o_ref, col_ref, tpad_ref):
    # x_ref   : (1, H, W, Cp)        unpadded input tile (skip connection)
    # xp_ref  : (1, H+2, W+2, Cp)    spatially zero-padded input tile
    # w1_ref  : (9*Cp, Dp)           conv1 weights as an im2col slab
    # s1/b1   : (1, Dp)              folded BN1 scale / bias (f32)
    # w2_ref  : (9*Dp, Dp)           conv2 weights as an im2col slab
    # s2/b2   : (1, Dp)              folded BN2 scale / bias (f32)
    # o_ref   : (1, H, W, Dp)        output tile
    # col_ref : (H*W, 9*Cp) VMEM     im2col scratch (reused for both convs)
    # tpad_ref: (H+2, W+2, Dp) VMEM  zero-bordered staging scratch for conv2
    H, W, Dp = o_ref.shape[1], o_ref.shape[2], o_ref.shape[3]
    HW = H * W
    cdt = col_ref.dtype                       # MXU input dtype (f32 or bf16)

    xp = xp_ref[0]                            # (H+2, W+2, Cp)
    Cp = xp.shape[-1]

    # ---- conv1: build im2col (lane-aligned column blocks), one MXU dot ----
    k = 0
    for dy in range(3):
        for dx in range(3):
            col_ref[:, k * Cp:(k + 1) * Cp] = (
                xp[dy:dy + H, dx:dx + W, :].reshape(HW, Cp).astype(cdt))
            k += 1
    acc1 = jnp.dot(col_ref[...], w1_ref[...],
                   preferred_element_type=jnp.float32)        # (HW, Dp) f32

    # ---- BN1 + ReLU (fused finalize) ----
    t = jnp.maximum(acc1 * s1_ref[...] + b1_ref[...], 0.0)    # (HW, Dp) f32

    # ---- stage t into the zero-bordered scratch for conv2's SAME padding ---
    zrow = jnp.zeros((1, W + 2, Dp), jnp.float32)
    zcol = jnp.zeros((H + 2, 1, Dp), jnp.float32)
    tpad_ref[0:1, :, :] = zrow
    tpad_ref[H + 1:H + 2, :, :] = zrow
    tpad_ref[:, 0:1, :] = zcol
    tpad_ref[:, W + 1:W + 2, :] = zcol
    tpad_ref[1:H + 1, 1:W + 1, :] = t.reshape(H, W, Dp)
    tp = tpad_ref[...]                        # (H+2, W+2, Dp)

    # ---- conv2: im2col + one MXU dot ----
    k = 0
    for dy in range(3):
        for dx in range(3):
            col_ref[:, k * Dp:(k + 1) * Dp] = (
                tp[dy:dy + H, dx:dx + W, :].reshape(HW, Dp).astype(cdt))
            k += 1
    acc2 = jnp.dot(col_ref[...], w2_ref[...],
                   preferred_element_type=jnp.float32)        # (HW, Dp) f32

    # ---- BN2 + skip-add + ReLU, single output store ----
    x_flat = x_ref[0].reshape(HW, Cp).astype(jnp.float32)
    out = jnp.maximum(acc2 * s2_ref[...] + b2_ref[...] + x_flat, 0.0)
    o_ref[0] = out.reshape(H, W, Dp).astype(o_ref.dtype)


def resblock_pallas(x_nchw, w1_oihw, bn1, w2_oihw, bn2, eps=1e-5,
                    compute_dtype=jnp.float32):
    """x_nchw: (N, C, H, W) float32.  Returns NCHW output (module interface)."""
    N, Cin, H, W = x_nchw.shape
    D = w1_oihw.shape[0]
    assert Cin == D, "ResBlock skip-add requires D_in == D"

    # Lane-dense channel padding (multiple of 128).
    Cp = _round_up(Cin, 128)
    Dp = Cp

    # NCHW -> NHWC, pad channels; a second, spatially pre-padded copy feeds
    # the 3x3 'same' conv taps.  (Kept NCHW at the boundary to match the
    # PyTorch module; an NHWC end-to-end model would drop these transposes.)
    x_nhwc = jnp.transpose(x_nchw, (0, 2, 3, 1)).astype(jnp.float32)
    x_cp = jnp.pad(x_nhwc, ((0, 0), (0, 0), (0, 0), (0, Cp - Cin)))
    x_sp = jnp.pad(x_cp, ((0, 0), (1, 1), (1, 1), (0, 0)))

    # OIHW -> HWIO -> zero-pad channels -> (9*Cp, Dp) im2col weight slab.
    def make_slab(w_oihw, ci):
        w = jnp.transpose(w_oihw, (2, 3, 1, 0)).astype(jnp.float32)
        w = jnp.pad(w, ((0, 0), (0, 0), (0, Cp - ci), (0, Dp - w.shape[-1])))
        return w.reshape(9 * Cp, Dp).astype(compute_dtype)

    w1_slab = make_slab(w1_oihw, Cin)
    w2_slab = make_slab(w2_oihw, D)

    def fold_bn(bn):
        gamma, beta, mean, var = bn
        scale = gamma / jnp.sqrt(var + eps)
        bias = beta - mean * scale
        scale = jnp.pad(scale.astype(jnp.float32), (0, Dp - D))
        bias = jnp.pad(bias.astype(jnp.float32), (0, Dp - D))
        return scale.reshape(1, Dp), bias.reshape(1, Dp)

    s1, b1 = fold_bn(bn1)
    s2, b2 = fold_bn(bn2)

    full = lambda shape: pl.BlockSpec(shape, lambda n: (0,) * len(shape))

    out_nhwc_p = pl.pallas_call(
        resblock_kernel,
        out_shape=jax.ShapeDtypeStruct((N, H, W, Dp), jnp.float32),
        grid_spec=pltpu.PrefetchScalarGridSpec(
            num_scalar_prefetch=0,
            grid=(N,),
            in_specs=[
                pl.BlockSpec((1, H, W, Cp), lambda n: (n, 0, 0, 0)),
                pl.BlockSpec((1, H + 2, W + 2, Cp), lambda n: (n, 0, 0, 0)),
                full((9 * Cp, Dp)),
                full((1, Dp)),
                full((1, Dp)),
                full((9 * Dp, Dp)),
                full((1, Dp)),
                full((1, Dp)),
            ],
            out_specs=pl.BlockSpec((1, H, W, Dp), lambda n: (n, 0, 0, 0)),
            scratch_shapes=[
                pltpu.VMEM((H * W, 9 * Cp), compute_dtype),     # im2col
                pltpu.VMEM((H + 2, W + 2, Dp), jnp.float32),    # padded t
            ],
        ),
        compiler_params=pltpu.CompilerParams(
            dimension_semantics=("parallel",),
            vmem_limit_bytes=48 * 1024 * 1024),
    )(x_cp, x_sp, w1_slab, s1, b1, w2_slab, s2, b2)

    # Drop channel padding, back to the module's NCHW interface.
    return jnp.transpose(out_nhwc_p[..., :D], (0, 3, 1, 2))


def resblock_reference(x_nchw, w1_oihw, bn1, w2_oihw, bn2, eps=1e-5):
    """Pure-JAX reference mirroring the PyTorch forward (eval-mode BN)."""
    def conv(x, w_oihw):
        return lax.conv_general_dilated(
            x, w_oihw, window_strides=(1, 1), padding='SAME',
            dimension_numbers=('NCHW', 'OIHW', 'NCHW'))

    def bn(x, p):
        gamma, beta, mean, var = [a.reshape(1, -1, 1, 1) for a in p]
        return (x - mean) / jnp.sqrt(var + eps) * gamma + beta

    t = jax.nn.relu(bn(conv(x_nchw, w1_oihw), bn1))
    t = bn(conv(t, w2_oihw), bn2)
    return jax.nn.relu(x_nchw + t)


if __name__ == "__main__":
    key = jax.random.PRNGKey(0)
    N, D, H, W = 2, 4, 16, 16   # D_in == D (required by the skip connection)

    ks = jax.random.split(key, 9)
    x = jax.random.normal(ks[0], (N, D, H, W), jnp.float32)

    w1 = jax.random.normal(ks[1], (D, D, 3, 3), jnp.float32) * 0.1
    w2 = jax.random.normal(ks[2], (D, D, 3, 3), jnp.float32) * 0.1

    bn1 = (jax.random.uniform(ks[3], (D,), jnp.float32, 0.5, 1.5),   # gamma
           jax.random.normal(ks[4], (D,), jnp.float32) * 0.1,        # beta
           jax.random.normal(ks[5], (D,), jnp.float32) * 0.1,        # running_mean
           jax.random.uniform(ks[6], (D,), jnp.float32, 0.5, 1.5))   # running_var
    bn2 = (jax.random.uniform(ks[7], (D,), jnp.float32, 0.5, 1.5),
           jax.random.normal(ks[8], (D,), jnp.float32) * 0.1,
           jnp.zeros((D,), jnp.float32),
           jnp.ones((D,), jnp.float32))

    out = jax.block_until_ready(jax.jit(resblock_pallas)(x, w1, bn1, w2, bn2))

    ref = resblock_reference(x, w1, bn1, w2, bn2)
    assert out.shape == (N, D, H, W)
    max_err = jnp.max(jnp.abs(out - ref))
    assert jnp.allclose(out, ref, atol=1e-4, rtol=1e-4), \
        f"max abs err {max_err}"

    print("KERNEL_OK")
</pallas_src>

<mosaic_0001>
module attributes {stable_mosaic.version = 11 : i64} {
  func.func @resblock_kernel(%arg0: i32, %arg1: memref<1x16x16x128xf32, #tpu.memory_space<vmem>>, %arg2: memref<1x18x18x128xf32, #tpu.memory_space<vmem>>, %arg3: memref<1152x128xf32, #tpu.memory_space<vmem>>, %arg4: memref<1x128xf32, #tpu.memory_space<vmem>>, %arg5: memref<1x128xf32, #tpu.memory_space<vmem>>, %arg6: memref<1152x128xf32, #tpu.memory_space<vmem>>, %arg7: memref<1x128xf32, #tpu.memory_space<vmem>>, %arg8: memref<1x128xf32, #tpu.memory_space<vmem>>, %arg9: memref<1x16x16x128xf32, #tpu.memory_space<vmem>>, %arg10: memref<256x1152xf32, #tpu.memory_space<vmem>>, %arg11: memref<18x18x128xf32, #tpu.memory_space<vmem>>) attributes {dimension_semantics = [#tpu.dimension_semantics<parallel>], iteration_bounds = array<i64: 2>, scalar_prefetch = 0 : i64, scratch_operands = 2 : i64, tpu.core_type = #tpu.core_type<tc>, window_params = [{transform_indices = @transform_0, window_bounds = array<i64: 1, 16, 16, 128>}, {transform_indices = @transform_1, window_bounds = array<i64: 1, 18, 18, 128>}, {pipeline_mode = #tpu.pipeline_mode<synchronous>, transform_indices = @transform_2, window_bounds = array<i64: 1152, 128>}, {pipeline_mode = #tpu.pipeline_mode<synchronous>, transform_indices = @transform_3, window_bounds = array<i64: 1, 128>}, {pipeline_mode = #tpu.pipeline_mode<synchronous>, transform_indices = @transform_4, window_bounds = array<i64: 1, 128>}, {pipeline_mode = #tpu.pipeline_mode<synchronous>, transform_indices = @transform_5, window_bounds = array<i64: 1152, 128>}, {pipeline_mode = #tpu.pipeline_mode<synchronous>, transform_indices = @transform_6, window_bounds = array<i64: 1, 128>}, {pipeline_mode = #tpu.pipeline_mode<synchronous>, transform_indices = @transform_7, window_bounds = array<i64: 1, 128>}, {transform_indices = @transform_8, window_bounds = array<i64: 1, 16, 16, 128>}]} {
    %c0 = arith.constant 0 : index
    %c0_0 = arith.constant 0 : index
    %c0_1 = arith.constant 0 : index
    %c0_2 = arith.constant 0 : index
    %0 = vector.load %arg2[%c0, %c0_0, %c0_1, %c0_2] : memref<1x18x18x128xf32, #tpu.memory_space<vmem>>, vector<1x18x18x128xf32>
    %1 = vector.shape_cast %0 : vector<1x18x18x128xf32> to vector<18x18x128xf32>
    %2 = vector.extract_strided_slice %1 {offsets = [0, 0, 0], sizes = [16, 16, 128], strides = [1, 1, 1]} : vector<18x18x128xf32> to vector<16x16x128xf32>
    %3 = vector.shape_cast %2 : vector<16x16x128xf32> to vector<256x128xf32>
    %c0_3 = arith.constant 0 : index
    %c0_4 = arith.constant 0 : index
    %4 = vector.load %arg10[%c0_3, %c0_4] : memref<256x1152xf32, #tpu.memory_space<vmem>>, vector<256x128xf32>
    tpu.vector_store %arg10[%c0_3, %c0_4], %3 {strides = array<i32>} : memref<256x1152xf32, #tpu.memory_space<vmem>>, vector<256x128xf32>,
    %5 = vector.extract_strided_slice %1 {offsets = [0, 1, 0], sizes = [16, 16, 128], strides = [1, 1, 1]} : vector<18x18x128xf32> to vector<16x16x128xf32>
    %6 = vector.shape_cast %5 : vector<16x16x128xf32> to vector<256x128xf32>
    %c0_5 = arith.constant 0 : index
    %c128 = arith.constant 128 : index
    %7 = vector.load %arg10[%c0_5, %c128] : memref<256x1152xf32, #tpu.memory_space<vmem>>, vector<256x128xf32>
    tpu.vector_store %arg10[%c0_5, %c128], %6 {strides = array<i32>} : memref<256x1152xf32, #tpu.memory_space<vmem>>, vector<256x128xf32>,
    %8 = vector.extract_strided_slice %1 {offsets = [0, 2, 0], sizes = [16, 16, 128], strides = [1, 1, 1]} : vector<18x18x128xf32> to vector<16x16x128xf32>
    %9 = vector.shape_cast %8 : vector<16x16x128xf32> to vector<256x128xf32>
    %c0_6 = arith.constant 0 : index
    %c256 = arith.constant 256 : index
    %10 = vector.load %arg10[%c0_6, %c256] : memref<256x1152xf32, #tpu.memory_space<vmem>>, vector<256x128xf32>
    tpu.vector_store %arg10[%c0_6, %c256], %9 {strides = array<i32>} : memref<256x1152xf32, #tpu.memory_space<vmem>>, vector<256x128xf32>,
    %11 = vector.extract_strided_slice %1 {offsets = [1, 0, 0], sizes = [16, 16, 128], strides = [1, 1, 1]} : vector<18x18x128xf32> to vector<16x16x128xf32>
    %12 = vector.shape_cast %11 : vector<16x16x128xf32> to vector<256x128xf32>
    %c0_7 = arith.constant 0 : index
    %c384 = arith.constant 384 : index
    %13 = vector.load %arg10[%c0_7, %c384] : memref<256x1152xf32, #tpu.memory_space<vmem>>, vector<256x128xf32>
    tpu.vector_store %arg10[%c0_7, %c384], %12 {strides = array<i32>} : memref<256x1152xf32, #tpu.memory_space<vmem>>, vector<256x128xf32>,
    %14 = vector.extract_strided_slice %1 {offsets = [1, 1, 0], sizes = [16, 16, 128], strides = [1, 1, 1]} : vector<18x18x128xf32> to vector<16x16x128xf32>
    %15 = vector.shape_cast %14 : vector<16x16x128xf32> to vector<256x128xf32>
    %c0_8 = arith.constant 0 : index
    %c512 = arith.constant 512 : index
    %16 = vector.load %arg10[%c0_8, %c512] : memref<256x1152xf32, #tpu.memory_space<vmem>>, vector<256x128xf32>
    tpu.vector_store %arg10[%c0_8, %c512], %15 {strides = array<i32>} : memref<256x1152xf32, #tpu.memory_space<vmem>>, vector<256x128xf32>,
    %17 = vector.extract_strided_slice %1 {offsets = [1, 2, 0], sizes = [16, 16, 128], strides = [1, 1, 1]} : vector<18x18x128xf32> to vector<16x16x128xf32>
    %18 = vector.shape_cast %17 : vector<16x16x128xf32> to vector<256x128xf32>
    %c0_9 = arith.constant 0 : index
    %c640 = arith.constant 640 : index
    %19 = vector.load %arg10[%c0_9, %c640] : memref<256x1152xf32, #tpu.memory_space<vmem>>, vector<256x128xf32>
    tpu.vector_store %arg10[%c0_9, %c640], %18 {strides = array<i32>} : memref<256x1152xf32, #tpu.memory_space<vmem>>, vector<256x128xf32>,
    %20 = vector.extract_strided_slice %1 {offsets = [2, 0, 0], sizes = [16, 16, 128], strides = [1, 1, 1]} : vector<18x18x128xf32> to vector<16x16x128xf32>
    %21 = vector.shape_cast %20 : vector<16x16x128xf32> to vector<256x128xf32>
    %c0_10 = arith.constant 0 : index
    %c768 = arith.constant 768 : index
    %22 = vector.load %arg10[%c0_10, %c768] : memref<256x1152xf32, #tpu.memory_space<vmem>>, vector<256x128xf32>
    tpu.vector_store %arg10[%c0_10, %c768], %21 {strides = array<i32>} : memref<256x1152xf32, #tpu.memory_space<vmem>>, vector<256x128xf32>,
    %23 = vector.extract_strided_slice %1 {offsets = [2, 1, 0], sizes = [16, 16, 128], strides = [1, 1, 1]} : vector<18x18x128xf32> to vector<16x16x128xf32>
    %24 = vector.shape_cast %23 : vector<16x16x128xf32> to vector<256x128xf32>
    %c0_11 = arith.constant 0 : index
    %c896 = arith.constant 896 : index
    %25 = vector.load %arg10[%c0_11, %c896] : memref<256x1152xf32, #tpu.memory_space<vmem>>, vector<256x128xf32>
    tpu.vector_store %arg10[%c0_11, %c896], %24 {strides = array<i32>} : memref<256x1152xf32, #tpu.memory_space<vmem>>, vector<256x128xf32>,
    %26 = vector.extract_strided_slice %1 {offsets = [2, 2, 0], sizes = [16, 16, 128], strides = [1, 1, 1]} : vector<18x18x128xf32> to vector<16x16x128xf32>
    %27 = vector.shape_cast %26 : vector<16x16x128xf32> to vector<256x128xf32>
    %c0_12 = arith.constant 0 : index
    %c1024 = arith.constant 1024 : index
    %28 = vector.load %arg10[%c0_12, %c1024] : memref<256x1152xf32, #tpu.memory_space<vmem>>, vector<256x128xf32>
    tpu.vector_store %arg10[%c0_12, %c1024], %27 {strides = array<i32>} : memref<256x1152xf32, #tpu.memory_space<vmem>>, vector<256x128xf32>,
    %c0_13 = arith.constant 0 : index
    %c0_14 = arith.constant 0 : index
    %29 = vector.load %arg10[%c0_13, %c0_14] : memref<256x1152xf32, #tpu.memory_space<vmem>>, vector<256x1152xf32>
    %c0_15 = arith.constant 0 : index
    %c0_16 = arith.constant 0 : index
    %30 = vector.load %arg3[%c0_15, %c0_16] : memref<1152x128xf32, #tpu.memory_space<vmem>>, vector<1152x128xf32>
    %cst = arith.constant dense<0.000000e+00> : vector<256x128xf32>
    %31 = tpu.matmul %29, %30, %cst {dimension_numbers = #tpu.dot_dimension_numbers<[1], [0], [0], [1], [0, 0, 1, 1], [], []>} : vector<256x1152xf32>, vector<1152x128xf32>, vector<256x128xf32> -> vector<256x128xf32>
    %c0_17 = arith.constant 0 : index
    %c0_18 = arith.constant 0 : index
    %32 = vector.load %arg4[%c0_17, %c0_18] : memref<1x128xf32, #tpu.memory_space<vmem>>, vector<1x128xf32>
    %33 = vector.broadcast %32 : vector<1x128xf32> to vector<256x128xf32>
    %34 = arith.mulf %31, %33 : vector<256x128xf32>
    %c0_19 = arith.constant 0 : index
    %c0_20 = arith.constant 0 : index
    %35 = vector.load %arg5[%c0_19, %c0_20] : memref<1x128xf32, #tpu.memory_space<vmem>>, vector<1x128xf32>
    %36 = vector.broadcast %35 : vector<1x128xf32> to vector<256x128xf32>
    %37 = arith.addf %34, %36 : vector<256x128xf32>
    %cst_21 = arith.constant 0.000000e+00 : f32
    %38 = vector.broadcast %cst_21 : f32 to vector<256x128xf32>
    %39 = arith.maximumf %37, %38 : vector<256x128xf32>
    %cst_22 = arith.constant 0.000000e+00 : f32
    %40 = vector.broadcast %cst_22 : f32 to vector<1x18x128xf32>
    %cst_23 = arith.constant 0.000000e+00 : f32
    %41 = vector.broadcast %cst_23 : f32 to vector<18x1x128xf32>
    %c0_24 = arith.constant 0 : index
    %c0_25 = arith.constant 0 : index
    %c0_26 = arith.constant 0 : index
    %42 = vector.load %arg11[%c0_24, %c0_25, %c0_26] : memref<18x18x128xf32, #tpu.memory_space<vmem>>, vector<1x18x128xf32>
    tpu.vector_store %arg11[%c0_24, %c0_25, %c0_26], %40 {strides = array<i32>} : memref<18x18x128xf32, #tpu.memory_space<vmem>>, vector<1x18x128xf32>,
    %c17 = arith.constant 17 : index
    %c0_27 = arith.constant 0 : index
    %c0_28 = arith.constant 0 : index
    %43 = vector.load %arg11[%c17, %c0_27, %c0_28] : memref<18x18x128xf32, #tpu.memory_space<vmem>>, vector<1x18x128xf32>
    tpu.vector_store %arg11[%c17, %c0_27, %c0_28], %40 {strides = array<i32>} : memref<18x18x128xf32, #tpu.memory_space<vmem>>, vector<1x18x128xf32>,
    %c0_29 = arith.constant 0 : index
    %c0_30 = arith.constant 0 : index
    %c0_31 = arith.constant 0 : index
    %44 = vector.load %arg11[%c0_29, %c0_30, %c0_31] : memref<18x18x128xf32, #tpu.memory_space<vmem>>, vector<18x1x128xf32>
    tpu.vector_store %arg11[%c0_29, %c0_30, %c0_31], %41 {strides = array<i32>} : memref<18x18x128xf32, #tpu.memory_space<vmem>>, vector<18x1x128xf32>,
    %c0_32 = arith.constant 0 : index
    %c17_33 = arith.constant 17 : index
    %c0_34 = arith.constant 0 : index
    %45 = vector.load %arg11[%c0_32, %c17_33, %c0_34] : memref<18x18x128xf32, #tpu.memory_space<vmem>>, vector<18x1x128xf32>
    tpu.vector_store %arg11[%c0_32, %c17_33, %c0_34], %41 {strides = array<i32>} : memref<18x18x128xf32, #tpu.memory_space<vmem>>, vector<18x1x128xf32>,
    %46 = vector.shape_cast %39 : vector<256x128xf32> to vector<16x16x128xf32>
    %c1 = arith.constant 1 : index
    %c1_35 = arith.constant 1 : index
    %c0_36 = arith.constant 0 : index
    %47 = vector.load %arg11[%c1, %c1_35, %c0_36] : memref<18x18x128xf32, #tpu.memory_space<vmem>>, vector<16x16x128xf32>
    tpu.vector_store %arg11[%c1, %c1_35, %c0_36], %46 {strides = array<i32>} : memref<18x18x128xf32, #tpu.memory_space<vmem>>, vector<16x16x128xf32>,
    %c0_37 = arith.constant 0 : index
    %c0_38 = arith.constant 0 : index
    %c0_39 = arith.constant 0 : index
    %48 = vector.load %arg11[%c0_37, %c0_38, %c0_39] : memref<18x18x128xf32, #tpu.memory_space<vmem>>, vector<18x18x128xf32>
    %49 = vector.extract_strided_slice %48 {offsets = [0, 0, 0], sizes = [16, 16, 128], strides = [1, 1, 1]} : vector<18x18x128xf32> to vector<16x16x128xf32>
    %50 = vector.shape_cast %49 : vector<16x16x128xf32> to vector<256x128xf32>
    %c0_40 = arith.constant 0 : index
    %c0_41 = arith.constant 0 : index
    %51 = vector.load %arg10[%c0_40, %c0_41] : memref<256x1152xf32, #tpu.memory_space<vmem>>, vector<256x128xf32>
    tpu.vector_store %arg10[%c0_40, %c0_41], %50 {strides = array<i32>} : memref<256x1152xf32, #tpu.memory_space<vmem>>, vector<256x128xf32>,
    %52 = vector.extract_strided_slice %48 {offsets = [0, 1, 0], sizes = [16, 16, 128], strides = [1, 1, 1]} : vector<18x18x128xf32> to vector<16x16x128xf32>
    %53 = vector.shape_cast %52 : vector<16x16x128xf32> to vector<256x128xf32>
    %c0_42 = arith.constant 0 : index
    %c128_43 = arith.constant 128 : index
    %54 = vector.load %arg10[%c0_42, %c128_43] : memref<256x1152xf32, #tpu.memory_space<vmem>>, vector<256x128xf32>
    tpu.vector_store %arg10[%c0_42, %c128_43], %53 {strides = array<i32>} : memref<256x1152xf32, #tpu.memory_space<vmem>>, vector<256x128xf32>,
    %55 = vector.extract_strided_slice %48 {offsets = [0, 2, 0], sizes = [16, 16, 128], strides = [1, 1, 1]} : vector<18x18x128xf32> to vector<16x16x128xf32>
    %56 = vector.shape_cast %55 : vector<16x16x128xf32> to vector<256x128xf32>
    %c0_44 = arith.constant 0 : index
    %c256_45 = arith.constant 256 : index
    %57 = vector.load %arg10[%c0_44, %c256_45] : memref<256x1152xf32, #tpu.memory_space<vmem>>, vector<256x128xf32>
    tpu.vector_store %arg10[%c0_44, %c256_45], %56 {strides = array<i32>} : memref<256x1152xf32, #tpu.memory_space<vmem>>, vector<256x128xf32>,
    %58 = vector.extract_strided_slice %48 {offsets = [1, 0, 0], sizes = [16, 16, 128], strides = [1, 1, 1]} : vector<18x18x128xf32> to vector<16x16x128xf32>
    %59 = vector.shape_cast %58 : vector<16x16x128xf32> to vector<256x128xf32>
    %c0_46 = arith.constant 0 : index
    %c384_47 = arith.constant 384 : index
    %60 = vector.load %arg10[%c0_46, %c384_47] : memref<256x1152xf32, #tpu.memory_space<vmem>>, vector<256x128xf32>
    tpu.vector_store %arg10[%c0_46, %c384_47], %59 {strides = array<i32>} : memref<256x1152xf32, #tpu.memory_space<vmem>>, vector<256x128xf32>,
    %61 = vector.extract_strided_slice %48 {offsets = [1, 1, 0], sizes = [16, 16, 128], strides = [1, 1, 1]} : vector<18x18x128xf32> to vector<16x16x128xf32>
    %62 = vector.shape_cast %61 : vector<16x16x128xf32> to vector<256x128xf32>
    %c0_48 = arith.constant 0 : index
    %c512_49 = arith.constant 512 : index
    %63 = vector.load %arg10[%c0_48, %c512_49] : memref<256x1152xf32, #tpu.memory_space<vmem>>, vector<256x128xf32>
    tpu.vector_store %arg10[%c0_48, %c512_49], %62 {strides = array<i32>} : memref<256x1152xf32, #tpu.memory_space<vmem>>, vector<256x128xf32>,
    %64 = vector.extract_strided_slice %48 {offsets = [1, 2, 0], sizes = [16, 16, 128], strides = [1, 1, 1]} : vector<18x18x128xf32> to vector<16x16x128xf32>
    %65 = vector.shape_cast %64 : vector<16x16x128xf32> to vector<256x128xf32>
    %c0_50 = arith.constant 0 : index
    %c640_51 = arith.constant 640 : index
    %66 = vector.load %arg10[%c0_50, %c640_51] : memref<256x1152xf32, #tpu.memory_space<vmem>>, vector<256x128xf32>
    tpu.vector_store %arg10[%c0_50, %c640_51], %65 {strides = array<i32>} : memref<256x1152xf32, #tpu.memory_space<vmem>>, vector<256x128xf32>,
    %67 = vector.extract_strided_slice %48 {offsets = [2, 0, 0], sizes = [16, 16, 128], strides = [1, 1, 1]} : vector<18x18x128xf32> to vector<16x16x128xf32>
    %68 = vector.shape_cast %67 : vector<16x16x128xf32> to vector<256x128xf32>
    %c0_52 = arith.constant 0 : index
    %c768_53 = arith.constant 768 : index
    %69 = vector.load %arg10[%c0_52, %c768_53] : memref<256x1152xf32, #tpu.memory_space<vmem>>, vector<256x128xf32>
    tpu.vector_store %arg10[%c0_52, %c768_53], %68 {strides = array<i32>} : memref<256x1152xf32, #tpu.memory_space<vmem>>, vector<256x128xf32>,
    %70 = vector.extract_strided_slice %48 {offsets = [2, 1, 0], sizes = [16, 16, 128], strides = [1, 1, 1]} : vector<18x18x128xf32> to vector<16x16x128xf32>
    %71 = vector.shape_cast %70 : vector<16x16x128xf32> to vector<256x128xf32>
    %c0_54 = arith.constant 0 : index
    %c896_55 = arith.constant 896 : index
    %72 = vector.load %arg10[%c0_54, %c896_55] : memref<256x1152xf32, #tpu.memory_space<vmem>>, vector<256x128xf32>
    tpu.vector_store %arg10[%c0_54, %c896_55], %71 {strides = array<i32>} : memref<256x1152xf32, #tpu.memory_space<vmem>>, vector<256x128xf32>,
    %73 = vector.extract_strided_slice %48 {offsets = [2, 2, 0], sizes = [16, 16, 128], strides = [1, 1, 1]} : vector<18x18x128xf32> to vector<16x16x128xf32>
    %74 = vector.shape_cast %73 : vector<16x16x128xf32> to vector<256x128xf32>
    %c0_56 = arith.constant 0 : index
    %c1024_57 = arith.constant 1024 : index
    %75 = vector.load %arg10[%c0_56, %c1024_57] : memref<256x1152xf32, #tpu.memory_space<vmem>>, vector<256x128xf32>
    tpu.vector_store %arg10[%c0_56, %c1024_57], %74 {strides = array<i32>} : memref<256x1152xf32, #tpu.memory_space<vmem>>, vector<256x128xf32>,
    %c0_58 = arith.constant 0 : index
    %c0_59 = arith.constant 0 : index
    %76 = vector.load %arg10[%c0_58, %c0_59] : memref<256x1152xf32, #tpu.memory_space<vmem>>, vector<256x1152xf32>
    %c0_60 = arith.constant 0 : index
    %c0_61 = arith.constant 0 : index
    %77 = vector.load %arg6[%c0_60, %c0_61] : memref<1152x128xf32, #tpu.memory_space<vmem>>, vector<1152x128xf32>
    %cst_62 = arith.constant dense<0.000000e+00> : vector<256x128xf32>
    %78 = tpu.matmul %76, %77, %cst_62 {dimension_numbers = #tpu.dot_dimension_numbers<[1], [0], [0], [1], [0, 0, 1, 1], [], []>} : vector<256x1152xf32>, vector<1152x128xf32>, vector<256x128xf32> -> vector<256x128xf32>
    %c0_63 = arith.constant 0 : index
    %c0_64 = arith.constant 0 : index
    %c0_65 = arith.constant 0 : index
    %c0_66 = arith.constant 0 : index
    %79 = vector.load %arg1[%c0_63, %c0_64, %c0_65, %c0_66] : memref<1x16x16x128xf32, #tpu.memory_space<vmem>>, vector<1x16x16x128xf32>
    %80 = vector.shape_cast %79 : vector<1x16x16x128xf32> to vector<16x16x128xf32>
    %81 = vector.shape_cast %80 : vector<16x16x128xf32> to vector<256x128xf32>
    %c0_67 = arith.constant 0 : index
    %c0_68 = arith.constant 0 : index
    %82 = vector.load %arg7[%c0_67, %c0_68] : memref<1x128xf32, #tpu.memory_space<vmem>>, vector<1x128xf32>
    %83 = vector.broadcast %82 : vector<1x128xf32> to vector<256x128xf32>
    %84 = arith.mulf %78, %83 : vector<256x128xf32>
    %c0_69 = arith.constant 0 : index
    %c0_70 = arith.constant 0 : index
    %85 = vector.load %arg8[%c0_69, %c0_70] : memref<1x128xf32, #tpu.memory_space<vmem>>, vector<1x128xf32>
    %86 = vector.broadcast %85 : vector<1x128xf32> to vector<256x128xf32>
    %87 = arith.addf %84, %86 : vector<256x128xf32>
    %88 = arith.addf %87, %81 : vector<256x128xf32>
    %cst_71 = arith.constant 0.000000e+00 : f32
    %89 = vector.broadcast %cst_71 : f32 to vector<256x128xf32>
    %90 = arith.maximumf %88, %89 : vector<256x128xf32>
    %91 = vector.shape_cast %90 : vector<256x128xf32> to vector<16x16x128xf32>
    %c0_72 = arith.constant 0 : index
    %c0_73 = arith.constant 0 : index
    %c0_74 = arith.constant 0 : index
    %c0_75 = arith.constant 0 : index
    %92 = vector.load %arg9[%c0_72, %c0_73, %c0_74, %c0_75] : memref<1x16x16x128xf32, #tpu.memory_space<vmem>>, vector<1x16x16x128xf32>
    %93 = vector.shape_cast %92 : vector<1x16x16x128xf32> to vector<16x16x128xf32>
    %94 = vector.shape_cast %91 : vector<16x16x128xf32> to vector<1x16x16x128xf32>
    tpu.vector_store %arg9[%c0_72, %c0_73, %c0_74, %c0_75], %94 {strides = array<i32>} : memref<1x16x16x128xf32, #tpu.memory_space<vmem>>, vector<1x16x16x128xf32>,
    return
  }
  func.func @transform_0(%arg0: i32) -> (i32, i32, i32, i32) {
    %c0_i32 = arith.constant 0 : i32
    %c0_i32_0 = arith.constant 0 : i32
    %c0_i32_1 = arith.constant 0 : i32
    %c0_i32_2 = arith.constant 0 : i32
    return %arg0, %c0_i32, %c0_i32_0, %c0_i32_1 : i32, i32, i32, i32
  }
  func.func @transform_1(%arg0: i32) -> (i32, i32, i32, i32) {
    %c0_i32 = arith.constant 0 : i32
    %c0_i32_0 = arith.constant 0 : i32
    %c0_i32_1 = arith.constant 0 : i32
    %c0_i32_2 = arith.constant 0 : i32
    return %arg0, %c0_i32, %c0_i32_0, %c0_i32_1 : i32, i32, i32, i32
  }
  func.func @transform_2(%arg0: i32) -> (i32, i32) {
    %c0_i32 = arith.constant 0 : i32
    %c0_i32_0 = arith.constant 0 : i32
    %c0_i32_1 = arith.constant 0 : i32
    return %c0_i32, %c0_i32_0 : i32, i32
  }
  func.func @transform_3(%arg0: i32) -> (i32, i32) {
    %c0_i32 = arith.constant 0 : i32
    %c0_i32_0 = arith.constant 0 : i32
    %c0_i32_1 = arith.constant 0 : i32
    return %c0_i32, %c0_i32_0 : i32, i32
  }
  func.func @transform_4(%arg0: i32) -> (i32, i32) {
    %c0_i32 = arith.constant 0 : i32
    %c0_i32_0 = arith.constant 0 : i32
    %c0_i32_1 = arith.constant 0 : i32
    return %c0_i32, %c0_i32_0 : i32, i32
  }
  func.func @transform_5(%arg0: i32) -> (i32, i32) {
    %c0_i32 = arith.constant 0 : i32
    %c0_i32_0 = arith.constant 0 : i32
    %c0_i32_1 = arith.constant 0 : i32
    return %c0_i32, %c0_i32_0 : i32, i32
  }
  func.func @transform_6(%arg0: i32) -> (i32, i32) {
    %c0_i32 = arith.constant 0 : i32
    %c0_i32_0 = arith.constant 0 : i32
    %c0_i32_1 = arith.constant 0 : i32
    return %c0_i32, %c0_i32_0 : i32, i32
  }
  func.func @transform_7(%arg0: i32) -> (i32, i32) {
    %c0_i32 = arith.constant 0 : i32
    %c0_i32_0 = arith.constant 0 : i32
    %c0_i32_1 = arith.constant 0 : i32
    return %c0_i32, %c0_i32_0 : i32, i32
  }
  func.func @transform_8(%arg0: i32) -> (i32, i32, i32, i32) {
    %c0_i32 = arith.constant 0 : i32
    %c0_i32_0 = arith.constant 0 : i32
    %c0_i32_1 = arith.constant 0 : i32
    %c0_i32_2 = arith.constant 0 : i32
    return %arg0, %c0_i32, %c0_i32_0, %c0_i32_1 : i32, i32, i32, i32
  }
}

</mosaic_0001>

<llo_original>
// kernel: resblock_pallas.1
$region0: #{resblock_pallas.1}
  #allocation0 [shape = 'u32[]', space=smem, size = 0x4, offset = 0x4, fixed_abs, tag = 'smem constant byte address 0x4 - core index']
  #allocation1 [shape = 'u32[72,128]{1,0:T(1,128)}', space=vmem, size = 0x9000, scoped, tag = 'internal scratch']
  #allocation2 [shape = 'f32[256,1152]{1,0:T(8,128)}', space=vmem, size = 0x120000, scoped, tag = 'scratch operand']
  #allocation3 [shape = 'f32[18,18,128]{2,1,0:T(8,128)}', space=vmem, size = 0x36000, scoped, tag = 'scratch operand']
  %s0 = inlined_call_operand.vmem [shape: f32[2,16,16,128], index: 0, kind: input, shape index: {}]
  %s1 = inlined_call_operand.vmem [shape: f32[2,18,18,128], index: 1, kind: input, shape index: {}]
  %s2 = inlined_call_operand.vmem [shape: f32[1152,128], index: 2, kind: input, shape index: {}]
  %s3 = inlined_call_operand.vmem [shape: f32[1,128], index: 3, kind: input, shape index: {}]
  %s4 = inlined_call_operand.vmem [shape: f32[1,128], index: 4, kind: input, shape index: {}]
  %s5 = inlined_call_operand.vmem [shape: f32[1152,128], index: 5, kind: input, shape index: {}]
  %s6 = inlined_call_operand.vmem [shape: f32[1,128], index: 6, kind: input, shape index: {}]
  %s7 = inlined_call_operand.vmem [shape: f32[1,128], index: 7, kind: input, shape index: {}]
  %s8 = inlined_call_operand.vmem [shape: f32[2,16,16,128], index: 8, kind: output, shape index: {}]
  %s9 = sld [smem:[#allocation0]]
  $region65: #{resblock_pallas.1} parent=0
    _
  %s11 = ssub.s32 1, %s9
  %s12 = scalar_select 0, %s11, %s9
  loop: start=0, step=1, limit=4
  $region2: #{resblock_pallas.1} parent=0 // loop_pre_header
    _
  $region3: #{resblock_pallas.1} parent=0 // loop_header
    %s14 = sphi 0, %s18
    %p15 = scmp.ge.s32.totalorder %s14, 4
    %s24 = sphi 0, %s26
    %s27 = sphi 0, %s24
    %s28 = sphi 0, %s27
    %s44 = sphi 0, %s28
    %s50 = sphi 0, %s52
    %s53 = sphi 0, %s50
    %s54 = sphi 0, %s53
    %s70 = sphi 0, %s54
    %s74 = sphi 0, %s74
    %s76 = sphi 0, %s74
    %s77 = sphi 0, %s76
    %s91 = sphi 0, %s77
    %s95 = sphi 0, %s95
    %s97 = sphi 0, %s95
    %s98 = sphi 0, %s97
    %s112 = sphi 0, %s98
    %s116 = sphi 0, %s116
    %s118 = sphi 0, %s116
    %s119 = sphi 0, %s118
    %s133 = sphi 0, %s119
    %s137 = sphi 0, %s137
    %s139 = sphi 0, %s137
    %s140 = sphi 0, %s139
    %s154 = sphi 0, %s140
    %s158 = sphi 0, %s158
    %s160 = sphi 0, %s158
    %s161 = sphi 0, %s160
    %s175 = sphi 0, %s161
    %s179 = sphi 0, %s179
    %s181 = sphi 0, %s179
    %s182 = sphi 0, %s181
    %s196 = sphi 0, %s182
    %s202 = sphi 0, %s204
    %s205 = sphi 0, %s202
    %s206 = sphi 0, %s205
    %s222 = sphi 0, %s206
  $region4: #{resblock_pallas.1} parent=0 // loop_header_branch
    %17 = sbr.rel (%p15) target = $region8
  $region5: #{resblock_pallas.1} parent=0 // loop_body
    %s19 = ssub.s32 %s14, 1
    %s20 = ssub.s32 %s14, 2
    %s21 = sadd.s32 %s14, 1
    %s22 = ssub.s32 %s14, %s21
    %p23 = scmp.eq.s32.totalorder %s22, 0
    %s25 = sadd.s32 %s24, 1
    %s26 = scalar_select %p23, %s24, %s25
    %p29 = pneg %p23
    %p30 = scmp.eq.s32.totalorder %s14, 1
    %p31 = por %p29, %p30
    %p32 = scmp.ne.s32.totalorder %s24, %s27
    %p33 = scmp.eq.s32.totalorder %s14, 0
    %p34 = por %p32, %p33
    %p35 = scmp.ne.s32.totalorder %s24, %s27
    %p36 = scmp.eq.s32.totalorder %s19, 1
    %p37 = por %p35, %p36
    %p38 = scmp.ne.s32.totalorder %s27, %s28
    %p39 = scmp.eq.s32.totalorder %s19, 0
    %p40 = por %p38, %p39
    %p41 = scmp.ne.s32.totalorder %s27, %s28
    %p42 = scmp.eq.s32.totalorder %s20, 1
    %p43 = por %p41, %p42
    %p45 = scmp.ne.s32.totalorder %s28, %s44
    %p46 = scmp.eq.s32.totalorder %s20, 0
    %p47 = por %p45, %p46
    %s48 = ssub.s32 %s14, %s21
    %p49 = scmp.eq.s32.totalorder %s48, 0
    %s51 = sadd.s32 %s50, 1
    %s52 = scalar_select %p49, %s50, %s51
    %p55 = pneg %p49
    %p56 = scmp.eq.s32.totalorder %s14, 1
    %p57 = por %p55, %p56
    %p58 = scmp.ne.s32.totalorder %s50, %s53
    %p59 = scmp.eq.s32.totalorder %s14, 0
    %p60 = por %p58, %p59
    %p61 = scmp.ne.s32.totalorder %s50, %s53
    %p62 = scmp.eq.s32.totalorder %s19, 1
    %p63 = por %p61, %p62
    %p64 = scmp.ne.s32.totalorder %s53, %s54
    %p65 = scmp.eq.s32.totalorder %s19, 0
    %p66 = por %p64, %p65
    %p67 = scmp.ne.s32.totalorder %s53, %s54
    %p68 = scmp.eq.s32.totalorder %s20, 1
    %p69 = por %p67, %p68
    %p71 = scmp.ne.s32.totalorder %s54, %s70
    %p72 = scmp.eq.s32.totalorder %s20, 0
    %p73 = por %p71, %p72
    %s75 = sadd.s32 %s74, 1
    %p78 = scmp.eq.s32.totalorder %s14, 1
    %p79 = scmp.ne.s32.totalorder %s74, %s76
    %p80 = scmp.eq.s32.totalorder %s14, 0
    %p81 = por %p79, %p80
    %p82 = scmp.ne.s32.totalorder %s74, %s76
    %p83 = scmp.eq.s32.totalorder %s19, 1
    %p84 = por %p82, %p83
    %p85 = scmp.ne.s32.totalorder %s76, %s77
    %p86 = scmp.eq.s32.totalorder %s19, 0
    %p87 = por %p85, %p86
    %p88 = scmp.ne.s32.totalorder %s76, %s77
    %p89 = scmp.eq.s32.totalorder %s20, 1
    %p90 = por %p88, %p89
    %p92 = scmp.ne.s32.totalorder %s77, %s91
    %p93 = scmp.eq.s32.totalorder %s20, 0
    %p94 = por %p92, %p93
    %s96 = sadd.s32 %s95, 1
    %p99 = scmp.eq.s32.totalorder %s14, 1
    %p100 = scmp.ne.s32.totalorder %s95, %s97
    %p101 = scmp.eq.s32.totalorder %s14, 0
    %p102 = por %p100, %p101
    %p103 = scmp.ne.s32.totalorder %s95, %s97
    %p104 = scmp.eq.s32.totalorder %s19, 1
    %p105 = por %p103, %p104
    %p106 = scmp.ne.s32.totalorder %s97, %s98
    %p107 = scmp.eq.s32.totalorder %s19, 0
    %p108 = por %p106, %p107
    %p109 = scmp.ne.s32.totalorder %s97, %s98
    %p110 = scmp.eq.s32.totalorder %s20, 1
    %p111 = por %p109, %p110
    %p113 = scmp.ne.s32.totalorder %s98, %s112
    %p114 = scmp.eq.s32.totalorder %s20, 0
    %p115 = por %p113, %p114
    %s117 = sadd.s32 %s116, 1
    %p120 = scmp.eq.s32.totalorder %s14, 1
    %p121 = scmp.ne.s32.totalorder %s116, %s118
    %p122 = scmp.eq.s32.totalorder %s14, 0
    %p123 = por %p121, %p122
    %p124 = scmp.ne.s32.totalorder %s116, %s118
    %p125 = scmp.eq.s32.totalorder %s19, 1
    %p126 = por %p124, %p125
    %p127 = scmp.ne.s32.totalorder %s118, %s119
    %p128 = scmp.eq.s32.totalorder %s19, 0
    %p129 = por %p127, %p128
    %p130 = scmp.ne.s32.totalorder %s118, %s119
    %p131 = scmp.eq.s32.totalorder %s20, 1
    %p132 = por %p130, %p131
    %p134 = scmp.ne.s32.totalorder %s119, %s133
    %p135 = scmp.eq.s32.totalorder %s20, 0
    %p136 = por %p134, %p135
    %s138 = sadd.s32 %s137, 1
    %p141 = scmp.eq.s32.totalorder %s14, 1
    %p142 = scmp.ne.s32.totalorder %s137, %s139
    %p143 = scmp.eq.s32.totalorder %s14, 0
    %p144 = por %p142, %p143
    %p145 = scmp.ne.s32.totalorder %s137, %s139
    %p146 = scmp.eq.s32.totalorder %s19, 1
    %p147 = por %p145, %p146
    %p148 = scmp.ne.s32.totalorder %s139, %s140
    %p149 = scmp.eq.s32.totalorder %s19, 0
    %p150 = por %p148, %p149
    %p151 = scmp.ne.s32.totalorder %s139, %s140
    %p152 = scmp.eq.s32.totalorder %s20, 1
    %p153 = por %p151, %p152
    %p155 = scmp.ne.s32.totalorder %s140, %s154
    %p156 = scmp.eq.s32.totalorder %s20, 0
    %p157 = por %p155, %p156
    %s159 = sadd.s32 %s158, 1
    %p162 = scmp.eq.s32.totalorder %s14, 1
    %p163 = scmp.ne.s32.totalorder %s158, %s160
    %p164 = scmp.eq.s32.totalorder %s14, 0
    %p165 = por %p163, %p164
    %p166 = scmp.ne.s32.totalorder %s158, %s160
    %p167 = scmp.eq.s32.totalorder %s19, 1
    %p168 = por %p166, %p167
    %p169 = scmp.ne.s32.totalorder %s160, %s161
    %p170 = scmp.eq.s32.totalorder %s19, 0
    %p171 = por %p169, %p170
    %p172 = scmp.ne.s32.totalorder %s160, %s161
    %p173 = scmp.eq.s32.totalorder %s20, 1
    %p174 = por %p172, %p173
    %p176 = scmp.ne.s32.totalorder %s161, %s175
    %p177 = scmp.eq.s32.totalorder %s20, 0
    %p178 = por %p176, %p177
    %s180 = sadd.s32 %s179, 1
    %p183 = scmp.eq.s32.totalorder %s14, 1
    %p184 = scmp.ne.s32.totalorder %s179, %s181
    %p185 = scmp.eq.s32.totalorder %s14, 0
    %p186 = por %p184, %p185
    %p187 = scmp.ne.s32.totalorder %s179, %s181
    %p188 = scmp.eq.s32.totalorder %s19, 1
    %p189 = por %p187, %p188
    %p190 = scmp.ne.s32.totalorder %s181, %s182
    %p191 = scmp.eq.s32.totalorder %s19, 0
    %p192 = por %p190, %p191
    %p193 = scmp.ne.s32.totalorder %s181, %s182
    %p194 = scmp.eq.s32.totalorder %s20, 1
    %p195 = por %p193, %p194
    %p197 = scmp.ne.s32.totalorder %s182, %s196
    %p198 = scmp.eq.s32.totalorder %s20, 0
    %p199 = por %p197, %p198
    %s200 = ssub.s32 %s14, %s21
    %p201 = scmp.eq.s32.totalorder %s200, 0
    %s203 = sadd.s32 %s202, 1
    %s204 = scalar_select %p201, %s202, %s203
    %p207 = pneg %p201
    %p208 = scmp.eq.s32.totalorder %s14, 1
    %p209 = por %p207, %p208
    %p210 = scmp.ne.s32.totalorder %s202, %s205
    %p211 = scmp.eq.s32.totalorder %s14, 0
    %p212 = por %p210, %p211
    %p213 = scmp.ne.s32.totalorder %s202, %s205
    %p214 = scmp.eq.s32.totalorder %s19, 1
    %p215 = por %p213, %p214
    %p216 = scmp.ne.s32.totalorder %s205, %s206
    %p217 = scmp.eq.s32.totalorder %s19, 0
    %p218 = por %p216, %p217
    %p219 = scmp.ne.s32.totalorder %s205, %s206
    %p220 = scmp.eq.s32.totalorder %s20, 1
    %p221 = por %p219, %p220
    %p223 = scmp.ne.s32.totalorder %s206, %s222
    %p224 = scmp.eq.s32.totalorder %s20, 0
    %p225 = por %p223, %p224
    %p226 = scmp.le.s32.totalorder 1, %s14
    %p227 = scmp.lt.s32.totalorder %s14, 3
    %p228 = pnand %p226, %p227
    %p229 = pneg %p228
    // Predicated region
    $region9: #{resblock_pallas.1} parent=5 // pred_check
      _
    $region10: #{resblock_pallas.1} parent=5 // pred_check_branch
      %231 = sbr.rel (%p228) target = $region12
    $region11: #{resblock_pallas.1} parent=5 // pred_region
      %s232 = ssub.s32 %s14, 1
      // Predicated region
      $region13: #{resblock_pallas.1} parent=11 // pred_check
        %p233 = pneg %p87
      $region14: #{resblock_pallas.1} parent=11 // pred_check_branch
        %235 = sbr.rel (%p233) target = $region16
      $region15: #{resblock_pallas.1} parent=11 // pred_region
        _
      $region16: #{resblock_pallas.1} parent=11 // pred_fallthru
        _
      // Predicated region
      $region17: #{resblock_pallas.1} parent=11 // pred_check
        %p236 = pneg %p108
      $region18: #{resblock_pallas.1} parent=11 // pred_check_branch
        %238 = sbr.rel (%p236) target = $region20
      $region19: #{resblock_pallas.1} parent=11 // pred_region
        _
      $region20: #{resblock_pallas.1} parent=11 // pred_fallthru
        _
      // Predicated region
      $region21: #{resblock_pallas.1} parent=11 // pred_check
        %p239 = pneg %p129
      $region22: #{resblock_pallas.1} parent=11 // pred_check_branch
        %241 = sbr.rel (%p239) target = $region24
      $region23: #{resblock_pallas.1} parent=11 // pred_region
        _
      $region24: #{resblock_pallas.1} parent=11 // pred_fallthru
        _
      // Predicated region
      $region25: #{resblock_pallas.1} parent=11 // pred_check
        %p242 = pneg %p150
      $region26: #{resblock_pallas.1} parent=11 // pred_check_branch
        %244 = sbr.rel (%p242) target = $region28
      $region27: #{resblock_pallas.1} parent=11 // pred_region
        _
      $region28: #{resblock_pallas.1} parent=11 // pred_fallthru
        _
      // Predicated region
      $region29: #{resblock_pallas.1} parent=11 // pred_check
        %p245 = pneg %p171
      $region30: #{resblock_pallas.1} parent=11 // pred_check_branch
        %247 = sbr.rel (%p245) target = $region32
      $region31: #{resblock_pallas.1} parent=11 // pred_region
        _
      $region32: #{resblock_pallas.1} parent=11 // pred_fallthru
        _
      // Predicated region
      $region33: #{resblock_pallas.1} parent=11 // pred_check
        %p248 = pneg %p192
      $region34: #{resblock_pallas.1} parent=11 // pred_check_branch
        %250 = sbr.rel (%p248) target = $region36
      $region35: #{resblock_pallas.1} parent=11 // pred_region
        _
      $region36: #{resblock_pallas.1} parent=11 // pred_fallthru
        _
    $region12: #{resblock_pallas.1} parent=5 // pred_fallthru
      _
    %p251 = scmp.lt.s32.totalorder %s14, 2
    // Predicated region
    $region37: #{resblock_pallas.1} parent=5 // pred_check
      %p252 = pneg %p251
    $region38: #{resblock_pallas.1} parent=5 // pred_check_branch
      %254 = sbr.rel (%p252) target = $region40
    $region39: #{resblock_pallas.1} parent=5 // pred_region
      // Predicated region
      $region41: #{resblock_pallas.1} parent=39 // pred_check
        %p255 = pneg %p34
      $region42: #{resblock_pallas.1} parent=39 // pred_check_branch
        %257 = sbr.rel (%p255) target = $region44
      $region43: #{resblock_pallas.1} parent=39 // pred_region
        %p258 = scmp.lt.s32.totalorder %s14, 1
        %s259 = scalar_select %p258, %s14, 1
        %s260 = smul.addr %s259, 32
        %s261 = smul.addr %s260, 8
        %s262 = scalar_lea.vmem %s0, %s261
      $region44: #{resblock_pallas.1} parent=39 // pred_fallthru
        _
      // Predicated region
      $region45: #{resblock_pallas.1} parent=39 // pred_check
        %p263 = pneg %p60
      $region46: #{resblock_pallas.1} parent=39 // pred_check_branch
        %265 = sbr.rel (%p263) target = $region48
      $region47: #{resblock_pallas.1} parent=39 // pred_region
        %p266 = scmp.lt.s32.totalorder %s14, 1
        %s267 = scalar_select %p266, %s14, 1
        %s268 = smul.addr %s267, 54
        %s269 = smul.addr %s268, 8
        %s270 = scalar_lea.vmem %s1, %s269
      $region48: #{resblock_pallas.1} parent=39 // pred_fallthru
        _
    $region40: #{resblock_pallas.1} parent=5 // pred_fallthru
      _
    %p271 = scmp.le.s32.totalorder 1, %s14
    %p272 = scmp.lt.s32.totalorder %s14, 3
    %p273 = pnand %p271, %p272
    %p274 = pneg %p273
    // Predicated region
    $region49: #{resblock_pallas.1} parent=5 // pred_check
      _
    $region50: #{resblock_pallas.1} parent=5 // pred_check_branch
      %276 = sbr.rel (%p273) target = $region52
    $region51: #{resblock_pallas.1} parent=5 // pred_region
      %s277 = ssub.s32 %s14, 1
      %p278 = scmp.lt.s32.totalorder %s19, 1
      %s279 = scalar_select %p278, %s19, 1
      %s280 = smul.addr %s279, 32
      %s281 = smul.addr %s280, 8
      %s282 = scalar_lea.vmem %s0, %s281
      %p283 = pneg %p40
      %p284 = pneg %p37
      %p285 = scmp.lt.s32.totalorder %s19, 1
      %s286 = scalar_select %p285, %s19, 1
      %s287 = smul.addr %s286, 54
      %s288 = smul.addr %s287, 8
      %s289 = scalar_lea.vmem %s1, %s288
      %p290 = pneg %p66
      %p291 = pneg %p63
      %p292 = pneg %p87
      %p293 = pneg %p84
      %p294 = pneg %p108
      %p295 = pneg %p105
      %p296 = pneg %p129
      %p297 = pneg %p126
      %p298 = pneg %p150
      %p299 = pneg %p147
      %p300 = pneg %p171
      %p301 = pneg %p168
      %p302 = pneg %p192
      %p303 = pneg %p189
      %p304 = pneg %p218
      %p305 = pneg %p215
      %p306 = scmp.lt.s32.totalorder %s19, 1
      %s307 = scalar_select %p306, %s19, 1
      %s308 = smul.addr %s307, 32
      %s309 = smul.addr %s308, 8
      %s310 = scalar_lea.vmem %s8, %s309
      %p311 = scmp.lt.s32.totalorder %s19, 1
      %s312 = scalar_select %p311, %s19, 1
      %s313 = smul.addr %s312, 32
      %s314 = smul.addr %s313, 8
      %s315 = scalar_lea.vmem %s0, %s314
      %p316 = scmp.lt.s32.totalorder %s19, 1
      %s317 = scalar_select %p316, %s19, 1
      %s318 = smul.addr %s317, 54
      %s319 = smul.addr %s318, 8
      %s320 = scalar_lea.vmem %s1, %s319
      %p321 = scmp.lt.s32.totalorder %s19, 1
      %s322 = scalar_select %p321, %s19, 1
      %s323 = smul.addr %s322, 32
      %s324 = smul.addr %s323, 8
      %s325 = scalar_lea.vmem %s8, %s324
      %v326 = vld [vmem:[%s320] sm:$0xff]
      %v327 = vld [vmem:[%s320 + $0x8] sm:$0xff]
      %v328 = vld [vmem:[%s320 + $0x10] sm:$0x3]
      %v329 = vld [vmem:[%s320 + $0x18] sm:$0xff]
      %v330 = vld [vmem:[%s320 + $0x20] sm:$0xff]
      %v331 = vld [vmem:[%s320 + $0x28] sm:$0x3]
      %v332 = vld [vmem:[%s320 + $0x30] sm:$0xff]
      %v333 = vld [vmem:[%s320 + $0x38] sm:$0xff]
      %v334 = vld [vmem:[%s320 + $0x40] sm:$0x3]
      %v335 = vld [vmem:[%s320 + $0x48] sm:$0xff]
      %v336 = vld [vmem:[%s320 + $0x50] sm:$0xff]
      %v337 = vld [vmem:[%s320 + $0x58] sm:$0x3]
      %v338 = vld [vmem:[%s320 + $0x60] sm:$0xff]
      %v339 = vld [vmem:[%s320 + $0x68] sm:$0xff]
      %v340 = vld [vmem:[%s320 + $0x70] sm:$0x3]
      %v341 = vld [vmem:[%s320 + $0x78] sm:$0xff]
      %v342 = vld [vmem:[%s320 + $0x80] sm:$0xff]
      %v343 = vld [vmem:[%s320 + $0x88] sm:$0x3]
      %v344 = vld [vmem:[%s320 + $0x90] sm:$0xff]
      %v345 = vld [vmem:[%s320 + $0x98] sm:$0xff]
      %v346 = vld [vmem:[%s320 + $0xa0] sm:$0x3]
      %v347 = vld [vmem:[%s320 + $0xa8] sm:$0xff]
      %v348 = vld [vmem:[%s320 + $0xb0] sm:$0xff]
      %v349 = vld [vmem:[%s320 + $0xb8] sm:$0x3]
      %v350 = vld [vmem:[%s320 + $0xc0] sm:$0xff]
      %v351 = vld [vmem:[%s320 + $0xc8] sm:$0xff]
      %v352 = vld [vmem:[%s320 + $0xd0] sm:$0x3]
      %v353 = vld [vmem:[%s320 + $0xd8] sm:$0xff]
      %v354 = vld [vmem:[%s320 + $0xe0] sm:$0xff]
      %v355 = vld [vmem:[%s320 + $0xe8] sm:$0x3]
      %v356 = vld [vmem:[%s320 + $0xf0] sm:$0xff]
      %v357 = vld [vmem:[%s320 + $0xf8] sm:$0xff]
      %v358 = vld [vmem:[%s320 + $0x100] sm:$0x3]
      %v359 = vld [vmem:[%s320 + $0x108] sm:$0xff]
      %v360 = vld [vmem:[%s320 + $0x110] sm:$0xff]
      %v361 = vld [vmem:[%s320 + $0x118] sm:$0x3]
      %v362 = vld [vmem:[%s320 + $0x120] sm:$0xff]
      %v363 = vld [vmem:[%s320 + $0x128] sm:$0xff]
      %v364 = vld [vmem:[%s320 + $0x130] sm:$0x3]
      %v365 = vld [vmem:[%s320 + $0x138] sm:$0xff]
      %v366 = vld [vmem:[%s320 + $0x140] sm:$0xff]
      %v367 = vld [vmem:[%s320 + $0x148] sm:$0x3]
      %v368 = vld [vmem:[%s320 + $0x150] sm:$0xff]
      %v369 = vld [vmem:[%s320 + $0x158] sm:$0xff]
      %v370 = vld [vmem:[%s320 + $0x160] sm:$0x3]
      %v371 = vld [vmem:[%s320 + $0x168] sm:$0xff]
      %v372 = vld [vmem:[%s320 + $0x170] sm:$0xff]
      %v373 = vld [vmem:[%s320 + $0x178] sm:$0x3]
      %v374 = vld [vmem:[%s320 + $0x180] sm:$0xff]
      %v375 = vld [vmem:[%s320 + $0x188] sm:$0xff]
      %v376 = vld [vmem:[%s320 + $0x190] sm:$0x3]
      %v377 = vld [vmem:[%s320 + $0x198] sm:$0xff]
      %v378 = vld [vmem:[%s320 + $0x1a0] sm:$0xff]
      %v379 = vld [vmem:[%s320 + $0x1a8] sm:$0x3]
      %380 = vst [vmem:[#allocation2] sm:$0xff] %v326
      %381 = vst [vmem:[#allocation2 + $0x48] sm:$0xff] %v327
      %382 = vst [vmem:[#allocation2 + $0x90] sm:$0xff] %v329
      %383 = vst [vmem:[#allocation2 + $0xd8] sm:$0xff] %v330
      %384 = vst [vmem:[#allocation2 + $0x120] sm:$0xff] %v332
      %385 = vst [vmem:[#allocation2 + $0x168] sm:$0xff] %v333
      %386 = vst [vmem:[#allocation2 + $0x1b0] sm:$0xff] %v335
      %387 = vst [vmem:[#allocation2 + $0x1f8] sm:$0xff] %v336
      %388 = vst [vmem:[#allocation2 + $0x240] sm:$0xff] %v338
      %389 = vst [vmem:[#allocation2 + $0x288] sm:$0xff] %v339
      %390 = vst [vmem:[#allocation2 + $0x2d0] sm:$0xff] %v341
      %391 = vst [vmem:[#allocation2 + $0x318] sm:$0xff] %v342
      %392 = vst [vmem:[#allocation2 + $0x360] sm:$0xff] %v344
      %393 = vst [vmem:[#allocation2 + $0x3a8] sm:$0xff] %v345
      %394 = vst [vmem:[#allocation2 + $0x3f0] sm:$0xff] %v347
      %395 = vst [vmem:[#allocation2 + $0x438] sm:$0xff] %v348
      %396 = vst [vmem:[#allocation2 + $0x480] sm:$0xff] %v350
      %397 = vst [vmem:[#allocation2 + $0x4c8] sm:$0xff] %v351
      %398 = vst [vmem:[#allocation2 + $0x510] sm:$0xff] %v353
      %399 = vst [vmem:[#allocation2 + $0x558] sm:$0xff] %v354
      %400 = vst [vmem:[#allocation2 + $0x5a0] sm:$0xff] %v356
      %401 = vst [vmem:[#allocation2 + $0x5e8] sm:$0xff] %v357
      %402 = vst [vmem:[#allocation2 + $0x630] sm:$0xff] %v359
      %403 = vst [vmem:[#allocation2 + $0x678] sm:$0xff] %v360
      %404 = vst [vmem:[#allocation2 + $0x6c0] sm:$0xff] %v362
      %405 = vst [vmem:[#allocation2 + $0x708] sm:$0xff] %v363
      %406 = vst [vmem:[#allocation2 + $0x750] sm:$0xff] %v365
      %407 = vst [vmem:[#allocation2 + $0x798] sm:$0xff] %v366
      %408 = vst [vmem:[#allocation2 + $0x7e0] sm:$0xff] %v368
      %409 = vst [vmem:[#allocation2 + $0x828] sm:$0xff] %v369
      %410 = vst [vmem:[#allocation2 + $0x870] sm:$0xff] %v371
      %411 = vst [vmem:[#allocation2 + $0x8b8] sm:$0xff] %v372
      %vm460 = vcmask 1046528
      %v461 = vrot.slane %v326, 1
      %v462 = vrot.slane %v327, 1
      %v463 = vsel %vm460, %v461, %v462
      %v464 = vrot.slane %v328, 1
      %v465 = vsel %vm460, %v462, %v464
      %v466 = vrot.slane %v329, 1
      %v467 = vrot.slane %v330, 1
      %v468 = vsel %vm460, %v466, %v467
      %v469 = vrot.slane %v331, 1
      %v470 = vsel %vm460, %v467, %v469
      %v471 = vrot.slane %v332, 1
      %v472 = vrot.slane %v333, 1
      %v473 = vsel %vm460, %v471, %v472
      %v474 = vrot.slane %v334, 1
      %v475 = vsel %vm460, %v472, %v474
      %v476 = vrot.slane %v335, 1
      %v477 = vrot.slane %v336, 1
      %v478 = vsel %vm460, %v476, %v477
      %v479 = vrot.slane %v337, 1
      %v480 = vsel %vm460, %v477, %v479
      %v481 = vrot.slane %v338, 1
      %v482 = vrot.slane %v339, 1
      %v483 = vsel %vm460, %v481, %v482
      %v484 = vrot.slane %v340, 1
      %v485 = vsel %vm460, %v482, %v484
      %v486 = vrot.slane %v341, 1
      %v487 = vrot.slane %v342, 1
      %v488 = vsel %vm460, %v486, %v487
      %v489 = vrot.slane %v343, 1
      %v490 = vsel %vm460, %v487, %v489
      %v491 = vrot.slane %v344, 1
      %v492 = vrot.slane %v345, 1
      %v493 = vsel %vm460, %v491, %v492
      %v494 = vrot.slane %v346, 1
      %v495 = vsel %vm460, %v492, %v494
      %v496 = vrot.slane %v347, 1
      %v497 = vrot.slane %v348, 1
      %v498 = vsel %vm460, %v496, %v497
      %v499 = vrot.slane %v349, 1
      %v500 = vsel %vm460, %v497, %v499
      %v501 = vrot.slane %v350, 1
      %v502 = vrot.slane %v351, 1
      %v503 = vsel %vm460, %v501, %v502
      %v504 = vrot.slane %v352, 1
      %v505 = vsel %vm460, %v502, %v504
      %v506 = vrot.slane %v353, 1
      %v507 = vrot.slane %v354, 1
      %v508 = vsel %vm460, %v506, %v507
      %v509 = vrot.slane %v355, 1
      %v510 = vsel %vm460, %v507, %v509
      %v511 = vrot.slane %v356, 1
      %v512 = vrot.slane %v357, 1
      %v513 = vsel %vm460, %v511, %v512
      %v514 = vrot.slane %v358, 1
      %v515 = vsel %vm460, %v512, %v514
      %v516 = vrot.slane %v359, 1
      %v517 = vrot.slane %v360, 1
      %v518 = vsel %vm460, %v516, %v517
      %v519 = vrot.slane %v361, 1
      %v520 = vsel %vm460, %v517, %v519
      %v521 = vrot.slane %v362, 1
      %v522 = vrot.slane %v363, 1
      %v523 = vsel %vm460, %v521, %v522
      %v524 = vrot.slane %v364, 1
      %v525 = vsel %vm460, %v522, %v524
      %v526 = vrot.slane %v365, 1
      %v527 = vrot.slane %v366, 1
      %v528 = vsel %vm460, %v526, %v527
      %v529 = vrot.slane %v367, 1
      %v530 = vsel %vm460, %v527, %v529
      %v531 = vrot.slane %v368, 1
      %v532 = vrot.slane %v369, 1
      %v533 = vsel %vm460, %v531, %v532
      %v534 = vrot.slane %v370, 1
      %v535 = vsel %vm460, %v532, %v534
      %v536 = vrot.slane %v371, 1
      %v537 = vrot.slane %v372, 1
      %v538 = vsel %vm460, %v536, %v537
      %v539 = vrot.slane %v373, 1
      %v540 = vsel %vm460, %v537, %v539
      %573 = vst [vmem:[#allocation2 + $0x8] sm:$0xff] %v463
      %574 = vst [vmem:[#allocation2 + $0x50] sm:$0xff] %v465
      %575 = vst [vmem:[#allocation2 + $0x98] sm:$0xff] %v468
      %576 = vst [vmem:[#allocation2 + $0xe0] sm:$0xff] %v470
      %577 = vst [vmem:[#allocation2 + $0x128] sm:$0xff] %v473
      %578 = vst [vmem:[#allocation2 + $0x170] sm:$0xff] %v475
      %579 = vst [vmem:[#allocation2 + $0x1b8] sm:$0xff] %v478
      %580 = vst [vmem:[#allocation2 + $0x200] sm:$0xff] %v480
      %581 = vst [vmem:[#allocation2 + $0x248] sm:$0xff] %v483
      %582 = vst [vmem:[#allocation2 + $0x290] sm:$0xff] %v485
      %583 = vst [vmem:[#allocation2 + $0x2d8] sm:$0xff] %v488
      %584 = vst [vmem:[#allocation2 + $0x320] sm:$0xff] %v490
      %585 = vst [vmem:[#allocation2 + $0x368] sm:$0xff] %v493
      %586 = vst [vmem:[#allocation2 + $0x3b0] sm:$0xff] %v495
      %587 = vst [vmem:[#allocation2 + $0x3f8] sm:$0xff] %v498
      %588 = vst [vmem:[#allocation2 + $0x440] sm:$0xff] %v500
      %589 = vst [vmem:[#allocation2 + $0x488] sm:$0xff] %v503
      %590 = vst [vmem:[#allocation2 + $0x4d0] sm:$0xff] %v505
      %591 = vst [vmem:[#allocation2 + $0x518] sm:$0xff] %v508
      %592 = vst [vmem:[#allocation2 + $0x560] sm:$0xff] %v510
      %593 = vst [vmem:[#allocation2 + $0x5a8] sm:$0xff] %v513
      %594 = vst [vmem:[#allocation2 + $0x5f0] sm:$0xff] %v515
      %595 = vst [vmem:[#allocation2 + $0x638] sm:$0xff] %v518
      %596 = vst [vmem:[#allocation2 + $0x680] sm:$0xff] %v520
      %597 = vst [vmem:[#allocation2 + $0x6c8] sm:$0xff] %v523
      %598 = vst [vmem:[#allocation2 + $0x710] sm:$0xff] %v525
      %599 = vst [vmem:[#allocation2 + $0x758] sm:$0xff] %v528
      %600 = vst [vmem:[#allocation2 + $0x7a0] sm:$0xff] %v530
      %601 = vst [vmem:[#allocation2 + $0x7e8] sm:$0xff] %v533
      %602 = vst [vmem:[#allocation2 + $0x830] sm:$0xff] %v535
      %603 = vst [vmem:[#allocation2 + $0x878] sm:$0xff] %v538
      %604 = vst [vmem:[#allocation2 + $0x8c0] sm:$0xff] %v540
      %vm605 = vcmask 1045504
      %v606 = vrot.slane %v326, 2
      %v607 = vrot.slane %v327, 2
      %v608 = vsel %vm605, %v606, %v607
      %v609 = vrot.slane %v328, 2
      %v610 = vsel %vm605, %v607, %v609
      %v611 = vrot.slane %v329, 2
      %v612 = vrot.slane %v330, 2
      %v613 = vsel %vm605, %v611, %v612
      %v614 = vrot.slane %v331, 2
      %v615 = vsel %vm605, %v612, %v614
      %v616 = vrot.slane %v332, 2
      %v617 = vrot.slane %v333, 2
      %v618 = vsel %vm605, %v616, %v617
      %v619 = vrot.slane %v334, 2
      %v620 = vsel %vm605, %v617, %v619
      %v621 = vrot.slane %v335, 2
      %v622 = vrot.slane %v336, 2
      %v623 = vsel %vm605, %v621, %v622
      %v624 = vrot.slane %v337, 2
      %v625 = vsel %vm605, %v622, %v624
      %v626 = vrot.slane %v338, 2
      %v627 = vrot.slane %v339, 2
      %v628 = vsel %vm605, %v626, %v627
      %v629 = vrot.slane %v340, 2
      %v630 = vsel %vm605, %v627, %v629
      %v631 = vrot.slane %v341, 2
      %v632 = vrot.slane %v342, 2
      %v633 = vsel %vm605, %v631, %v632
      %v634 = vrot.slane %v343, 2
      %v635 = vsel %vm605, %v632, %v634
      %v636 = vrot.slane %v344, 2
      %v637 = vrot.slane %v345, 2
      %v638 = vsel %vm605, %v636, %v637
      %v639 = vrot.slane %v346, 2
      %v640 = vsel %vm605, %v637, %v639
      %v641 = vrot.slane %v347, 2
      %v642 = vrot.slane %v348, 2
      %v643 = vsel %vm605, %v641, %v642
      %v644 = vrot.slane %v349, 2
      %v645 = vsel %vm605, %v642, %v644
      %v646 = vrot.slane %v350, 2
      %v647 = vrot.slane %v351, 2
      %v648 = vsel %vm605, %v646, %v647
      %v649 = vrot.slane %v352, 2
      %v650 = vsel %vm605, %v647, %v649
      %v651 = vrot.slane %v353, 2
      %v652 = vrot.slane %v354, 2
      %v653 = vsel %vm605, %v651, %v652
      %v654 = vrot.slane %v355, 2
      %v655 = vsel %vm605, %v652, %v654
      %v656 = vrot.slane %v356, 2
      %v657 = vrot.slane %v357, 2
      %v658 = vsel %vm605, %v656, %v657
      %v659 = vrot.slane %v358, 2
      %v660 = vsel %vm605, %v657, %v659
      %v661 = vrot.slane %v359, 2
      %v662 = vrot.slane %v360, 2
      %v663 = vsel %vm605, %v661, %v662
      %v664 = vrot.slane %v361, 2
      %v665 = vsel %vm605, %v662, %v664
      %v666 = vrot.slane %v362, 2
      %v667 = vrot.slane %v363, 2
      %v668 = vsel %vm605, %v666, %v667
      %v669 = vrot.slane %v364, 2
      %v670 = vsel %vm605, %v667, %v669
      %v671 = vrot.slane %v365, 2
      %v672 = vrot.slane %v366, 2
      %v673 = vsel %vm605, %v671, %v672
      %v674 = vrot.slane %v367, 2
      %v675 = vsel %vm605, %v672, %v674
      %v676 = vrot.slane %v368, 2
      %v677 = vrot.slane %v369, 2
      %v678 = vsel %vm605, %v676, %v677
      %v679 = vrot.slane %v370, 2
      %v680 = vsel %vm605, %v677, %v679
      %v681 = vrot.slane %v371, 2
      %v682 = vrot.slane %v372, 2
      %v683 = vsel %vm605, %v681, %v682
      %v684 = vrot.slane %v373, 2
      %v685 = vsel %vm605, %v682, %v684
      %718 = vst [vmem:[#allocation2 + $0x10] sm:$0xff] %v608
      %719 = vst [vmem:[#allocation2 + $0x58] sm:$0xff] %v610
      %720 = vst [vmem:[#allocation2 + $0xa0] sm:$0xff] %v613
      %721 = vst [vmem:[#allocation2 + $0xe8] sm:$0xff] %v615
      %722 = vst [vmem:[#allocation2 + $0x130] sm:$0xff] %v618
      %723 = vst [vmem:[#allocation2 + $0x178] sm:$0xff] %v620
      %724 = vst [vmem:[#allocation2 + $0x1c0] sm:$0xff] %v623
      %725 = vst [vmem:[#allocation2 + $0x208] sm:$0xff] %v625
      %726 = vst [vmem:[#allocation2 + $0x250] sm:$0xff] %v628
      %727 = vst [vmem:[#allocation2 + $0x298] sm:$0xff] %v630
      %728 = vst [vmem:[#allocation2 + $0x2e0] sm:$0xff] %v633
      %729 = vst [vmem:[#allocation2 + $0x328] sm:$0xff] %v635
      %730 = vst [vmem:[#allocation2 + $0x370] sm:$0xff] %v638
      %731 = vst [vmem:[#allocation2 + $0x3b8] sm:$0xff] %v640
      %732 = vst [vmem:[#allocation2 + $0x400] sm:$0xff] %v643
      %733 = vst [vmem:[#allocation2 + $0x448] sm:$0xff] %v645
      %734 = vst [vmem:[#allocation2 + $0x490] sm:$0xff] %v648
      %735 = vst [vmem:[#allocation2 + $0x4d8] sm:$0xff] %v650
      %736 = vst [vmem:[#allocation2 + $0x520] sm:$0xff] %v653
      %737 = vst [vmem:[#allocation2 + $0x568] sm:$0xff] %v655
      %738 = vst [vmem:[#allocation2 + $0x5b0] sm:$0xff] %v658
      %739 = vst [vmem:[#allocation2 + $0x5f8] sm:$0xff] %v660
      %740 = vst [vmem:[#allocation2 + $0x640] sm:$0xff] %v663
      %741 = vst [vmem:[#allocation2 + $0x688] sm:$0xff] %v665
      %742 = vst [vmem:[#allocation2 + $0x6d0] sm:$0xff] %v668
      %743 = vst [vmem:[#allocation2 + $0x718] sm:$0xff] %v670
      %744 = vst [vmem:[#allocation2 + $0x760] sm:$0xff] %v673
      %745 = vst [vmem:[#allocation2 + $0x7a8] sm:$0xff] %v675
      %746 = vst [vmem:[#allocation2 + $0x7f0] sm:$0xff] %v678
      %747 = vst [vmem:[#allocation2 + $0x838] sm:$0xff] %v680
      %748 = vst [vmem:[#allocation2 + $0x880] sm:$0xff] %v683
      %749 = vst [vmem:[#allocation2 + $0x8c8] sm:$0xff] %v685
      %750 = vst [vmem:[#allocation2 + $0x18] sm:$0xff] %v329
      %751 = vst [vmem:[#allocation2 + $0x60] sm:$0xff] %v330
      %752 = vst [vmem:[#allocation2 + $0xa8] sm:$0xff] %v332
      %753 = vst [vmem:[#allocation2 + $0xf0] sm:$0xff] %v333
      %754 = vst [vmem:[#allocation2 + $0x138] sm:$0xff] %v335
      %755 = vst [vmem:[#allocation2 + $0x180] sm:$0xff] %v336
      %756 = vst [vmem:[#allocation2 + $0x1c8] sm:$0xff] %v338
      %757 = vst [vmem:[#allocation2 + $0x210] sm:$0xff] %v339
      %758 = vst [vmem:[#allocation2 + $0x258] sm:$0xff] %v341
      %759 = vst [vmem:[#allocation2 + $0x2a0] sm:$0xff] %v342
      %760 = vst [vmem:[#allocation2 + $0x2e8] sm:$0xff] %v344
      %761 = vst [vmem:[#allocation2 + $0x330] sm:$0xff] %v345
      %762 = vst [vmem:[#allocation2 + $0x378] sm:$0xff] %v347
      %763 = vst [vmem:[#allocation2 + $0x3c0] sm:$0xff] %v348
      %764 = vst [vmem:[#allocation2 + $0x408] sm:$0xff] %v350
      %765 = vst [vmem:[#allocation2 + $0x450] sm:$0xff] %v351
      %766 = vst [vmem:[#allocation2 + $0x498] sm:$0xff] %v353
      %767 = vst [vmem:[#allocation2 + $0x4e0] sm:$0xff] %v354
      %768 = vst [vmem:[#allocation2 + $0x528] sm:$0xff] %v356
      %769 = vst [vmem:[#allocation2 + $0x570] sm:$0xff] %v357
      %770 = vst [vmem:[#allocation2 + $0x5b8] sm:$0xff] %v359
      %771 = vst [vmem:[#allocation2 + $0x600] sm:$0xff] %v360
      %772 = vst [vmem:[#allocation2 + $0x648] sm:$0xff] %v362
      %773 = vst [vmem:[#allocation2 + $0x690] sm:$0xff] %v363
      %774 = vst [vmem:[#allocation2 + $0x6d8] sm:$0xff] %v365
      %775 = vst [vmem:[#allocation2 + $0x720] sm:$0xff] %v366
      %776 = vst [vmem:[#allocation2 + $0x768] sm:$0xff] %v368
      %777 = vst [vmem:[#allocation2 + $0x7b0] sm:$0xff] %v369
      %778 = vst [vmem:[#allocation2 + $0x7f8] sm:$0xff] %v371
      %779 = vst [vmem:[#allocation2 + $0x840] sm:$0xff] %v372
      %780 = vst [vmem:[#allocation2 + $0x888] sm:$0xff] %v374
      %781 = vst [vmem:[#allocation2 + $0x8d0] sm:$0xff] %v375
      %v785 = vrot.slane %v374, 1
      %v786 = vrot.slane %v375, 1
      %v787 = vsel %vm460, %v785, %v786
      %v788 = vrot.slane %v376, 1
      %v789 = vsel %vm460, %v786, %v788
      %792 = vst [vmem:[#allocation2 + $0x20] sm:$0xff] %v468
      %793 = vst [vmem:[#allocation2 + $0x68] sm:$0xff] %v470
      %794 = vst [vmem:[#allocation2 + $0xb0] sm:$0xff] %v473
      %795 = vst [vmem:[#allocation2 + $0xf8] sm:$0xff] %v475
      %796 = vst [vmem:[#allocation2 + $0x140] sm:$0xff] %v478
      %797 = vst [vmem:[#allocation2 + $0x188] sm:$0xff] %v480
      %798 = vst [vmem:[#allocation2 + $0x1d0] sm:$0xff] %v483
      %799 = vst [vmem:[#allocation2 + $0x218] sm:$0xff] %v485
      %800 = vst [vmem:[#allocation2 + $0x260] sm:$0xff] %v488
      %801 = vst [vmem:[#allocation2 + $0x2a8] sm:$0xff] %v490
      %802 = vst [vmem:[#allocation2 + $0x2f0] sm:$0xff] %v493
      %803 = vst [vmem:[#allocation2 + $0x338] sm:$0xff] %v495
      %804 = vst [vmem:[#allocation2 + $0x380] sm:$0xff] %v498
      %805 = vst [vmem:[#allocation2 + $0x3c8] sm:$0xff] %v500
      %806 = vst [vmem:[#allocation2 + $0x410] sm:$0xff] %v503
      %807 = vst [vmem:[#allocation2 + $0x458] sm:$0xff] %v505
      %808 = vst [vmem:[#allocation2 + $0x4a0] sm:$0xff] %v508
      %809 = vst [vmem:[#allocation2 + $0x4e8] sm:$0xff] %v510
      %810 = vst [vmem:[#allocation2 + $0x530] sm:$0xff] %v513
      %811 = vst [vmem:[#allocation2 + $0x578] sm:$0xff] %v515
      %812 = vst [vmem:[#allocation2 + $0x5c0] sm:$0xff] %v518
      %813 = vst [vmem:[#allocation2 + $0x608] sm:$0xff] %v520
      %814 = vst [vmem:[#allocation2 + $0x650] sm:$0xff] %v523
      %815 = vst [vmem:[#allocation2 + $0x698] sm:$0xff] %v525
      %816 = vst [vmem:[#allocation2 + $0x6e0] sm:$0xff] %v528
      %817 = vst [vmem:[#allocation2 + $0x728] sm:$0xff] %v530
      %818 = vst [vmem:[#allocation2 + $0x770] sm:$0xff] %v533
      %819 = vst [vmem:[#allocation2 + $0x7b8] sm:$0xff] %v535
      %820 = vst [vmem:[#allocation2 + $0x800] sm:$0xff] %v538
      %821 = vst [vmem:[#allocation2 + $0x848] sm:$0xff] %v540
      %822 = vst [vmem:[#allocation2 + $0x890] sm:$0xff] %v787
      %823 = vst [vmem:[#allocation2 + $0x8d8] sm:$0xff] %v789
      %v824 = vrot.slane %v374, 2
      %v825 = vrot.slane %v375, 2
      %v826 = vsel %vm605, %v824, %v825
      %v827 = vrot.slane %v376, 2
      %v828 = vsel %vm605, %v825, %v827
      %831 = vst [vmem:[#allocation2 + $0x28] sm:$0xff] %v613
      %832 = vst [vmem:[#allocation2 + $0x70] sm:$0xff] %v615
      %833 = vst [vmem:[#allocation2 + $0xb8] sm:$0xff] %v618
      %834 = vst [vmem:[#allocation2 + $0x100] sm:$0xff] %v620
      %835 = vst [vmem:[#allocation2 + $0x148] sm:$0xff] %v623
      %836 = vst [vmem:[#allocation2 + $0x190] sm:$0xff] %v625
      %837 = vst [vmem:[#allocation2 + $0x1d8] sm:$0xff] %v628
      %838 = vst [vmem:[#allocation2 + $0x220] sm:$0xff] %v630
      %839 = vst [vmem:[#allocation2 + $0x268] sm:$0xff] %v633
      %840 = vst [vmem:[#allocation2 + $0x2b0] sm:$0xff] %v635
      %841 = vst [vmem:[#allocation2 + $0x2f8] sm:$0xff] %v638
      %842 = vst [vmem:[#allocation2 + $0x340] sm:$0xff] %v640
      %843 = vst [vmem:[#allocation2 + $0x388] sm:$0xff] %v643
      %844 = vst [vmem:[#allocation2 + $0x3d0] sm:$0xff] %v645
      %845 = vst [vmem:[#allocation2 + $0x418] sm:$0xff] %v648
      %846 = vst [vmem:[#allocation2 + $0x460] sm:$0xff] %v650
      %847 = vst [vmem:[#allocation2 + $0x4a8] sm:$0xff] %v653
      %848 = vst [vmem:[#allocation2 + $0x4f0] sm:$0xff] %v655
      %849 = vst [vmem:[#allocation2 + $0x538] sm:$0xff] %v658
      %850 = vst [vmem:[#allocation2 + $0x580] sm:$0xff] %v660
      %851 = vst [vmem:[#allocation2 + $0x5c8] sm:$0xff] %v663
      %852 = vst [vmem:[#allocation2 + $0x610] sm:$0xff] %v665
      %853 = vst [vmem:[#allocation2 + $0x658] sm:$0xff] %v668
      %854 = vst [vmem:[#allocation2 + $0x6a0] sm:$0xff] %v670
      %855 = vst [vmem:[#allocation2 + $0x6e8] sm:$0xff] %v673
      %856 = vst [vmem:[#allocation2 + $0x730] sm:$0xff] %v675
      %857 = vst [vmem:[#allocation2 + $0x778] sm:$0xff] %v678
      %858 = vst [vmem:[#allocation2 + $0x7c0] sm:$0xff] %v680
      %859 = vst [vmem:[#allocation2 + $0x808] sm:$0xff] %v683
      %860 = vst [vmem:[#allocation2 + $0x850] sm:$0xff] %v685
      %861 = vst [vmem:[#allocation2 + $0x898] sm:$0xff] %v826
      %862 = vst [vmem:[#allocation2 + $0x8e0] sm:$0xff] %v828
      %863 = vst [vmem:[#allocation2 + $0x30] sm:$0xff] %v332
      %864 = vst [vmem:[#allocation2 + $0x78] sm:$0xff] %v333
      %865 = vst [vmem:[#allocation2 + $0xc0] sm:$0xff] %v335
      %866 = vst [vmem:[#allocation2 + $0x108] sm:$0xff] %v336
      %867 = vst [vmem:[#allocation2 + $0x150] sm:$0xff] %v338
      %868 = vst [vmem:[#allocation2 + $0x198] sm:$0xff] %v339
      %869 = vst [vmem:[#allocation2 + $0x1e0] sm:$0xff] %v341
      %870 = vst [vmem:[#allocation2 + $0x228] sm:$0xff] %v342
      %871 = vst [vmem:[#allocation2 + $0x270] sm:$0xff] %v344
      %872 = vst [vmem:[#allocation2 + $0x2b8] sm:$0xff] %v345
      %873 = vst [vmem:[#allocation2 + $0x300] sm:$0xff] %v347
      %874 = vst [vmem:[#allocation2 + $0x348] sm:$0xff] %v348
      %875 = vst [vmem:[#allocation2 + $0x390] sm:$0xff] %v350
      %876 = vst [vmem:[#allocation2 + $0x3d8] sm:$0xff] %v351
      %877 = vst [vmem:[#allocation2 + $0x420] sm:$0xff] %v353
      %878 = vst [vmem:[#allocation2 + $0x468] sm:$0xff] %v354
      %879 = vst [vmem:[#allocation2 + $0x4b0] sm:$0xff] %v356
      %880 = vst [vmem:[#allocation2 + $0x4f8] sm:$0xff] %v357
      %881 = vst [vmem:[#allocation2 + $0x540] sm:$0xff] %v359
      %882 = vst [vmem:[#allocation2 + $0x588] sm:$0xff] %v360
      %883 = vst [vmem:[#allocation2 + $0x5d0] sm:$0xff] %v362
      %884 = vst [vmem:[#allocation2 + $0x618] sm:$0xff] %v363
      %885 = vst [vmem:[#allocation2 + $0x660] sm:$0xff] %v365
      %886 = vst [vmem:[#allocation2 + $0x6a8] sm:$0xff] %v366
      %887 = vst [vmem:[#allocation2 + $0x6f0] sm:$0xff] %v368
      %888 = vst [vmem:[#allocation2 + $0x738] sm:$0xff] %v369
      %889 = vst [vmem:[#allocation2 + $0x780] sm:$0xff] %v371
      %890 = vst [vmem:[#allocation2 + $0x7c8] sm:$0xff] %v372
      %891 = vst [vmem:[#allocation2 + $0x810] sm:$0xff] %v374
      %892 = vst [vmem:[#allocation2 + $0x858] sm:$0xff] %v375
      %893 = vst [vmem:[#allocation2 + $0x8a0] sm:$0xff] %v377
      %894 = vst [vmem:[#allocation2 + $0x8e8] sm:$0xff] %v378
      %v898 = vrot.slane %v377, 1
      %v899 = vrot.slane %v378, 1
      %v900 = vsel %vm460, %v898, %v899
      %v901 = vrot.slane %v379, 1
      %v902 = vsel %vm460, %v899, %v901
      %905 = vst [vmem:[#allocation2 + $0x38] sm:$0xff] %v473
      %906 = vst [vmem:[#allocation2 + $0x80] sm:$0xff] %v475
      %907 = vst [vmem:[#allocation2 + $0xc8] sm:$0xff] %v478
      %908 = vst [vmem:[#allocation2 + $0x110] sm:$0xff] %v480
      %909 = vst [vmem:[#allocation2 + $0x158] sm:$0xff] %v483
      %910 = vst [vmem:[#allocation2 + $0x1a0] sm:$0xff] %v485
      %911 = vst [vmem:[#allocation2 + $0x1e8] sm:$0xff] %v488
      %912 = vst [vmem:[#allocation2 + $0x230] sm:$0xff] %v490
      %913 = vst [vmem:[#allocation2 + $0x278] sm:$0xff] %v493
      %914 = vst [vmem:[#allocation2 + $0x2c0] sm:$0xff] %v495
      %915 = vst [vmem:[#allocation2 + $0x308] sm:$0xff] %v498
      %916 = vst [vmem:[#allocation2 + $0x350] sm:$0xff] %v500
      %917 = vst [vmem:[#allocation2 + $0x398] sm:$0xff] %v503
      %918 = vst [vmem:[#allocation2 + $0x3e0] sm:$0xff] %v505
      %919 = vst [vmem:[#allocation2 + $0x428] sm:$0xff] %v508
      %920 = vst [vmem:[#allocation2 + $0x470] sm:$0xff] %v510
      %921 = vst [vmem:[#allocation2 + $0x4b8] sm:$0xff] %v513
      %922 = vst [vmem:[#allocation2 + $0x500] sm:$0xff] %v515
      %923 = vst [vmem:[#allocation2 + $0x548] sm:$0xff] %v518
      %924 = vst [vmem:[#allocation2 + $0x590] sm:$0xff] %v520
      %925 = vst [vmem:[#allocation2 + $0x5d8] sm:$0xff] %v523
      %926 = vst [vmem:[#allocation2 + $0x620] sm:$0xff] %v525
      %927 = vst [vmem:[#allocation2 + $0x668] sm:$0xff] %v528
      %928 = vst [vmem:[#allocation2 + $0x6b0] sm:$0xff] %v530
      %929 = vst [vmem:[#allocation2 + $0x6f8] sm:$0xff] %v533
      %930 = vst [vmem:[#allocation2 + $0x740] sm:$0xff] %v535
      %931 = vst [vmem:[#allocation2 + $0x788] sm:$0xff] %v538
      %932 = vst [vmem:[#allocation2 + $0x7d0] sm:$0xff] %v540
      %933 = vst [vmem:[#allocation2 + $0x818] sm:$0xff] %v787
      %934 = vst [vmem:[#allocation2 + $0x860] sm:$0xff] %v789
      %935 = vst [vmem:[#allocation2 + $0x8a8] sm:$0xff] %v900
      %936 = vst [vmem:[#allocation2 + $0x8f0] sm:$0xff] %v902
      %v937 = vrot.slane %v377, 2
      %v938 = vrot.slane %v378, 2
      %v939 = vsel %vm605, %v937, %v938
      %v940 = vrot.slane %v379, 2
      %v941 = vsel %vm605, %v938, %v940
      %944 = vst [vmem:[#allocation2 + $0x40] sm:$0xff] %v618
      %945 = vst [vmem:[#allocation2 + $0x88] sm:$0xff] %v620
      %946 = vst [vmem:[#allocation2 + $0xd0] sm:$0xff] %v623
      %947 = vst [vmem:[#allocation2 + $0x118] sm:$0xff] %v625
      %948 = vst [vmem:[#allocation2 + $0x160] sm:$0xff] %v628
      %949 = vst [vmem:[#allocation2 + $0x1a8] sm:$0xff] %v630
      %950 = vst [vmem:[#allocation2 + $0x1f0] sm:$0xff] %v633
      %951 = vst [vmem:[#allocation2 + $0x238] sm:$0xff] %v635
      %952 = vst [vmem:[#allocation2 + $0x280] sm:$0xff] %v638
      %953 = vst [vmem:[#allocation2 + $0x2c8] sm:$0xff] %v640
      %954 = vst [vmem:[#allocation2 + $0x310] sm:$0xff] %v643
      %955 = vst [vmem:[#allocation2 + $0x358] sm:$0xff] %v645
      %956 = vst [vmem:[#allocation2 + $0x3a0] sm:$0xff] %v648
      %957 = vst [vmem:[#allocation2 + $0x3e8] sm:$0xff] %v650
      %958 = vst [vmem:[#allocation2 + $0x430] sm:$0xff] %v653
      %959 = vst [vmem:[#allocation2 + $0x478] sm:$0xff] %v655
      %960 = vst [vmem:[#allocation2 + $0x4c0] sm:$0xff] %v658
      %961 = vst [vmem:[#allocation2 + $0x508] sm:$0xff] %v660
      %962 = vst [vmem:[#allocation2 + $0x550] sm:$0xff] %v663
      %963 = vst [vmem:[#allocation2 + $0x598] sm:$0xff] %v665
      %964 = vst [vmem:[#allocation2 + $0x5e0] sm:$0xff] %v668
      %965 = vst [vmem:[#allocation2 + $0x628] sm:$0xff] %v670
      %966 = vst [vmem:[#allocation2 + $0x670] sm:$0xff] %v673
      %967 = vst [vmem:[#allocation2 + $0x6b8] sm:$0xff] %v675
      %968 = vst [vmem:[#allocation2 + $0x700] sm:$0xff] %v678
      %969 = vst [vmem:[#allocation2 + $0x748] sm:$0xff] %v680
      %970 = vst [vmem:[#allocation2 + $0x790] sm:$0xff] %v683
      %971 = vst [vmem:[#allocation2 + $0x7d8] sm:$0xff] %v685
      %972 = vst [vmem:[#allocation2 + $0x820] sm:$0xff] %v826
      %973 = vst [vmem:[#allocation2 + $0x868] sm:$0xff] %v828
      %974 = vst [vmem:[#allocation2 + $0x8b0] sm:$0xff] %v939
      %975 = vst [vmem:[#allocation2 + $0x8f8] sm:$0xff] %v941
      %v976 = vld [vmem:[#allocation2] sm:$0xff]
      %v977 = vld [vmem:[#allocation2 + $0x8] sm:$0xff]
      %v978 = vld [vmem:[#allocation2 + $0x10] sm:$0xff]
      %v979 = vld [vmem:[#allocation2 + $0x18] sm:$0xff]
      %v980 = vld [vmem:[#allocation2 + $0x20] sm:$0xff]
      %v981 = vld [vmem:[#allocation2 + $0x28] sm:$0xff]
      %v982 = vld [vmem:[#allocation2 + $0x30] sm:$0xff]
      %v983 = vld [vmem:[#allocation2 + $0x38] sm:$0xff]
      %v984 = vld [vmem:[#allocation2 + $0x40] sm:$0xff]
      %v985 = vld [vmem:[#allocation2 + $0x48] sm:$0xff]
      %v986 = vld [vmem:[#allocation2 + $0x50] sm:$0xff]
      %v987 = vld [vmem:[#allocation2 + $0x58] sm:$0xff]
      %v988 = vld [vmem:[#allocation2 + $0x60] sm:$0xff]
      %v989 = vld [vmem:[#allocation2 + $0x68] sm:$0xff]
      %v990 = vld [vmem:[#allocation2 + $0x70] sm:$0xff]
      %v991 = vld [vmem:[#allocation2 + $0x78] sm:$0xff]
      %v992 = vld [vmem:[#allocation2 + $0x80] sm:$0xff]
      %v993 = vld [vmem:[#allocation2 + $0x88] sm:$0xff]
      %v994 = vld [vmem:[#allocation2 + $0x90] sm:$0xff]
      %v995 = vld [vmem:[#allocation2 + $0x98] sm:$0xff]
      %v996 = vld [vmem:[#allocation2 + $0xa0] sm:$0xff]
      %v997 = vld [vmem:[#allocation2 + $0xa8] sm:$0xff]
      %v998 = vld [vmem:[#allocation2 + $0xb0] sm:$0xff]
      %v999 = vld [vmem:[#allocation2 + $0xb8] sm:$0xff]
      %v1000 = vld [vmem:[#allocation2 + $0xc0] sm:$0xff]
      %v1001 = vld [vmem:[#allocation2 + $0xc8] sm:$0xff]
      %v1002 = vld [vmem:[#allocation2 + $0xd0] sm:$0xff]
      %v1003 = vld [vmem:[#allocation2 + $0xd8] sm:$0xff]
      %v1004 = vld [vmem:[#allocation2 + $0xe0] sm:$0xff]
      %v1005 = vld [vmem:[#allocation2 + $0xe8] sm:$0xff]
      %v1006 = vld [vmem:[#allocation2 + $0xf0] sm:$0xff]
      %v1007 = vld [vmem:[#allocation2 + $0xf8] sm:$0xff]
      %v1008 = vld [vmem:[#allocation2 + $0x100] sm:$0xff]
      %v1009 = vld [vmem:[#allocation2 + $0x108] sm:$0xff]
      %v1010 = vld [vmem:[#allocation2 + $0x110] sm:$0xff]
      %v1011 = vld [vmem:[#allocation2 + $0x118] sm:$0xff]
      %v1012 = vld [vmem:[#allocation2 + $0x120] sm:$0xff]
      %v1013 = vld [vmem:[#allocation2 + $0x128] sm:$0xff]
      %v1014 = vld [vmem:[#allocation2 + $0x130] sm:$0xff]
      %v1015 = vld [vmem:[#allocation2 + $0x138] sm:$0xff]
      %v1016 = vld [vmem:[#allocation2 + $0x140] sm:$0xff]
      %v1017 = vld [vmem:[#allocation2 + $0x148] sm:$0xff]
      %v1018 = vld [vmem:[#allocation2 + $0x150] sm:$0xff]
      %v1019 = vld [vmem:[#allocation2 + $0x158] sm:$0xff]
      %v1020 = vld [vmem:[#allocation2 + $0x160] sm:$0xff]
      %v1021 = vld [vmem:[#allocation2 + $0x168] sm:$0xff]
      %v1022 = vld [vmem:[#allocation2 + $0x170] sm:$0xff]
      %v1023 = vld [vmem:[#allocation2 + $0x178] sm:$0xff]
      %v1024 = vld [vmem:[#allocation2 + $0x180] sm:$0xff]
      %v1025 = vld [vmem:[#allocation2 + $0x188] sm:$0xff]
      %v1026 = vld [vmem:[#allocation2 + $0x190] sm:$0xff]
      %v1027 = vld [vmem:[#allocation2 + $0x198] sm:$0xff]
      %v1028 = vld [vmem:[#allocation2 + $0x1a0] sm:$0xff]
      %v1029 = vld [vmem:[#allocation2 + $0x1a8] sm:$0xff]
      %v1030 = vld [vmem:[#allocation2 + $0x1b0] sm:$0xff]
      %v1031 = vld [vmem:[#allocation2 + $0x1b8] sm:$0xff]
      %v1032 = vld [vmem:[#allocation2 + $0x1c0] sm:$0xff]
      %v1033 = vld [vmem:[#allocation2 + $0x1c8] sm:$0xff]
      %v1034 = vld [vmem:[#allocation2 + $0x1d0] sm:$0xff]
      %v1035 = vld [vmem:[#allocation2 + $0x1d8] sm:$0xff]
      %v1036 = vld [vmem:[#allocation2 + $0x1e0] sm:$0xff]
      %v1037 = vld [vmem:[#allocation2 + $0x1e8] sm:$0xff]
      %v1038 = vld [vmem:[#allocation2 + $0x1f0] sm:$0xff]
      %v1039 = vld [vmem:[#allocation2 + $0x1f8] sm:$0xff]
      %v1040 = vld [vmem:[#allocation2 + $0x200] sm:$0xff]
      %v1041 = vld [vmem:[#allocation2 + $0x208] sm:$0xff]
      %v1042 = vld [vmem:[#allocation2 + $0x210] sm:$0xff]
      %v1043 = vld [vmem:[#allocation2 + $0x218] sm:$0xff]
      %v1044 = vld [vmem:[#allocation2 + $0x220] sm:$0xff]
      %v1045 = vld [vmem:[#allocation2 + $0x228] sm:$0xff]
      %v1046 = vld [vmem:[#allocation2 + $0x230] sm:$0xff]
      %v1047 = vld [vmem:[#allocation2 + $0x238] sm:$0xff]
      %v1048 = vld [vmem:[#allocation2 + $0x240] sm:$0xff]
      %v1049 = vld [vmem:[#allocation2 + $0x248] sm:$0xff]
      %v1050 = vld [vmem:[#allocation2 + $0x250] sm:$0xff]
      %v1051 = vld [vmem:[#allocation2 + $0x258] sm:$0xff]
      %v1052 = vld [vmem:[#allocation2 + $0x260] sm:$0xff]
      %v1053 = vld [vmem:[#allocation2 + $0x268] sm:$0xff]
      %v1054 = vld [vmem:[#allocation2 + $0x270] sm:$0xff]
      %v1055 = vld [vmem:[#allocation2 + $0x278] sm:$0xff]
      %v1056 = vld [vmem:[#allocation2 + $0x280] sm:$0xff]
      %v1057 = vld [vmem:[#allocation2 + $0x288] sm:$0xff]
      %v1058 = vld [vmem:[#allocation2 + $0x290] sm:$0xff]
      %v1059 = vld [vmem:[#allocation2 + $0x298] sm:$0xff]
      %v1060 = vld [vmem:[#allocation2 + $0x2a0] sm:$0xff]
      %v1061 = vld [vmem:[#allocation2 + $0x2a8] sm:$0xff]
      %v1062 = vld [vmem:[#allocation2 + $0x2b0] sm:$0xff]
      %v1063 = vld [vmem:[#allocation2 + $0x2b8] sm:$0xff]
      %v1064 = vld [vmem:[#allocation2 + $0x2c0] sm:$0xff]
      %v1065 = vld [vmem:[#allocation2 + $0x2c8] sm:$0xff]
      %v1066 = vld [vmem:[#allocation2 + $0x2d0] sm:$0xff]
      %v1067 = vld [vmem:[#allocation2 + $0x2d8] sm:$0xff]
      %v1068 = vld [vmem:[#allocation2 + $0x2e0] sm:$0xff]
      %v1069 = vld [vmem:[#allocation2 + $0x2e8] sm:$0xff]
      %v1070 = vld [vmem:[#allocation2 + $0x2f0] sm:$0xff]
      %v1071 = vld [vmem:[#allocation2 + $0x2f8] sm:$0xff]
      %v1072 = vld [vmem:[#allocation2 + $0x300] sm:$0xff]
      %v1073 = vld [vmem:[#allocation2 + $0x308] sm:$0xff]
      %v1074 = vld [vmem:[#allocation2 + $0x310] sm:$0xff]
      %v1075 = vld [vmem:[#allocation2 + $0x318] sm:$0xff]
      %v1076 = vld [vmem:[#allocation2 + $0x320] sm:$0xff]
      %v1077 = vld [vmem:[#allocation2 + $0x328] sm:$0xff]
      %v1078 = vld [vmem:[#allocation2 + $0x330] sm:$0xff]
      %v1079 = vld [vmem:[#allocation2 + $0x338] sm:$0xff]
      %v1080 = vld [vmem:[#allocation2 + $0x340] sm:$0xff]
      %v1081 = vld [vmem:[#allocation2 + $0x348] sm:$0xff]
      %v1082 = vld [vmem:[#allocation2 + $0x350] sm:$0xff]
      %v1083 = vld [vmem:[#allocation2 + $0x358] sm:$0xff]
      %v1084 = vld [vmem:[#allocation2 + $0x360] sm:$0xff]
      %v1085 = vld [vmem:[#allocation2 + $0x368] sm:$0xff]
      %v1086 = vld [vmem:[#allocation2 + $0x370] sm:$0xff]
      %v1087 = vld [vmem:[#allocation2 + $0x378] sm:$0xff]
      %v1088 = vld [vmem:[#allocation2 + $0x380] sm:$0xff]
      %v1089 = vld [vmem:[#allocation2 + $0x388] sm:$0xff]
      %v1090 = vld [vmem:[#allocation2 + $0x390] sm:$0xff]
      %v1091 = vld [vmem:[#allocation2 + $0x398] sm:$0xff]
      %v1092 = vld [vmem:[#allocation2 + $0x3a0] sm:$0xff]
      %v1093 = vld [vmem:[#allocation2 + $0x3a8] sm:$0xff]
      %v1094 = vld [vmem:[#allocation2 + $0x3b0] sm:$0xff]
      %v1095 = vld [vmem:[#allocation2 + $0x3b8] sm:$0xff]
      %v1096 = vld [vmem:[#allocation2 + $0x3c0] sm:$0xff]
      %v1097 = vld [vmem:[#allocation2 + $0x3c8] sm:$0xff]
      %v1098 = vld [vmem:[#allocation2 + $0x3d0] sm:$0xff]
      %v1099 = vld [vmem:[#allocation2 + $0x3d8] sm:$0xff]
      %v1100 = vld [vmem:[#allocation2 + $0x3e0] sm:$0xff]
      %v1101 = vld [vmem:[#allocation2 + $0x3e8] sm:$0xff]
      %v1102 = vld [vmem:[#allocation2 + $0x3f0] sm:$0xff]
      %v1103 = vld [vmem:[#allocation2 + $0x3f8] sm:$0xff]
      %v1104 = vld [vmem:[#allocation2 + $0x400] sm:$0xff]
      %v1105 = vld [vmem:[#allocation2 + $0x408] sm:$0xff]
      %v1106 = vld [vmem:[#allocation2 + $0x410] sm:$0xff]
      %v1107 = vld [vmem:[#allocation2 + $0x418] sm:$0xff]
      %v1108 = vld [vmem:[#allocation2 + $0x420] sm:$0xff]
      %v1109 = vld [vmem:[#allocation2 + $0x428] sm:$0xff]
      %v1110 = vld [vmem:[#allocation2 + $0x430] sm:$0xff]
      %v1111 = vld [vmem:[#allocation2 + $0x438] sm:$0xff]
      %v1112 = vld [vmem:[#allocation2 + $0x440] sm:$0xff]
      %v1113 = vld [vmem:[#allocation2 + $0x448] sm:$0xff]
      %v1114 = vld [vmem:[#allocation2 + $0x450] sm:$0xff]
      %v1115 = vld [vmem:[#allocation2 + $0x458] sm:$0xff]
      %v1116 = vld [vmem:[#allocation2 + $0x460] sm:$0xff]
      %v1117 = vld [vmem:[#allocation2 + $0x468] sm:$0xff]
      %v1118 = vld [vmem:[#allocation2 + $0x470] sm:$0xff]
      %v1119 = vld [vmem:[#allocation2 + $0x478] sm:$0xff]
      %v1120 = vld [vmem:[#allocation2 + $0x480] sm:$0xff]
      %v1121 = vld [vmem:[#allocation2 + $0x488] sm:$0xff]
      %v1122 = vld [vmem:[#allocation2 + $0x490] sm:$0xff]
      %v1123 = vld [vmem:[#allocation2 + $0x498] sm:$0xff]
      %v1124 = vld [vmem:[#allocation2 + $0x4a0] sm:$0xff]
      %v1125 = vld [vmem:[#allocation2 + $0x4a8] sm:$0xff]
      %v1126 = vld [vmem:[#allocation2 + $0x4b0] sm:$0xff]
      %v1127 = vld [vmem:[#allocation2 + $0x4b8] sm:$0xff]
      %v1128 = vld [vmem:[#allocation2 + $0x4c0] sm:$0xff]
      %v1129 = vld [vmem:[#allocation2 + $0x4c8] sm:$0xff]
      %v1130 = vld [vmem:[#allocation2 + $0x4d0] sm:$0xff]
      %v1131 = vld [vmem:[#allocation2 + $0x4d8] sm:$0xff]
      %v1132 = vld [vmem:[#allocation2 + $0x4e0] sm:$0xff]
      %v1133 = vld [vmem:[#allocation2 + $0x4e8] sm:$0xff]
      %v1134 = vld [vmem:[#allocation2 + $0x4f0] sm:$0xff]
      %v1135 = vld [vmem:[#allocation2 + $0x4f8] sm:$0xff]
      %v1136 = vld [vmem:[#allocation2 + $0x500] sm:$0xff]
      %v1137 = vld [vmem:[#allocation2 + $0x508] sm:$0xff]
      %v1138 = vld [vmem:[#allocation2 + $0x510] sm:$0xff]
      %v1139 = vld [vmem:[#allocation2 + $0x518] sm:$0xff]
      %v1140 = vld [vmem:[#allocation2 + $0x520] sm:$0xff]
      %v1141 = vld [vmem:[#allocation2 + $0x528] sm:$0xff]
      %v1142 = vld [vmem:[#allocation2 + $0x530] sm:$0xff]
      %v1143 = vld [vmem:[#allocation2 + $0x538] sm:$0xff]
      %v1144 = vld [vmem:[#allocation2 + $0x540] sm:$0xff]
      %v1145 = vld [vmem:[#allocation2 + $0x548] sm:$0xff]
      %v1146 = vld [vmem:[#allocation2 + $0x550] sm:$0xff]
      %v1147 = vld [vmem:[#allocation2 + $0x558] sm:$0xff]
      %v1148 = vld [vmem:[#allocation2 + $0x560] sm:$0xff]
      %v1149 = vld [vmem:[#allocation2 + $0x568] sm:$0xff]
      %v1150 = vld [vmem:[#allocation2 + $0x570] sm:$0xff]
      %v1151 = vld [vmem:[#allocation2 + $0x578] sm:$0xff]
      %v1152 = vld [vmem:[#allocation2 + $0x580] sm:$0xff]
      %v1153 = vld [vmem:[#allocation2 + $0x588] sm:$0xff]
      %v1154 = vld [vmem:[#allocation2 + $0x590] sm:$0xff]
      %v1155 = vld [vmem:[#allocation2 + $0x598] sm:$0xff]
      %v1156 = vld [vmem:[#allocation2 + $0x5a0] sm:$0xff]
      %v1157 = vld [vmem:[#allocation2 + $0x5a8] sm:$0xff]
      %v1158 = vld [vmem:[#allocation2 + $0x5b0] sm:$0xff]
      %v1159 = vld [vmem:[#allocation2 + $0x5b8] sm:$0xff]
      %v1160 = vld [vmem:[#allocation2 + $0x5c0] sm:$0xff]
      %v1161 = vld [vmem:[#allocation2 + $0x5c8] sm:$0xff]
      %v1162 = vld [vmem:[#allocation2 + $0x5d0] sm:$0xff]
      %v1163 = vld [vmem:[#allocation2 + $0x5d8] sm:$0xff]
      %v1164 = vld [vmem:[#allocation2 + $0x5e0] sm:$0xff]
      %v1165 = vld [vmem:[#allocation2 + $0x5e8] sm:$0xff]
      %v1166 = vld [vmem:[#allocation2 + $0x5f0] sm:$0xff]
      %v1167 = vld [vmem:[#allocation2 + $0x5f8] sm:$0xff]
      %v1168 = vld [vmem:[#allocation2 + $0x600] sm:$0xff]
      %v1169 = vld [vmem:[#allocation2 + $0x608] sm:$0xff]
      %v1170 = vld [vmem:[#allocation2 + $0x610] sm:$0xff]
      %v1171 = vld [vmem:[#allocation2 + $0x618] sm:$0xff]
      %v1172 = vld [vmem:[#allocation2 + $0x620] sm:$0xff]
      %v1173 = vld [vmem:[#allocation2 + $0x628] sm:$0xff]
      %v1174 = vld [vmem:[#allocation2 + $0x630] sm:$0xff]
      %v1175 = vld [vmem:[#allocation2 + $0x638] sm:$0xff]
      %v1176 = vld [vmem:[#allocation2 + $0x640] sm:$0xff]
      %v1177 = vld [vmem:[#allocation2 + $0x648] sm:$0xff]
      %v1178 = vld [vmem:[#allocation2 + $0x650] sm:$0xff]
      %v1179 = vld [vmem:[#allocation2 + $0x658] sm:$0xff]
      %v1180 = vld [vmem:[#allocation2 + $0x660] sm:$0xff]
      %v1181 = vld [vmem:[#allocation2 + $0x668] sm:$0xff]
      %v1182 = vld [vmem:[#allocation2 + $0x670] sm:$0xff]
      %v1183 = vld [vmem:[#allocation2 + $0x678] sm:$0xff]
      %v1184 = vld [vmem:[#allocation2 + $0x680] sm:$0xff]
      %v1185 = vld [vmem:[#allocation2 + $0x688] sm:$0xff]
      %v1186 = vld [vmem:[#allocation2 + $0x690] sm:$0xff]
      %v1187 = vld [vmem:[#allocation2 + $0x698] sm:$0xff]
      %v1188 = vld [vmem:[#allocation2 + $0x6a0] sm:$0xff]
      %v1189 = vld [vmem:[#allocation2 + $0x6a8] sm:$0xff]
      %v1190 = vld [vmem:[#allocation2 + $0x6b0] sm:$0xff]
      %v1191 = vld [vmem:[#allocation2 + $0x6b8] sm:$0xff]
      %v1192 = vld [vmem:[#allocation2 + $0x6c0] sm:$0xff]
      %v1193 = vld [vmem:[#allocation2 + $0x6c8] sm:$0xff]
      %v1194 = vld [vmem:[#allocation2 + $0x6d0] sm:$0xff]
      %v1195 = vld [vmem:[#allocation2 + $0x6d8] sm:$0xff]
      %v1196 = vld [vmem:[#allocation2 + $0x6e0] sm:$0xff]
      %v1197 = vld [vmem:[#allocation2 + $0x6e8] sm:$0xff]
      %v1198 = vld [vmem:[#allocation2 + $0x6f0] sm:$0xff]
      %v1199 = vld [vmem:[#allocation2 + $0x6f8] sm:$0xff]
      %v1200 = vld [vmem:[#allocation2 + $0x700] sm:$0xff]
      %v1201 = vld [vmem:[#allocation2 + $0x708] sm:$0xff]
      %v1202 = vld [vmem:[#allocation2 + $0x710] sm:$0xff]
      %v1203 = vld [vmem:[#allocation2 + $0x718] sm:$0xff]
      %v1204 = vld [vmem:[#allocation2 + $0x720] sm:$0xff]
      %v1205 = vld [vmem:[#allocation2 + $0x728] sm:$0xff]
      %v1206 = vld [vmem:[#allocation2 + $0x730] sm:$0xff]
      %v1207 = vld [vmem:[#allocation2 + $0x738] sm:$0xff]
      %v1208 = vld [vmem:[#allocation2 + $0x740] sm:$0xff]
      %v1209 = vld [vmem:[#allocation2 + $0x748] sm:$0xff]
      %v1210 = vld [vmem:[#allocation2 + $0x750] sm:$0xff]
      %v1211 = vld [vmem:[#allocation2 + $0x758] sm:$0xff]
      %v1212 = vld [vmem:[#allocation2 + $0x760] sm:$0xff]
      %v1213 = vld [vmem:[#allocation2 + $0x768] sm:$0xff]
      %v1214 = vld [vmem:[#allocation2 + $0x770] sm:$0xff]
      %v1215 = vld [vmem:[#allocation2 + $0x778] sm:$0xff]
      %v1216 = vld [vmem:[#allocation2 + $0x780] sm:$0xff]
      %v1217 = vld [vmem:[#allocation2 + $0x788] sm:$0xff]
      %v1218 = vld [vmem:[#allocation2 + $0x790] sm:$0xff]
      %v1219 = vld [vmem:[#allocation2 + $0x798] sm:$0xff]
      %v1220 = vld [vmem:[#allocation2 + $0x7a0] sm:$0xff]
      %v1221 = vld [vmem:[#allocation2 + $0x7a8] sm:$0xff]
      %v1222 = vld [vmem:[#allocation2 + $0x7b0] sm:$0xff]
      %v1223 = vld [vmem:[#allocation2 + $0x7b8] sm:$0xff]
      %v1224 = vld [vmem:[#allocation2 + $0x7c0] sm:$0xff]
      %v1225 = vld [vmem:[#allocation2 + $0x7c8] sm:$0xff]
      %v1226 = vld [vmem:[#allocation2 + $0x7d0] sm:$0xff]
      %v1227 = vld [vmem:[#allocation2 + $0x7d8] sm:$0xff]
      %v1228 = vld [vmem:[#allocation2 + $0x7e0] sm:$0xff]
      %v1229 = vld [vmem:[#allocation2 + $0x7e8] sm:$0xff]
      %v1230 = vld [vmem:[#allocation2 + $0x7f0] sm:$0xff]
      %v1231 = vld [vmem:[#allocation2 + $0x7f8] sm:$0xff]
      %v1232 = vld [vmem:[#allocation2 + $0x800] sm:$0xff]
      %v1233 = vld [vmem:[#allocation2 + $0x808] sm:$0xff]
      %v1234 = vld [vmem:[#allocation2 + $0x810] sm:$0xff]
      %v1235 = vld [vmem:[#allocation2 + $0x818] sm:$0xff]
      %v1236 = vld [vmem:[#allocation2 + $0x820] sm:$0xff]
      %v1237 = vld [vmem:[#allocation2 + $0x828] sm:$0xff]
      %v1238 = vld [vmem:[#allocation2 + $0x830] sm:$0xff]
      %v1239 = vld [vmem:[#allocation2 + $0x838] sm:$0xff]
      %v1240 = vld [vmem:[#allocation2 + $0x840] sm:$0xff]
      %v1241 = vld [vmem:[#allocation2 + $0x848] sm:$0xff]
      %v1242 = vld [vmem:[#allocation2 + $0x850] sm:$0xff]
      %v1243 = vld [vmem:[#allocation2 + $0x858] sm:$0xff]
      %v1244 = vld [vmem:[#allocation2 + $0x860] sm:$0xff]
      %v1245 = vld [vmem:[#allocation2 + $0x868] sm:$0xff]
      %v1246 = vld [vmem:[#allocation2 + $0x870] sm:$0xff]
      %v1247 = vld [vmem:[#allocation2 + $0x878] sm:$0xff]
      %v1248 = vld [vmem:[#allocation2 + $0x880] sm:$0xff]
      %v1249 = vld [vmem:[#allocation2 + $0x888] sm:$0xff]
      %v1250 = vld [vmem:[#allocation2 + $0x890] sm:$0xff]
      %v1251 = vld [vmem:[#allocation2 + $0x898] sm:$0xff]
      %v1252 = vld [vmem:[#allocation2 + $0x8a0] sm:$0xff]
      %v1253 = vld [vmem:[#allocation2 + $0x8a8] sm:$0xff]
      %v1254 = vld [vmem:[#allocation2 + $0x8b0] sm:$0xff]
      %v1255 = vld [vmem:[#allocation2 + $0x8b8] sm:$0xff]
      %v1256 = vld [vmem:[#allocation2 + $0x8c0] sm:$0xff]
      %v1257 = vld [vmem:[#allocation2 + $0x8c8] sm:$0xff]
      %v1258 = vld [vmem:[#allocation2 + $0x8d0] sm:$0xff]
      %v1259 = vld [vmem:[#allocation2 + $0x8d8] sm:$0xff]
      %v1260 = vld [vmem:[#allocation2 + $0x8e0] sm:$0xff]
      %v1261 = vld [vmem:[#allocation2 + $0x8e8] sm:$0xff]
      %v1262 = vld [vmem:[#allocation2 + $0x8f0] sm:$0xff]
      %v1263 = vld [vmem:[#allocation2 + $0x8f8] sm:$0xff]
      %v1264 = vld [vmem:[%s2] sm:$0xff]
      %v1265 = vld [vmem:[%s2 + $0x8] sm:$0xff]
      %v1266 = vld [vmem:[%s2 + $0x10] sm:$0xff]
      %v1267 = vld [vmem:[%s2 + $0x18] sm:$0xff]
      %v1268 = vld [vmem:[%s2 + $0x20] sm:$0xff]
      %v1269 = vld [vmem:[%s2 + $0x28] sm:$0xff]
      %v1270 = vld [vmem:[%s2 + $0x30] sm:$0xff]
      %v1271 = vld [vmem:[%s2 + $0x38] sm:$0xff]
      %v1272 = vld [vmem:[%s2 + $0x40] sm:$0xff]
      %v1273 = vld [vmem:[%s2 + $0x48] sm:$0xff]
      %v1274 = vld [vmem:[%s2 + $0x50] sm:$0xff]
      %v1275 = vld [vmem:[%s2 + $0x58] sm:$0xff]
      %v1276 = vld [vmem:[%s2 + $0x60] sm:$0xff]
      %v1277 = vld [vmem:[%s2 + $0x68] sm:$0xff]
      %v1278 = vld [vmem:[%s2 + $0x70] sm:$0xff]
      %v1279 = vld [vmem:[%s2 + $0x78] sm:$0xff]
      %v1280 = vld [vmem:[%s2 + $0x80] sm:$0xff]
      %v1281 = vld [vmem:[%s2 + $0x88] sm:$0xff]
      %v1282 = vld [vmem:[%s2 + $0x90] sm:$0xff]
      %v1283 = vld [vmem:[%s2 + $0x98] sm:$0xff]
      %v1284 = vld [vmem:[%s2 + $0xa0] sm:$0xff]
      %v1285 = vld [vmem:[%s2 + $0xa8] sm:$0xff]
      %v1286 = vld [vmem:[%s2 + $0xb0] sm:$0xff]
      %v1287 = vld [vmem:[%s2 + $0xb8] sm:$0xff]
      %v1288 = vld [vmem:[%s2 + $0xc0] sm:$0xff]
      %v1289 = vld [vmem:[%s2 + $0xc8] sm:$0xff]
      %v1290 = vld [vmem:[%s2 + $0xd0] sm:$0xff]
      %v1291 = vld [vmem:[%s2 + $0xd8] sm:$0xff]
      %v1292 = vld [vmem:[%s2 + $0xe0] sm:$0xff]
      %v1293 = vld [vmem:[%s2 + $0xe8] sm:$0xff]
      %v1294 = vld [vmem:[%s2 + $0xf0] sm:$0xff]
      %v1295 = vld [vmem:[%s2 + $0xf8] sm:$0xff]
      %v1296 = vld [vmem:[%s2 + $0x100] sm:$0xff]
      %v1297 = vld [vmem:[%s2 + $0x108] sm:$0xff]
      %v1298 = vld [vmem:[%s2 + $0x110] sm:$0xff]
      %v1299 = vld [vmem:[%s2 + $0x118] sm:$0xff]
      %v1300 = vld [vmem:[%s2 + $0x120] sm:$0xff]
      %v1301 = vld [vmem:[%s2 + $0x128] sm:$0xff]
      %v1302 = vld [vmem:[%s2 + $0x130] sm:$0xff]
      %v1303 = vld [vmem:[%s2 + $0x138] sm:$0xff]
      %v1304 = vld [vmem:[%s2 + $0x140] sm:$0xff]
      %v1305 = vld [vmem:[%s2 + $0x148] sm:$0xff]
      %v1306 = vld [vmem:[%s2 + $0x150] sm:$0xff]
      %v1307 = vld [vmem:[%s2 + $0x158] sm:$0xff]
      %v1308 = vld [vmem:[%s2 + $0x160] sm:$0xff]
      %v1309 = vld [vmem:[%s2 + $0x168] sm:$0xff]
      %v1310 = vld [vmem:[%s2 + $0x170] sm:$0xff]
      %v1311 = vld [vmem:[%s2 + $0x178] sm:$0xff]
      %v1312 = vld [vmem:[%s2 + $0x180] sm:$0xff]
      %v1313 = vld [vmem:[%s2 + $0x188] sm:$0xff]
      %v1314 = vld [vmem:[%s2 + $0x190] sm:$0xff]
      %v1315 = vld [vmem:[%s2 + $0x198] sm:$0xff]
      %v1316 = vld [vmem:[%s2 + $0x1a0] sm:$0xff]
      %v1317 = vld [vmem:[%s2 + $0x1a8] sm:$0xff]
      %v1318 = vld [vmem:[%s2 + $0x1b0] sm:$0xff]
      %v1319 = vld [vmem:[%s2 + $0x1b8] sm:$0xff]
      %v1320 = vld [vmem:[%s2 + $0x1c0] sm:$0xff]
      %v1321 = vld [vmem:[%s2 + $0x1c8] sm:$0xff]
      %v1322 = vld [vmem:[%s2 + $0x1d0] sm:$0xff]
      %v1323 = vld [vmem:[%s2 + $0x1d8] sm:$0xff]
      %v1324 = vld [vmem:[%s2 + $0x1e0] sm:$0xff]
      %v1325 = vld [vmem:[%s2 + $0x1e8] sm:$0xff]
      %v1326 = vld [vmem:[%s2 + $0x1f0] sm:$0xff]
      %v1327 = vld [vmem:[%s2 + $0x1f8] sm:$0xff]
      %v1328 = vld [vmem:[%s2 + $0x200] sm:$0xff]
      %v1329 = vld [vmem:[%s2 + $0x208] sm:$0xff]
      %v1330 = vld [vmem:[%s2 + $0x210] sm:$0xff]
      %v1331 = vld [vmem:[%s2 + $0x218] sm:$0xff]
      %v1332 = vld [vmem:[%s2 + $0x220] sm:$0xff]
      %v1333 = vld [vmem:[%s2 + $0x228] sm:$0xff]
      %v1334 = vld [vmem:[%s2 + $0x230] sm:$0xff]
      %v1335 = vld [vmem:[%s2 + $0x238] sm:$0xff]
      %v1336 = vld [vmem:[%s2 + $0x240] sm:$0xff]
      %v1337 = vld [vmem:[%s2 + $0x248] sm:$0xff]
      %v1338 = vld [vmem:[%s2 + $0x250] sm:$0xff]
      %v1339 = vld [vmem:[%s2 + $0x258] sm:$0xff]
      %v1340 = vld [vmem:[%s2 + $0x260] sm:$0xff]
      %v1341 = vld [vmem:[%s2 + $0x268] sm:$0xff]
      %v1342 = vld [vmem:[%s2 + $0x270] sm:$0xff]
      %v1343 = vld [vmem:[%s2 + $0x278] sm:$0xff]
      %v1344 = vld [vmem:[%s2 + $0x280] sm:$0xff]
      %v1345 = vld [vmem:[%s2 + $0x288] sm:$0xff]
      %v1346 = vld [vmem:[%s2 + $0x290] sm:$0xff]
      %v1347 = vld [vmem:[%s2 + $0x298] sm:$0xff]
      %v1348 = vld [vmem:[%s2 + $0x2a0] sm:$0xff]
      %v1349 = vld [vmem:[%s2 + $0x2a8] sm:$0xff]
      %v1350 = vld [vmem:[%s2 + $0x2b0] sm:$0xff]
      %v1351 = vld [vmem:[%s2 + $0x2b8] sm:$0xff]
      %v1352 = vld [vmem:[%s2 + $0x2c0] sm:$0xff]
      %v1353 = vld [vmem:[%s2 + $0x2c8] sm:$0xff]
      %v1354 = vld [vmem:[%s2 + $0x2d0] sm:$0xff]
      %v1355 = vld [vmem:[%s2 + $0x2d8] sm:$0xff]
      %v1356 = vld [vmem:[%s2 + $0x2e0] sm:$0xff]
      %v1357 = vld [vmem:[%s2 + $0x2e8] sm:$0xff]
      %v1358 = vld [vmem:[%s2 + $0x2f0] sm:$0xff]
      %v1359 = vld [vmem:[%s2 + $0x2f8] sm:$0xff]
      %v1360 = vld [vmem:[%s2 + $0x300] sm:$0xff]
      %v1361 = vld [vmem:[%s2 + $0x308] sm:$0xff]
      %v1362 = vld [vmem:[%s2 + $0x310] sm:$0xff]
      %v1363 = vld [vmem:[%s2 + $0x318] sm:$0xff]
      %v1364 = vld [vmem:[%s2 + $0x320] sm:$0xff]
      %v1365 = vld [vmem:[%s2 + $0x328] sm:$0xff]
      %v1366 = vld [vmem:[%s2 + $0x330] sm:$0xff]
      %v1367 = vld [vmem:[%s2 + $0x338] sm:$0xff]
      %v1368 = vld [vmem:[%s2 + $0x340] sm:$0xff]
      %v1369 = vld [vmem:[%s2 + $0x348] sm:$0xff]
      %v1370 = vld [vmem:[%s2 + $0x350] sm:$0xff]
      %v1371 = vld [vmem:[%s2 + $0x358] sm:$0xff]
      %v1372 = vld [vmem:[%s2 + $0x360] sm:$0xff]
      %v1373 = vld [vmem:[%s2 + $0x368] sm:$0xff]
      %v1374 = vld [vmem:[%s2 + $0x370] sm:$0xff]
      %v1375 = vld [vmem:[%s2 + $0x378] sm:$0xff]
      %v1376 = vld [vmem:[%s2 + $0x380] sm:$0xff]
      %v1377 = vld [vmem:[%s2 + $0x388] sm:$0xff]
      %v1378 = vld [vmem:[%s2 + $0x390] sm:$0xff]
      %v1379 = vld [vmem:[%s2 + $0x398] sm:$0xff]
      %v1380 = vld [vmem:[%s2 + $0x3a0] sm:$0xff]
      %v1381 = vld [vmem:[%s2 + $0x3a8] sm:$0xff]
      %v1382 = vld [vmem:[%s2 + $0x3b0] sm:$0xff]
      %v1383 = vld [vmem:[%s2 + $0x3b8] sm:$0xff]
      %v1384 = vld [vmem:[%s2 + $0x3c0] sm:$0xff]
      %v1385 = vld [vmem:[%s2 + $0x3c8] sm:$0xff]
      %v1386 = vld [vmem:[%s2 + $0x3d0] sm:$0xff]
      %v1387 = vld [vmem:[%s2 + $0x3d8] sm:$0xff]
      %v1388 = vld [vmem:[%s2 + $0x3e0] sm:$0xff]
      %v1389 = vld [vmem:[%s2 + $0x3e8] sm:$0xff]
      %v1390 = vld [vmem:[%s2 + $0x3f0] sm:$0xff]
      %v1391 = vld [vmem:[%s2 + $0x3f8] sm:$0xff]
      %v1392 = vld [vmem:[%s2 + $0x400] sm:$0xff]
      %v1393 = vld [vmem:[%s2 + $0x408] sm:$0xff]
      %v1394 = vld [vmem:[%s2 + $0x410] sm:$0xff]
      %v1395 = vld [vmem:[%s2 + $0x418] sm:$0xff]
      %v1396 = vld [vmem:[%s2 + $0x420] sm:$0xff]
      %v1397 = vld [vmem:[%s2 + $0x428] sm:$0xff]
      %v1398 = vld [vmem:[%s2 + $0x430] sm:$0xff]
      %v1399 = vld [vmem:[%s2 + $0x438] sm:$0xff]
      %v1400 = vld [vmem:[%s2 + $0x440] sm:$0xff]
      %v1401 = vld [vmem:[%s2 + $0x448] sm:$0xff]
      %v1402 = vld [vmem:[%s2 + $0x450] sm:$0xff]
      %v1403 = vld [vmem:[%s2 + $0x458] sm:$0xff]
      %v1404 = vld [vmem:[%s2 + $0x460] sm:$0xff]
      %v1405 = vld [vmem:[%s2 + $0x468] sm:$0xff]
      %v1406 = vld [vmem:[%s2 + $0x470] sm:$0xff]
      %v1407 = vld [vmem:[%s2 + $0x478] sm:$0xff]
      %1408 = vmatpush.msra.mxu0 %v1279
      %1409 = vmatpush.msra.mxu0 %v1278
      %1410 = vmatpush.msra.mxu0 %v1277
      %1411 = vmatpush.msra.mxu0 %v1276
      %1412 = vmatpush.msra.mxu0 %v1275
      %1413 = vmatpush.msra.mxu0 %v1274
      %1414 = vmatpush.msra.mxu0 %v1273
      %1415 = vmatpush.msra.mxu0 %v1272
      %1416 = vmatpush.msra.mxu0 %v1271
      %1417 = vmatpush.msra.mxu0 %v1270
      %1418 = vmatpush.msra.mxu0 %v1269
      %1419 = vmatpush.msra.mxu0 %v1268
      %1420 = vmatpush.msra.mxu0 %v1267
      %1421 = vmatpush.msra.mxu0 %v1266
      %1422 = vmatpush.msra.mxu0 %v1265
      %1423 = vmatpush.msra.mxu0 %v1264
      %1424 = vmatmul.f32.gmra.mxu0 %v976
      %v1425 = vpop.f32.mrf.mxu0
      %v1426 = vadd.f32 0.0, %v1425
      %1427 = vmatmul.f32.gmra.mxu0 %v985
      %v1428 = vpop.f32.mrf.mxu0
      %v1429 = vadd.f32 0.0, %v1428
      %1430 = vmatmul.f32.gmra.mxu0 %v994
      %v1431 = vpop.f32.mrf.mxu0
      %v1432 = vadd.f32 0.0, %v1431
      %1433 = vmatmul.f32.gmra.mxu0 %v1003
      %v1434 = vpop.f32.mrf.mxu0
      %v1435 = vadd.f32 0.0, %v1434
      %1436 = vmatmul.f32.gmra.mxu0 %v1012
      %v1437 = vpop.f32.mrf.mxu0
      %v1438 = vadd.f32 0.0, %v1437
      %1439 = vmatmul.f32.gmra.mxu0 %v1021
      %v1440 = vpop.f32.mrf.mxu0
      %v1441 = vadd.f32 0.0, %v1440
      %1442 = vmatmul.f32.gmra.mxu0 %v1030
      %v1443 = vpop.f32.mrf.mxu0
      %v1444 = vadd.f32 0.0, %v1443
      %1445 = vmatmul.f32.gmra.mxu0 %v1039
      %v1446 = vpop.f32.mrf.mxu0
      %v1447 = vadd.f32 0.0, %v1446
      %1448 = vmatmul.f32.gmra.mxu0 %v1048
      %v1449 = vpop.f32.mrf.mxu0
      %v1450 = vadd.f32 0.0, %v1449
      %1451 = vmatmul.f32.gmra.mxu0 %v1057
      %v1452 = vpop.f32.mrf.mxu0
      %v1453 = vadd.f32 0.0, %v1452
      %1454 = vmatmul.f32.gmra.mxu0 %v1066
      %v1455 = vpop.f32.mrf.mxu0
      %v1456 = vadd.f32 0.0, %v1455
      %1457 = vmatmul.f32.gmra.mxu0 %v1075
      %v1458 = vpop.f32.mrf.mxu0
      %v1459 = vadd.f32 0.0, %v1458
      %1460 = vmatmul.f32.gmra.mxu0 %v1084
      %v1461 = vpop.f32.mrf.mxu0
      %v1462 = vadd.f32 0.0, %v1461
      %1463 = vmatmul.f32.gmra.mxu0 %v1093
      %v1464 = vpop.f32.mrf.mxu0
      %v1465 = vadd.f32 0.0, %v1464
      %1466 = vmatmul.f32.gmra.mxu0 %v1102
      %v1467 = vpop.f32.mrf.mxu0
      %v1468 = vadd.f32 0.0, %v1467
      %1469 = vmatmul.f32.gmra.mxu0 %v1111
      %v1470 = vpop.f32.mrf.mxu0
      %v1471 = vadd.f32 0.0, %v1470
      %1472 = vmatmul.f32.gmra.mxu0 %v1120
      %v1473 = vpop.f32.mrf.mxu0
      %v1474 = vadd.f32 0.0, %v1473
      %1475 = vmatmul.f32.gmra.mxu0 %v1129
      %v1476 = vpop.f32.mrf.mxu0
      %v1477 = vadd.f32 0.0, %v1476
      %1478 = vmatmul.f32.gmra.mxu0 %v1138
      %v1479 = vpop.f32.mrf.mxu0
      %v1480 = vadd.f32 0.0, %v1479
      %1481 = vmatmul.f32.gmra.mxu0 %v1147
      %v1482 = vpop.f32.mrf.mxu0
      %v1483 = vadd.f32 0.0, %v1482
      %1484 = vmatmul.f32.gmra.mxu0 %v1156
      %v1485 = vpop.f32.mrf.mxu0
      %v1486 = vadd.f32 0.0, %v1485
      %1487 = vmatmul.f32.gmra.mxu0 %v1165
      %v1488 = vpop.f32.mrf.mxu0
      %v1489 = vadd.f32 0.0, %v1488
      %1490 = vmatmul.f32.gmra.mxu0 %v1174
      %v1491 = vpop.f32.mrf.mxu0
      %v1492 = vadd.f32 0.0, %v1491
      %1493 = vmatmul.f32.gmra.mxu0 %v1183
      %v1494 = vpop.f32.mrf.mxu0
      %v1495 = vadd.f32 0.0, %v1494
      %1496 = vmatmul.f32.gmra.mxu0 %v1192
      %v1497 = vpop.f32.mrf.mxu0
      %v1498 = vadd.f32 0.0, %v1497
      %1499 = vmatmul.f32.gmra.mxu0 %v1201
      %v1500 = vpop.f32.mrf.mxu0
      %v1501 = vadd.f32 0.0, %v1500
      %1502 = vmatmul.f32.gmra.mxu0 %v1210
      %v1503 = vpop.f32.mrf.mxu0
      %v1504 = vadd.f32 0.0, %v1503
      %1505 = vmatmul.f32.gmra.mxu0 %v1219
      %v1506 = vpop.f32.mrf.mxu0
      %v1507 = vadd.f32 0.0, %v1506
      %1508 = vmatmul.f32.gmra.mxu0 %v1228
      %v1509 = vpop.f32.mrf.mxu0
      %v1510 = vadd.f32 0.0, %v1509
      %1511 = vmatmul.f32.gmra.mxu0 %v1237
      %v1512 = vpop.f32.mrf.mxu0
      %v1513 = vadd.f32 0.0, %v1512
      %1514 = vmatmul.f32.gmra.mxu0 %v1246
      %v1515 = vpop.f32.mrf.mxu0
      %v1516 = vadd.f32 0.0, %v1515
      %1517 = vmatmul.f32.gmra.mxu0 %v1255
      %v1518 = vpop.f32.mrf.mxu0
      %v1519 = vadd.f32 0.0, %v1518
      %1520 = vdwg.mxu0
      %1521 = vmatpush.msra.mxu0 %v1295
      %1522 = vmatpush.msra.mxu0 %v1294
      %1523 = vmatpush.msra.mxu0 %v1293
      %1524 = vmatpush.msra.mxu0 %v1292
      %1525 = vmatpush.msra.mxu0 %v1291
      %1526 = vmatpush.msra.mxu0 %v1290
      %1527 = vmatpush.msra.mxu0 %v1289
      %1528 = vmatpush.msra.mxu0 %v1288
      %1529 = vmatpush.msra.mxu0 %v1287
      %1530 = vmatpush.msra.mxu0 %v1286
      %1531 = vmatpush.msra.mxu0 %v1285
      %1532 = vmatpush.msra.mxu0 %v1284
      %1533 = vmatpush.msra.mxu0 %v1283
      %1534 = vmatpush.msra.mxu0 %v1282
      %1535 = vmatpush.msra.mxu0 %v1281
      %1536 = vmatpush.msra.mxu0 %v1280
      %1537 = vmatmul.f32.gmra.mxu0 %v977
      %v1538 = vpop.f32.mrf.mxu0
      %v1539 = vadd.f32 %v1426, %v1538
      %1540 = vmatmul.f32.gmra.mxu0 %v986
      %v1541 = vpop.f32.mrf.mxu0
      %v1542 = vadd.f32 %v1429, %v1541
      %1543 = vmatmul.f32.gmra.mxu0 %v995
      %v1544 = vpop.f32.mrf.mxu0
      %v1545 = vadd.f32 %v1432, %v1544
      %1546 = vmatmul.f32.gmra.mxu0 %v1004
      %v1547 = vpop.f32.mrf.mxu0
      %v1548 = vadd.f32 %v1435, %v1547
      %1549 = vmatmul.f32.gmra.mxu0 %v1013
      %v1550 = vpop.f32.mrf.mxu0
      %v1551 = vadd.f32 %v1438, %v1550
      %1552 = vmatmul.f32.gmra.mxu0 %v1022
      %v1553 = vpop.f32.mrf.mxu0
      %v1554 = vadd.f32 %v1441, %v1553
      %1555 = vmatmul.f32.gmra.mxu0 %v1031
      %v1556 = vpop.f32.mrf.mxu0
      %v1557 = vadd.f32 %v1444, %v1556
      %1558 = vmatmul.f32.gmra.mxu0 %v1040
      %v1559 = vpop.f32.mrf.mxu0
      %v1560 = vadd.f32 %v1447, %v1559
      %1561 = vmatmul.f32.gmra.mxu0 %v1049
      %v1562 = vpop.f32.mrf.mxu0
      %v1563 = vadd.f32 %v1450, %v1562
      %1564 = vmatmul.f32.gmra.mxu0 %v1058
      %v1565 = vpop.f32.mrf.mxu0
      %v1566 = vadd.f32 %v1453, %v1565
      %1567 = vmatmul.f32.gmra.mxu0 %v1067
      %v1568 = vpop.f32.mrf.mxu0
      %v1569 = vadd.f32 %v1456, %v1568
      %1570 = vmatmul.f32.gmra.mxu0 %v1076
      %v1571 = vpop.f32.mrf.mxu0
      %v1572 = vadd.f32 %v1459, %v1571
      %1573 = vmatmul.f32.gmra.mxu0 %v1085
      %v1574 = vpop.f32.mrf.mxu0
      %v1575 = vadd.f32 %v1462, %v1574
      %1576 = vmatmul.f32.gmra.mxu0 %v1094
      %v1577 = vpop.f32.mrf.mxu0
      %v1578 = vadd.f32 %v1465, %v1577
      %1579 = vmatmul.f32.gmra.mxu0 %v1103
      %v1580 = vpop.f32.mrf.mxu0
      %v1581 = vadd.f32 %v1468, %v1580
      %1582 = vmatmul.f32.gmra.mxu0 %v1112
      %v1583 = vpop.f32.mrf.mxu0
      %v1584 = vadd.f32 %v1471, %v1583
      %1585 = vmatmul.f32.gmra.mxu0 %v1121
      %v1586 = vpop.f32.mrf.mxu0
      %v1587 = vadd.f32 %v1474, %v1586
      %1588 = vmatmul.f32.gmra.mxu0 %v1130
      %v1589 = vpop.f32.mrf.mxu0
      %v1590 = vadd.f32 %v1477, %v1589
      %1591 = vmatmul.f32.gmra.mxu0 %v1139
      %v1592 = vpop.f32.mrf.mxu0
      %v1593 = vadd.f32 %v1480, %v1592
      %1594 = vmatmul.f32.gmra.mxu0 %v1148
      %v1595 = vpop.f32.mrf.mxu0
      %v1596 = vadd.f32 %v1483, %v1595
      %1597 = vmatmul.f32.gmra.mxu0 %v1157
      %v1598 = vpop.f32.mrf.mxu0
      %v1599 = vadd.f32 %v1486, %v1598
      %1600 = vmatmul.f32.gmra.mxu0 %v1166
      %v1601 = vpop.f32.mrf.mxu0
      %v1602 = vadd.f32 %v1489, %v1601
      %1603 = vmatmul.f32.gmra.mxu0 %v1175
      %v1604 = vpop.f32.mrf.mxu0
      %v1605 = vadd.f32 %v1492, %v1604
      %1606 = vmatmul.f32.gmra.mxu0 %v1184
      %v1607 = vpop.f32.mrf.mxu0
      %v1608 = vadd.f32 %v1495, %v1607
      %1609 = vmatmul.f32.gmra.mxu0 %v1193
      %v1610 = vpop.f32.mrf.mxu0
      %v1611 = vadd.f32 %v1498, %v1610
      %1612 = vmatmul.f32.gmra.mxu0 %v1202
      %v1613 = vpop.f32.mrf.mxu0
      %v1614 = vadd.f32 %v1501, %v1613
      %1615 = vmatmul.f32.gmra.mxu0 %v1211
      %v1616 = vpop.f32.mrf.mxu0
      %v1617 = vadd.f32 %v1504, %v1616
      %1618 = vmatmul.f32.gmra.mxu0 %v1220
      %v1619 = vpop.f32.mrf.mxu0
      %v1620 = vadd.f32 %v1507, %v1619
      %1621 = vmatmul.f32.gmra.mxu0 %v1229
      %v1622 = vpop.f32.mrf.mxu0
      %v1623 = vadd.f32 %v1510, %v1622
      %1624 = vmatmul.f32.gmra.mxu0 %v1238
      %v1625 = vpop.f32.mrf.mxu0
      %v1626 = vadd.f32 %v1513, %v1625
      %1627 = vmatmul.f32.gmra.mxu0 %v1247
      %v1628 = vpop.f32.mrf.mxu0
      %v1629 = vadd.f32 %v1516, %v1628
      %1630 = vmatmul.f32.gmra.mxu0 %v1256
      %v1631 = vpop.f32.mrf.mxu0
      %v1632 = vadd.f32 %v1519, %v1631
      %1633 = vdwg.mxu0
      %1634 = vmatpush.msra.mxu0 %v1311
      %1635 = vmatpush.msra.mxu0 %v1310
      %1636 = vmatpush.msra.mxu0 %v1309
      %1637 = vmatpush.msra.mxu0 %v1308
      %1638 = vmatpush.msra.mxu0 %v1307
      %1639 = vmatpush.msra.mxu0 %v1306
      %1640 = vmatpush.msra.mxu0 %v1305
      %1641 = vmatpush.msra.mxu0 %v1304
      %1642 = vmatpush.msra.mxu0 %v1303
      %1643 = vmatpush.msra.mxu0 %v1302
      %1644 = vmatpush.msra.mxu0 %v1301
      %1645 = vmatpush.msra.mxu0 %v1300
      %1646 = vmatpush.msra.mxu0 %v1299
      %1647 = vmatpush.msra.mxu0 %v1298
      %1648 = vmatpush.msra.mxu0 %v1297
      %1649 = vmatpush.msra.mxu0 %v1296
      %1650 = vmatmul.f32.gmra.mxu0 %v978
      %v1651 = vpop.f32.mrf.mxu0
      %v1652 = vadd.f32 %v1539, %v1651
      %1653 = vmatmul.f32.gmra.mxu0 %v987
      %v1654 = vpop.f32.mrf.mxu0
      %v1655 = vadd.f32 %v1542, %v1654
      %1656 = vmatmul.f32.gmra.mxu0 %v996
      %v1657 = vpop.f32.mrf.mxu0
      %v1658 = vadd.f32 %v1545, %v1657
      %1659 = vmatmul.f32.gmra.mxu0 %v1005
      %v1660 = vpop.f32.mrf.mxu0
      %v1661 = vadd.f32 %v1548, %v1660
      %1662 = vmatmul.f32.gmra.mxu0 %v1014
      %v1663 = vpop.f32.mrf.mxu0
      %v1664 = vadd.f32 %v1551, %v1663
      %1665 = vmatmul.f32.gmra.mxu0 %v1023
      %v1666 = vpop.f32.mrf.mxu0
      %v1667 = vadd.f32 %v1554, %v1666
      %1668 = vmatmul.f32.gmra.mxu0 %v1032
      %v1669 = vpop.f32.mrf.mxu0
      %v1670 = vadd.f32 %v1557, %v1669
      %1671 = vmatmul.f32.gmra.mxu0 %v1041
      %v1672 = vpop.f32.mrf.mxu0
      %v1673 = vadd.f32 %v1560, %v1672
      %1674 = vmatmul.f32.gmra.mxu0 %v1050
      %v1675 = vpop.f32.mrf.mxu0
      %v1676 = vadd.f32 %v1563, %v1675
      %1677 = vmatmul.f32.gmra.mxu0 %v1059
      %v1678 = vpop.f32.mrf.mxu0
      %v1679 = vadd.f32 %v1566, %v1678
      %1680 = vmatmul.f32.gmra.mxu0 %v1068
      %v1681 = vpop.f32.mrf.mxu0
      %v1682 = vadd.f32 %v1569, %v1681
      %1683 = vmatmul.f32.gmra.mxu0 %v1077
      %v1684 = vpop.f32.mrf.mxu0
      %v1685 = vadd.f32 %v1572, %v1684
      %1686 = vmatmul.f32.gmra.mxu0 %v1086
      %v1687 = vpop.f32.mrf.mxu0
      %v1688 = vadd.f32 %v1575, %v1687
      %1689 = vmatmul.f32.gmra.mxu0 %v1095
      %v1690 = vpop.f32.mrf.mxu0
      %v1691 = vadd.f32 %v1578, %v1690
      %1692 = vmatmul.f32.gmra.mxu0 %v1104
      %v1693 = vpop.f32.mrf.mxu0
      %v1694 = vadd.f32 %v1581, %v1693
      %1695 = vmatmul.f32.gmra.mxu0 %v1113
      %v1696 = vpop.f32.mrf.mxu0
      %v1697 = vadd.f32 %v1584, %v1696
      %1698 = vmatmul.f32.gmra.mxu0 %v1122
      %v1699 = vpop.f32.mrf.mxu0
      %v1700 = vadd.f32 %v1587, %v1699
      %1701 = vmatmul.f32.gmra.mxu0 %v1131
      %v1702 = vpop.f32.mrf.mxu0
      %v1703 = vadd.f32 %v1590, %v1702
      %1704 = vmatmul.f32.gmra.mxu0 %v1140
      %v1705 = vpop.f32.mrf.mxu0
      %v1706 = vadd.f32 %v1593, %v1705
      %1707 = vmatmul.f32.gmra.mxu0 %v1149
      %v1708 = vpop.f32.mrf.mxu0
      %v1709 = vadd.f32 %v1596, %v1708
      %1710 = vmatmul.f32.gmra.mxu0 %v1158
      %v1711 = vpop.f32.mrf.mxu0
      %v1712 = vadd.f32 %v1599, %v1711
      %1713 = vmatmul.f32.gmra.mxu0 %v1167
      %v1714 = vpop.f32.mrf.mxu0
      %v1715 = vadd.f32 %v1602, %v1714
      %1716 = vmatmul.f32.gmra.mxu0 %v1176
      %v1717 = vpop.f32.mrf.mxu0
      %v1718 = vadd.f32 %v1605, %v1717
      %1719 = vmatmul.f32.gmra.mxu0 %v1185
      %v1720 = vpop.f32.mrf.mxu0
      %v1721 = vadd.f32 %v1608, %v1720
      %1722 = vmatmul.f32.gmra.mxu0 %v1194
      %v1723 = vpop.f32.mrf.mxu0
      %v1724 = vadd.f32 %v1611, %v1723
      %1725 = vmatmul.f32.gmra.mxu0 %v1203
      %v1726 = vpop.f32.mrf.mxu0
      %v1727 = vadd.f32 %v1614, %v1726
      %1728 = vmatmul.f32.gmra.mxu0 %v1212
      %v1729 = vpop.f32.mrf.mxu0
      %v1730 = vadd.f32 %v1617, %v1729
      %1731 = vmatmul.f32.gmra.mxu0 %v1221
      %v1732 = vpop.f32.mrf.mxu0
      %v1733 = vadd.f32 %v1620, %v1732
      %1734 = vmatmul.f32.gmra.mxu0 %v1230
      %v1735 = vpop.f32.mrf.mxu0
      %v1736 = vadd.f32 %v1623, %v1735
      %1737 = vmatmul.f32.gmra.mxu0 %v1239
      %v1738 = vpop.f32.mrf.mxu0
      %v1739 = vadd.f32 %v1626, %v1738
      %1740 = vmatmul.f32.gmra.mxu0 %v1248
      %v1741 = vpop.f32.mrf.mxu0
      %v1742 = vadd.f32 %v1629, %v1741
      %1743 = vmatmul.f32.gmra.mxu0 %v1257
      %v1744 = vpop.f32.mrf.mxu0
      %v1745 = vadd.f32 %v1632, %v1744
      %1746 = vdwg.mxu0
      %1747 = vmatpush.msra.mxu0 %v1327
      %1748 = vmatpush.msra.mxu0 %v1326
      %1749 = vmatpush.msra.mxu0 %v1325
      %1750 = vmatpush.msra.mxu0 %v1324
      %1751 = vmatpush.msra.mxu0 %v1323
      %1752 = vmatpush.msra.mxu0 %v1322
      %1753 = vmatpush.msra.mxu0 %v1321
      %1754 = vmatpush.msra.mxu0 %v1320
      %1755 = vmatpush.msra.mxu0 %v1319
      %1756 = vmatpush.msra.mxu0 %v1318
      %1757 = vmatpush.msra.mxu0 %v1317
      %1758 = vmatpush.msra.mxu0 %v1316
      %1759 = vmatpush.msra.mxu0 %v1315
      %1760 = vmatpush.msra.mxu0 %v1314
      %1761 = vmatpush.msra.mxu0 %v1313
      %1762 = vmatpush.msra.mxu0 %v1312
      %1763 = vmatmul.f32.gmra.mxu0 %v979
      %v1764 = vpop.f32.mrf.mxu0
      %v1765 = vadd.f32 %v1652, %v1764
      %1766 = vmatmul.f32.gmra.mxu0 %v988
      %v1767 = vpop.f32.mrf.mxu0
      %v1768 = vadd.f32 %v1655, %v1767
      %1769 = vmatmul.f32.gmra.mxu0 %v997
      %v1770 = vpop.f32.mrf.mxu0
      %v1771 = vadd.f32 %v1658, %v1770
      %1772 = vmatmul.f32.gmra.mxu0 %v1006
      %v1773 = vpop.f32.mrf.mxu0
      %v1774 = vadd.f32 %v1661, %v1773
      %1775 = vmatmul.f32.gmra.mxu0 %v1015
      %v1776 = vpop.f32.mrf.mxu0
      %v1777 = vadd.f32 %v1664, %v1776
      %1778 = vmatmul.f32.gmra.mxu0 %v1024
      %v1779 = vpop.f32.mrf.mxu0
      %v1780 = vadd.f32 %v1667, %v1779
      %1781 = vmatmul.f32.gmra.mxu0 %v1033
      %v1782 = vpop.f32.mrf.mxu0
      %v1783 = vadd.f32 %v1670, %v1782
      %1784 = vmatmul.f32.gmra.mxu0 %v1042
      %v1785 = vpop.f32.mrf.mxu0
      %v1786 = vadd.f32 %v1673, %v1785
      %1787 = vmatmul.f32.gmra.mxu0 %v1051
      %v1788 = vpop.f32.mrf.mxu0
      %v1789 = vadd.f32 %v1676, %v1788
      %1790 = vmatmul.f32.gmra.mxu0 %v1060
      %v1791 = vpop.f32.mrf.mxu0
      %v1792 = vadd.f32 %v1679, %v1791
      %1793 = vmatmul.f32.gmra.mxu0 %v1069
      %v1794 = vpop.f32.mrf.mxu0
      %v1795 = vadd.f32 %v1682, %v1794
      %1796 = vmatmul.f32.gmra.mxu0 %v1078
      %v1797 = vpop.f32.mrf.mxu0
      %v1798 = vadd.f32 %v1685, %v1797
      %1799 = vmatmul.f32.gmra.mxu0 %v1087
      %v1800 = vpop.f32.mrf.mxu0
      %v1801 = vadd.f32 %v1688, %v1800
      %1802 = vmatmul.f32.gmra.mxu0 %v1096
      %v1803 = vpop.f32.mrf.mxu0
      %v1804 = vadd.f32 %v1691, %v1803
      %1805 = vmatmul.f32.gmra.mxu0 %v1105
      %v1806 = vpop.f32.mrf.mxu0
      %v1807 = vadd.f32 %v1694, %v1806
      %1808 = vmatmul.f32.gmra.mxu0 %v1114
      %v1809 = vpop.f32.mrf.mxu0
      %v1810 = vadd.f32 %v1697, %v1809
      %1811 = vmatmul.f32.gmra.mxu0 %v1123
      %v1812 = vpop.f32.mrf.mxu0
      %v1813 = vadd.f32 %v1700, %v1812
      %1814 = vmatmul.f32.gmra.mxu0 %v1132
      %v1815 = vpop.f32.mrf.mxu0
      %v1816 = vadd.f32 %v1703, %v1815
      %1817 = vmatmul.f32.gmra.mxu0 %v1141
      %v1818 = vpop.f32.mrf.mxu0
      %v1819 = vadd.f32 %v1706, %v1818
      %1820 = vmatmul.f32.gmra.mxu0 %v1150
      %v1821 = vpop.f32.mrf.mxu0
      %v1822 = vadd.f32 %v1709, %v1821
      %1823 = vmatmul.f32.gmra.mxu0 %v1159
      %v1824 = vpop.f32.mrf.mxu0
      %v1825 = vadd.f32 %v1712, %v1824
      %1826 = vmatmul.f32.gmra.mxu0 %v1168
      %v1827 = vpop.f32.mrf.mxu0
      %v1828 = vadd.f32 %v1715, %v1827
      %1829 = vmatmul.f32.gmra.mxu0 %v1177
      %v1830 = vpop.f32.mrf.mxu0
      %v1831 = vadd.f32 %v1718, %v1830
      %1832 = vmatmul.f32.gmra.mxu0 %v1186
      %v1833 = vpop.f32.mrf.mxu0
      %v1834 = vadd.f32 %v1721, %v1833
      %1835 = vmatmul.f32.gmra.mxu0 %v1195
      %v1836 = vpop.f32.mrf.mxu0
      %v1837 = vadd.f32 %v1724, %v1836
      %1838 = vmatmul.f32.gmra.mxu0 %v1204
      %v1839 = vpop.f32.mrf.mxu0
      %v1840 = vadd.f32 %v1727, %v1839
      %1841 = vmatmul.f32.gmra.mxu0 %v1213
      %v1842 = vpop.f32.mrf.mxu0
      %v1843 = vadd.f32 %v1730, %v1842
      %1844 = vmatmul.f32.gmra.mxu0 %v1222
      %v1845 = vpop.f32.mrf.mxu0
      %v1846 = vadd.f32 %v1733, %v1845
      %1847 = vmatmul.f32.gmra.mxu0 %v1231
      %v1848 = vpop.f32.mrf.mxu0
      %v1849 = vadd.f32 %v1736, %v1848
      %1850 = vmatmul.f32.gmra.mxu0 %v1240
      %v1851 = vpop.f32.mrf.mxu0
      %v1852 = vadd.f32 %v1739, %v1851
      %1853 = vmatmul.f32.gmra.mxu0 %v1249
      %v1854 = vpop.f32.mrf.mxu0
      %v1855 = vadd.f32 %v1742, %v1854
      %1856 = vmatmul.f32.gmra.mxu0 %v1258
      %v1857 = vpop.f32.mrf.mxu0
      %v1858 = vadd.f32 %v1745, %v1857
      %1859 = vdwg.mxu0
      %1860 = vmatpush.msra.mxu0 %v1343
      %1861 = vmatpush.msra.mxu0 %v1342
      %1862 = vmatpush.msra.mxu0 %v1341
      %1863 = vmatpush.msra.mxu0 %v1340
      %1864 = vmatpush.msra.mxu0 %v1339
      %1865 = vmatpush.msra.mxu0 %v1338
      %1866 = vmatpush.msra.mxu0 %v1337
      %1867 = vmatpush.msra.mxu0 %v1336
      %1868 = vmatpush.msra.mxu0 %v1335
      %1869 = vmatpush.msra.mxu0 %v1334
      %1870 = vmatpush.msra.mxu0 %v1333
      %1871 = vmatpush.msra.mxu0 %v1332
      %1872 = vmatpush.msra.mxu0 %v1331
      %1873 = vmatpush.msra.mxu0 %v1330
      %1874 = vmatpush.msra.mxu0 %v1329
      %1875 = vmatpush.msra.mxu0 %v1328
      %1876 = vmatmul.f32.gmra.mxu0 %v980
      %v1877 = vpop.f32.mrf.mxu0
      %v1878 = vadd.f32 %v1765, %v1877
      %1879 = vmatmul.f32.gmra.mxu0 %v989
      %v1880 = vpop.f32.mrf.mxu0
      %v1881 = vadd.f32 %v1768, %v1880
      %1882 = vmatmul.f32.gmra.mxu0 %v998
      %v1883 = vpop.f32.mrf.mxu0
      %v1884 = vadd.f32 %v1771, %v1883
      %1885 = vmatmul.f32.gmra.mxu0 %v1007
      %v1886 = vpop.f32.mrf.mxu0
      %v1887 = vadd.f32 %v1774, %v1886
      %1888 = vmatmul.f32.gmra.mxu0 %v1016
      %v1889 = vpop.f32.mrf.mxu0
      %v1890 = vadd.f32 %v1777, %v1889
      %1891 = vmatmul.f32.gmra.mxu0 %v1025
      %v1892 = vpop.f32.mrf.mxu0
      %v1893 = vadd.f32 %v1780, %v1892
      %1894 = vmatmul.f32.gmra.mxu0 %v1034
      %v1895 = vpop.f32.mrf.mxu0
      %v1896 = vadd.f32 %v1783, %v1895
      %1897 = vmatmul.f32.gmra.mxu0 %v1043
      %v1898 = vpop.f32.mrf.mxu0
      %v1899 = vadd.f32 %v1786, %v1898
      %1900 = vmatmul.f32.gmra.mxu0 %v1052
      %v1901 = vpop.f32.mrf.mxu0
      %v1902 = vadd.f32 %v1789, %v1901
      %1903 = vmatmul.f32.gmra.mxu0 %v1061
      %v1904 = vpop.f32.mrf.mxu0
      %v1905 = vadd.f32 %v1792, %v1904
      %1906 = vmatmul.f32.gmra.mxu0 %v1070
      %v1907 = vpop.f32.mrf.mxu0
      %v1908 = vadd.f32 %v1795, %v1907
      %1909 = vmatmul.f32.gmra.mxu0 %v1079
      %v1910 = vpop.f32.mrf.mxu0
      %v1911 = vadd.f32 %v1798, %v1910
      %1912 = vmatmul.f32.gmra.mxu0 %v1088
      %v1913 = vpop.f32.mrf.mxu0
      %v1914 = vadd.f32 %v1801, %v1913
      %1915 = vmatmul.f32.gmra.mxu0 %v1097
      %v1916 = vpop.f32.mrf.mxu0
      %v1917 = vadd.f32 %v1804, %v1916
      %1918 = vmatmul.f32.gmra.mxu0 %v1106
      %v1919 = vpop.f32.mrf.mxu0
      %v1920 = vadd.f32 %v1807, %v1919
      %1921 = vmatmul.f32.gmra.mxu0 %v1115
      %v1922 = vpop.f32.mrf.mxu0
      %v1923 = vadd.f32 %v1810, %v1922
      %1924 = vmatmul.f32.gmra.mxu0 %v1124
      %v1925 = vpop.f32.mrf.mxu0
      %v1926 = vadd.f32 %v1813, %v1925
      %1927 = vmatmul.f32.gmra.mxu0 %v1133
      %v1928 = vpop.f32.mrf.mxu0
      %v1929 = vadd.f32 %v1816, %v1928
      %1930 = vmatmul.f32.gmra.mxu0 %v1142
      %v1931 = vpop.f32.mrf.mxu0
      %v1932 = vadd.f32 %v1819, %v1931
      %1933 = vmatmul.f32.gmra.mxu0 %v1151
      %v1934 = vpop.f32.mrf.mxu0
      %v1935 = vadd.f32 %v1822, %v1934
      %1936 = vmatmul.f32.gmra.mxu0 %v1160
      %v1937 = vpop.f32.mrf.mxu0
      %v1938 = vadd.f32 %v1825, %v1937
      %1939 = vmatmul.f32.gmra.mxu0 %v1169
      %v1940 = vpop.f32.mrf.mxu0
      %v1941 = vadd.f32 %v1828, %v1940
      %1942 = vmatmul.f32.gmra.mxu0 %v1178
      %v1943 = vpop.f32.mrf.mxu0
      %v1944 = vadd.f32 %v1831, %v1943
      %1945 = vmatmul.f32.gmra.mxu0 %v1187
      %v1946 = vpop.f32.mrf.mxu0
      %v1947 = vadd.f32 %v1834, %v1946
      %1948 = vmatmul.f32.gmra.mxu0 %v1196
      %v1949 = vpop.f32.mrf.mxu0
      %v1950 = vadd.f32 %v1837, %v1949
      %1951 = vmatmul.f32.gmra.mxu0 %v1205
      %v1952 = vpop.f32.mrf.mxu0
      %v1953 = vadd.f32 %v1840, %v1952
      %1954 = vmatmul.f32.gmra.mxu0 %v1214
      %v1955 = vpop.f32.mrf.mxu0
      %v1956 = vadd.f32 %v1843, %v1955
      %1957 = vmatmul.f32.gmra.mxu0 %v1223
      %v1958 = vpop.f32.mrf.mxu0
      %v1959 = vadd.f32 %v1846, %v1958
      %1960 = vmatmul.f32.gmra.mxu0 %v1232
      %v1961 = vpop.f32.mrf.mxu0
      %v1962 = vadd.f32 %v1849, %v1961
      %1963 = vmatmul.f32.gmra.mxu0 %v1241
      %v1964 = vpop.f32.mrf.mxu0
      %v1965 = vadd.f32 %v1852, %v1964
      %1966 = vmatmul.f32.gmra.mxu0 %v1250
      %v1967 = vpop.f32.mrf.mxu0
      %v1968 = vadd.f32 %v1855, %v1967
      %1969 = vmatmul.f32.gmra.mxu0 %v1259
      %v1970 = vpop.f32.mrf.mxu0
      %v1971 = vadd.f32 %v1858, %v1970
      %1972 = vdwg.mxu0
      %1973 = vmatpush.msra.mxu0 %v1359
      %1974 = vmatpush.msra.mxu0 %v1358
      %1975 = vmatpush.msra.mxu0 %v1357
      %1976 = vmatpush.msra.mxu0 %v1356
      %1977 = vmatpush.msra.mxu0 %v1355
      %1978 = vmatpush.msra.mxu0 %v1354
      %1979 = vmatpush.msra.mxu0 %v1353
      %1980 = vmatpush.msra.mxu0 %v1352
      %1981 = vmatpush.msra.mxu0 %v1351
      %1982 = vmatpush.msra.mxu0 %v1350
      %1983 = vmatpush.msra.mxu0 %v1349
      %1984 = vmatpush.msra.mxu0 %v1348
      %1985 = vmatpush.msra.mxu0 %v1347
      %1986 = vmatpush.msra.mxu0 %v1346
      %1987 = vmatpush.msra.mxu0 %v1345
      %1988 = vmatpush.msra.mxu0 %v1344
      %1989 = vmatmul.f32.gmra.mxu0 %v981
      %v1990 = vpop.f32.mrf.mxu0
      %v1991 = vadd.f32 %v1878, %v1990
      %1992 = vmatmul.f32.gmra.mxu0 %v990
      %v1993 = vpop.f32.mrf.mxu0
      %v1994 = vadd.f32 %v1881, %v1993
      %1995 = vmatmul.f32.gmra.mxu0 %v999
      %v1996 = vpop.f32.mrf.mxu0
      %v1997 = vadd.f32 %v1884, %v1996
      %1998 = vmatmul.f32.gmra.mxu0 %v1008
      %v1999 = vpop.f32.mrf.mxu0
      %v2000 = vadd.f32 %v1887, %v1999
      %2001 = vmatmul.f32.gmra.mxu0 %v1017
      %v2002 = vpop.f32.mrf.mxu0
      %v2003 = vadd.f32 %v1890, %v2002
      %2004 = vmatmul.f32.gmra.mxu0 %v1026
      %v2005 = vpop.f32.mrf.mxu0
      %v2006 = vadd.f32 %v1893, %v2005
      %2007 = vmatmul.f32.gmra.mxu0 %v1035
      %v2008 = vpop.f32.mrf.mxu0
      %v2009 = vadd.f32 %v1896, %v2008
      %2010 = vmatmul.f32.gmra.mxu0 %v1044
      %v2011 = vpop.f32.mrf.mxu0
      %v2012 = vadd.f32 %v1899, %v2011
      %2013 = vmatmul.f32.gmra.mxu0 %v1053
      %v2014 = vpop.f32.mrf.mxu0
      %v2015 = vadd.f32 %v1902, %v2014
      %2016 = vmatmul.f32.gmra.mxu0 %v1062
      %v2017 = vpop.f32.mrf.mxu0
      %v2018 = vadd.f32 %v1905, %v2017
      %2019 = vmatmul.f32.gmra.mxu0 %v1071
      %v2020 = vpop.f32.mrf.mxu0
      %v2021 = vadd.f32 %v1908, %v2020
      %2022 = vmatmul.f32.gmra.mxu0 %v1080
      %v2023 = vpop.f32.mrf.mxu0
      %v2024 = vadd.f32 %v1911, %v2023
      %2025 = vmatmul.f32.gmra.mxu0 %v1089
      %v2026 = vpop.f32.mrf.mxu0
      %v2027 = vadd.f32 %v1914, %v2026
      %2028 = vmatmul.f32.gmra.mxu0 %v1098
      %v2029 = vpop.f32.mrf.mxu0
      %v2030 = vadd.f32 %v1917, %v2029
      %2031 = vmatmul.f32.gmra.mxu0 %v1107
      %v2032 = vpop.f32.mrf.mxu0
      %v2033 = vadd.f32 %v1920, %v2032
      %2034 = vmatmul.f32.gmra.mxu0 %v1116
      %v2035 = vpop.f32.mrf.mxu0
      %v2036 = vadd.f32 %v1923, %v2035
      %2037 = vmatmul.f32.gmra.mxu0 %v1125
      %v2038 = vpop.f32.mrf.mxu0
      %v2039 = vadd.f32 %v1926, %v2038
      %2040 = vmatmul.f32.gmra.mxu0 %v1134
      %v2041 = vpop.f32.mrf.mxu0
      %v2042 = vadd.f32 %v1929, %v2041
      %2043 = vmatmul.f32.gmra.mxu0 %v1143
      %v2044 = vpop.f32.mrf.mxu0
      %v2045 = vadd.f32 %v1932, %v2044
      %2046 = vmatmul.f32.gmra.mxu0 %v1152
      %v2047 = vpop.f32.mrf.mxu0
      %v2048 = vadd.f32 %v1935, %v2047
      %2049 = vmatmul.f32.gmra.mxu0 %v1161
      %v2050 = vpop.f32.mrf.mxu0
      %v2051 = vadd.f32 %v1938, %v2050
      %2052 = vmatmul.f32.gmra.mxu0 %v1170
      %v2053 = vpop.f32.mrf.mxu0
      %v2054 = vadd.f32 %v1941, %v2053
      %2055 = vmatmul.f32.gmra.mxu0 %v1179
      %v2056 = vpop.f32.mrf.mxu0
      %v2057 = vadd.f32 %v1944, %v2056
      %2058 = vmatmul.f32.gmra.mxu0 %v1188
      %v2059 = vpop.f32.mrf.mxu0
      %v2060 = vadd.f32 %v1947, %v2059
      %2061 = vmatmul.f32.gmra.mxu0 %v1197
      %v2062 = vpop.f32.mrf.mxu0
      %v2063 = vadd.f32 %v1950, %v2062
      %2064 = vmatmul.f32.gmra.mxu0 %v1206
      %v2065 = vpop.f32.mrf.mxu0
      %v2066 = vadd.f32 %v1953, %v2065
      %2067 = vmatmul.f32.gmra.mxu0 %v1215
      %v2068 = vpop.f32.mrf.mxu0
      %v2069 = vadd.f32 %v1956, %v2068
      %2070 = vmatmul.f32.gmra.mxu0 %v1224
      %v2071 = vpop.f32.mrf.mxu0
      %v2072 = vadd.f32 %v1959, %v2071
      %2073 = vmatmul.f32.gmra.mxu0 %v1233
      %v2074 = vpop.f32.mrf.mxu0
      %v2075 = vadd.f32 %v1962, %v2074
      %2076 = vmatmul.f32.gmra.mxu0 %v1242
      %v2077 = vpop.f32.mrf.mxu0
      %v2078 = vadd.f32 %v1965, %v2077
      %2079 = vmatmul.f32.gmra.mxu0 %v1251
      %v2080 = vpop.f32.mrf.mxu0
      %v2081 = vadd.f32 %v1968, %v2080
      %2082 = vmatmul.f32.gmra.mxu0 %v1260
      %v2083 = vpop.f32.mrf.mxu0
      %v2084 = vadd.f32 %v1971, %v2083
      %2085 = vdwg.mxu0
      %2086 = vmatpush.msra.mxu0 %v1375
      %2087 = vmatpush.msra.mxu0 %v1374
      %2088 = vmatpush.msra.mxu0 %v1373
      %2089 = vmatpush.msra.mxu0 %v1372
      %2090 = vmatpush.msra.mxu0 %v1371
      %2091 = vmatpush.msra.mxu0 %v1370
      %2092 = vmatpush.msra.mxu0 %v1369
      %2093 = vmatpush.msra.mxu0 %v1368
      %2094 = vmatpush.msra.mxu0 %v1367
      %2095 = vmatpush.msra.mxu0 %v1366
      %2096 = vmatpush.msra.mxu0 %v1365
      %2097 = vmatpush.msra.mxu0 %v1364
      %2098 = vmatpush.msra.mxu0 %v1363
      %2099 = vmatpush.msra.mxu0 %v1362
      %2100 = vmatpush.msra.mxu0 %v1361
      %2101 = vmatpush.msra.mxu0 %v1360
      %2102 = vmatmul.f32.gmra.mxu0 %v982
      %v2103 = vpop.f32.mrf.mxu0
      %v2104 = vadd.f32 %v1991, %v2103
      %2105 = vmatmul.f32.gmra.mxu0 %v991
      %v2106 = vpop.f32.mrf.mxu0
      %v2107 = vadd.f32 %v1994, %v2106
      %2108 = vmatmul.f32.gmra.mxu0 %v1000
      %v2109 = vpop.f32.mrf.mxu0
      %v2110 = vadd.f32 %v1997, %v2109
      %2111 = vmatmul.f32.gmra.mxu0 %v1009
      %v2112 = vpop.f32.mrf.mxu0
      %v2113 = vadd.f32 %v2000, %v2112
      %2114 = vmatmul.f32.gmra.mxu0 %v1018
      %v2115 = vpop.f32.mrf.mxu0
      %v2116 = vadd.f32 %v2003, %v2115
      %2117 = vmatmul.f32.gmra.mxu0 %v1027
      %v2118 = vpop.f32.mrf.mxu0
      %v2119 = vadd.f32 %v2006, %v2118
      %2120 = vmatmul.f32.gmra.mxu0 %v1036
      %v2121 = vpop.f32.mrf.mxu0
      %v2122 = vadd.f32 %v2009, %v2121
      %2123 = vmatmul.f32.gmra.mxu0 %v1045
      %v2124 = vpop.f32.mrf.mxu0
      %v2125 = vadd.f32 %v2012, %v2124
      %2126 = vmatmul.f32.gmra.mxu0 %v1054
      %v2127 = vpop.f32.mrf.mxu0
      %v2128 = vadd.f32 %v2015, %v2127
      %2129 = vmatmul.f32.gmra.mxu0 %v1063
      %v2130 = vpop.f32.mrf.mxu0
      %v2131 = vadd.f32 %v2018, %v2130
      %2132 = vmatmul.f32.gmra.mxu0 %v1072
      %v2133 = vpop.f32.mrf.mxu0
      %v2134 = vadd.f32 %v2021, %v2133
      %2135 = vmatmul.f32.gmra.mxu0 %v1081
      %v2136 = vpop.f32.mrf.mxu0
      %v2137 = vadd.f32 %v2024, %v2136
      %2138 = vmatmul.f32.gmra.mxu0 %v1090
      %v2139 = vpop.f32.mrf.mxu0
      %v2140 = vadd.f32 %v2027, %v2139
      %2141 = vmatmul.f32.gmra.mxu0 %v1099
      %v2142 = vpop.f32.mrf.mxu0
      %v2143 = vadd.f32 %v2030, %v2142
      %2144 = vmatmul.f32.gmra.mxu0 %v1108
      %v2145 = vpop.f32.mrf.mxu0
      %v2146 = vadd.f32 %v2033, %v2145
      %2147 = vmatmul.f32.gmra.mxu0 %v1117
      %v2148 = vpop.f32.mrf.mxu0
      %v2149 = vadd.f32 %v2036, %v2148
      %2150 = vmatmul.f32.gmra.mxu0 %v1126
      %v2151 = vpop.f32.mrf.mxu0
      %v2152 = vadd.f32 %v2039, %v2151
      %2153 = vmatmul.f32.gmra.mxu0 %v1135
      %v2154 = vpop.f32.mrf.mxu0
      %v2155 = vadd.f32 %v2042, %v2154
      %2156 = vmatmul.f32.gmra.mxu0 %v1144
      %v2157 = vpop.f32.mrf.mxu0
      %v2158 = vadd.f32 %v2045, %v2157
      %2159 = vmatmul.f32.gmra.mxu0 %v1153
      %v2160 = vpop.f32.mrf.mxu0
      %v2161 = vadd.f32 %v2048, %v2160
      %2162 = vmatmul.f32.gmra.mxu0 %v1162
      %v2163 = vpop.f32.mrf.mxu0
      %v2164 = vadd.f32 %v2051, %v2163
      %2165 = vmatmul.f32.gmra.mxu0 %v1171
      %v2166 = vpop.f32.mrf.mxu0
      %v2167 = vadd.f32 %v2054, %v2166
      %2168 = vmatmul.f32.gmra.mxu0 %v1180
      %v2169 = vpop.f32.mrf.mxu0
      %v2170 = vadd.f32 %v2057, %v2169
      %2171 = vmatmul.f32.gmra.mxu0 %v1189
      %v2172 = vpop.f32.mrf.mxu0
      %v2173 = vadd.f32 %v2060, %v2172
      %2174 = vmatmul.f32.gmra.mxu0 %v1198
      %v2175 = vpop.f32.mrf.mxu0
      %v2176 = vadd.f32 %v2063, %v2175
      %2177 = vmatmul.f32.gmra.mxu0 %v1207
      %v2178 = vpop.f32.mrf.mxu0
      %v2179 = vadd.f32 %v2066, %v2178
      %2180 = vmatmul.f32.gmra.mxu0 %v1216
      %v2181 = vpop.f32.mrf.mxu0
      %v2182 = vadd.f32 %v2069, %v2181
      %2183 = vmatmul.f32.gmra.mxu0 %v1225
      %v2184 = vpop.f32.mrf.mxu0
      %v2185 = vadd.f32 %v2072, %v2184
      %2186 = vmatmul.f32.gmra.mxu0 %v1234
      %v2187 = vpop.f32.mrf.mxu0
      %v2188 = vadd.f32 %v2075, %v2187
      %2189 = vmatmul.f32.gmra.mxu0 %v1243
      %v2190 = vpop.f32.mrf.mxu0
      %v2191 = vadd.f32 %v2078, %v2190
      %2192 = vmatmul.f32.gmra.mxu0 %v1252
      %v2193 = vpop.f32.mrf.mxu0
      %v2194 = vadd.f32 %v2081, %v2193
      %2195 = vmatmul.f32.gmra.mxu0 %v1261
      %v2196 = vpop.f32.mrf.mxu0
      %v2197 = vadd.f32 %v2084, %v2196
      %2198 = vdwg.mxu0
      %2199 = vmatpush.msra.mxu0 %v1391
      %2200 = vmatpush.msra.mxu0 %v1390
      %2201 = vmatpush.msra.mxu0 %v1389
      %2202 = vmatpush.msra.mxu0 %v1388
      %2203 = vmatpush.msra.mxu0 %v1387
      %2204 = vmatpush.msra.mxu0 %v1386
      %2205 = vmatpush.msra.mxu0 %v1385
      %2206 = vmatpush.msra.mxu0 %v1384
      %2207 = vmatpush.msra.mxu0 %v1383
      %2208 = vmatpush.msra.mxu0 %v1382
      %2209 = vmatpush.msra.mxu0 %v1381
      %2210 = vmatpush.msra.mxu0 %v1380
      %2211 = vmatpush.msra.mxu0 %v1379
      %2212 = vmatpush.msra.mxu0 %v1378
      %2213 = vmatpush.msra.mxu0 %v1377
      %2214 = vmatpush.msra.mxu0 %v1376
      %2215 = vmatmul.f32.gmra.mxu0 %v983
      %v2216 = vpop.f32.mrf.mxu0
      %v2217 = vadd.f32 %v2104, %v2216
      %2218 = vmatmul.f32.gmra.mxu0 %v992
      %v2219 = vpop.f32.mrf.mxu0
      %v2220 = vadd.f32 %v2107, %v2219
      %2221 = vmatmul.f32.gmra.mxu0 %v1001
      %v2222 = vpop.f32.mrf.mxu0
      %v2223 = vadd.f32 %v2110, %v2222
      %2224 = vmatmul.f32.gmra.mxu0 %v1010
      %v2225 = vpop.f32.mrf.mxu0
      %v2226 = vadd.f32 %v2113, %v2225
      %2227 = vmatmul.f32.gmra.mxu0 %v1019
      %v2228 = vpop.f32.mrf.mxu0
      %v2229 = vadd.f32 %v2116, %v2228
      %2230 = vmatmul.f32.gmra.mxu0 %v1028
      %v2231 = vpop.f32.mrf.mxu0
      %v2232 = vadd.f32 %v2119, %v2231
      %2233 = vmatmul.f32.gmra.mxu0 %v1037
      %v2234 = vpop.f32.mrf.mxu0
      %v2235 = vadd.f32 %v2122, %v2234
      %2236 = vmatmul.f32.gmra.mxu0 %v1046
      %v2237 = vpop.f32.mrf.mxu0
      %v2238 = vadd.f32 %v2125, %v2237
      %2239 = vmatmul.f32.gmra.mxu0 %v1055
      %v2240 = vpop.f32.mrf.mxu0
      %v2241 = vadd.f32 %v2128, %v2240
      %2242 = vmatmul.f32.gmra.mxu0 %v1064
      %v2243 = vpop.f32.mrf.mxu0
      %v2244 = vadd.f32 %v2131, %v2243
      %2245 = vmatmul.f32.gmra.mxu0 %v1073
      %v2246 = vpop.f32.mrf.mxu0
      %v2247 = vadd.f32 %v2134, %v2246
      %2248 = vmatmul.f32.gmra.mxu0 %v1082
      %v2249 = vpop.f32.mrf.mxu0
      %v2250 = vadd.f32 %v2137, %v2249
      %2251 = vmatmul.f32.gmra.mxu0 %v1091
      %v2252 = vpop.f32.mrf.mxu0
      %v2253 = vadd.f32 %v2140, %v2252
      %2254 = vmatmul.f32.gmra.mxu0 %v1100
      %v2255 = vpop.f32.mrf.mxu0
      %v2256 = vadd.f32 %v2143, %v2255
      %2257 = vmatmul.f32.gmra.mxu0 %v1109
      %v2258 = vpop.f32.mrf.mxu0
      %v2259 = vadd.f32 %v2146, %v2258
      %2260 = vmatmul.f32.gmra.mxu0 %v1118
      %v2261 = vpop.f32.mrf.mxu0
      %v2262 = vadd.f32 %v2149, %v2261
      %2263 = vmatmul.f32.gmra.mxu0 %v1127
      %v2264 = vpop.f32.mrf.mxu0
      %v2265 = vadd.f32 %v2152, %v2264
      %2266 = vmatmul.f32.gmra.mxu0 %v1136
      %v2267 = vpop.f32.mrf.mxu0
      %v2268 = vadd.f32 %v2155, %v2267
      %2269 = vmatmul.f32.gmra.mxu0 %v1145
      %v2270 = vpop.f32.mrf.mxu0
      %v2271 = vadd.f32 %v2158, %v2270
      %2272 = vmatmul.f32.gmra.mxu0 %v1154
      %v2273 = vpop.f32.mrf.mxu0
      %v2274 = vadd.f32 %v2161, %v2273
      %2275 = vmatmul.f32.gmra.mxu0 %v1163
      %v2276 = vpop.f32.mrf.mxu0
      %v2277 = vadd.f32 %v2164, %v2276
      %2278 = vmatmul.f32.gmra.mxu0 %v1172
      %v2279 = vpop.f32.mrf.mxu0
      %v2280 = vadd.f32 %v2167, %v2279
      %2281 = vmatmul.f32.gmra.mxu0 %v1181
      %v2282 = vpop.f32.mrf.mxu0
      %v2283 = vadd.f32 %v2170, %v2282
      %2284 = vmatmul.f32.gmra.mxu0 %v1190
      %v2285 = vpop.f32.mrf.mxu0
      %v2286 = vadd.f32 %v2173, %v2285
      %2287 = vmatmul.f32.gmra.mxu0 %v1199
      %v2288 = vpop.f32.mrf.mxu0
      %v2289 = vadd.f32 %v2176, %v2288
      %2290 = vmatmul.f32.gmra.mxu0 %v1208
      %v2291 = vpop.f32.mrf.mxu0
      %v2292 = vadd.f32 %v2179, %v2291
      %2293 = vmatmul.f32.gmra.mxu0 %v1217
      %v2294 = vpop.f32.mrf.mxu0
      %v2295 = vadd.f32 %v2182, %v2294
      %2296 = vmatmul.f32.gmra.mxu0 %v1226
      %v2297 = vpop.f32.mrf.mxu0
      %v2298 = vadd.f32 %v2185, %v2297
      %2299 = vmatmul.f32.gmra.mxu0 %v1235
      %v2300 = vpop.f32.mrf.mxu0
      %v2301 = vadd.f32 %v2188, %v2300
      %2302 = vmatmul.f32.gmra.mxu0 %v1244
      %v2303 = vpop.f32.mrf.mxu0
      %v2304 = vadd.f32 %v2191, %v2303
      %2305 = vmatmul.f32.gmra.mxu0 %v1253
      %v2306 = vpop.f32.mrf.mxu0
      %v2307 = vadd.f32 %v2194, %v2306
      %2308 = vmatmul.f32.gmra.mxu0 %v1262
      %v2309 = vpop.f32.mrf.mxu0
      %v2310 = vadd.f32 %v2197, %v2309
      %2311 = vdwg.mxu0
      %2312 = vmatpush.msra.mxu0 %v1407
      %2313 = vmatpush.msra.mxu0 %v1406
      %2314 = vmatpush.msra.mxu0 %v1405
      %2315 = vmatpush.msra.mxu0 %v1404
      %2316 = vmatpush.msra.mxu0 %v1403
      %2317 = vmatpush.msra.mxu0 %v1402
      %2318 = vmatpush.msra.mxu0 %v1401
      %2319 = vmatpush.msra.mxu0 %v1400
      %2320 = vmatpush.msra.mxu0 %v1399
      %2321 = vmatpush.msra.mxu0 %v1398
      %2322 = vmatpush.msra.mxu0 %v1397
      %2323 = vmatpush.msra.mxu0 %v1396
      %2324 = vmatpush.msra.mxu0 %v1395
      %2325 = vmatpush.msra.mxu0 %v1394
      %2326 = vmatpush.msra.mxu0 %v1393
      %2327 = vmatpush.msra.mxu0 %v1392
      %2328 = vmatmul.f32.gmra.mxu0 %v984
      %v2329 = vpop.f32.mrf.mxu0
      %v2330 = vadd.f32 %v2217, %v2329
      %2331 = vmatmul.f32.gmra.mxu0 %v993
      %v2332 = vpop.f32.mrf.mxu0
      %v2333 = vadd.f32 %v2220, %v2332
      %2334 = vmatmul.f32.gmra.mxu0 %v1002
      %v2335 = vpop.f32.mrf.mxu0
      %v2336 = vadd.f32 %v2223, %v2335
      %2337 = vmatmul.f32.gmra.mxu0 %v1011
      %v2338 = vpop.f32.mrf.mxu0
      %v2339 = vadd.f32 %v2226, %v2338
      %2340 = vmatmul.f32.gmra.mxu0 %v1020
      %v2341 = vpop.f32.mrf.mxu0
      %v2342 = vadd.f32 %v2229, %v2341
      %2343 = vmatmul.f32.gmra.mxu0 %v1029
      %v2344 = vpop.f32.mrf.mxu0
      %v2345 = vadd.f32 %v2232, %v2344
      %2346 = vmatmul.f32.gmra.mxu0 %v1038
      %v2347 = vpop.f32.mrf.mxu0
      %v2348 = vadd.f32 %v2235, %v2347
      %2349 = vmatmul.f32.gmra.mxu0 %v1047
      %v2350 = vpop.f32.mrf.mxu0
      %v2351 = vadd.f32 %v2238, %v2350
      %2352 = vmatmul.f32.gmra.mxu0 %v1056
      %v2353 = vpop.f32.mrf.mxu0
      %v2354 = vadd.f32 %v2241, %v2353
      %2355 = vmatmul.f32.gmra.mxu0 %v1065
      %v2356 = vpop.f32.mrf.mxu0
      %v2357 = vadd.f32 %v2244, %v2356
      %2358 = vmatmul.f32.gmra.mxu0 %v1074
      %v2359 = vpop.f32.mrf.mxu0
      %v2360 = vadd.f32 %v2247, %v2359
      %2361 = vmatmul.f32.gmra.mxu0 %v1083
      %v2362 = vpop.f32.mrf.mxu0
      %v2363 = vadd.f32 %v2250, %v2362
      %2364 = vmatmul.f32.gmra.mxu0 %v1092
      %v2365 = vpop.f32.mrf.mxu0
      %v2366 = vadd.f32 %v2253, %v2365
      %2367 = vmatmul.f32.gmra.mxu0 %v1101
      %v2368 = vpop.f32.mrf.mxu0
      %v2369 = vadd.f32 %v2256, %v2368
      %2370 = vmatmul.f32.gmra.mxu0 %v1110
      %v2371 = vpop.f32.mrf.mxu0
      %v2372 = vadd.f32 %v2259, %v2371
      %2373 = vmatmul.f32.gmra.mxu0 %v1119
      %v2374 = vpop.f32.mrf.mxu0
      %v2375 = vadd.f32 %v2262, %v2374
      %2376 = vmatmul.f32.gmra.mxu0 %v1128
      %v2377 = vpop.f32.mrf.mxu0
      %v2378 = vadd.f32 %v2265, %v2377
      %2379 = vmatmul.f32.gmra.mxu0 %v1137
      %v2380 = vpop.f32.mrf.mxu0
      %v2381 = vadd.f32 %v2268, %v2380
      %2382 = vmatmul.f32.gmra.mxu0 %v1146
      %v2383 = vpop.f32.mrf.mxu0
      %v2384 = vadd.f32 %v2271, %v2383
      %2385 = vmatmul.f32.gmra.mxu0 %v1155
      %v2386 = vpop.f32.mrf.mxu0
      %v2387 = vadd.f32 %v2274, %v2386
      %2388 = vmatmul.f32.gmra.mxu0 %v1164
      %v2389 = vpop.f32.mrf.mxu0
      %v2390 = vadd.f32 %v2277, %v2389
      %2391 = vmatmul.f32.gmra.mxu0 %v1173
      %v2392 = vpop.f32.mrf.mxu0
      %v2393 = vadd.f32 %v2280, %v2392
      %2394 = vmatmul.f32.gmra.mxu0 %v1182
      %v2395 = vpop.f32.mrf.mxu0
      %v2396 = vadd.f32 %v2283, %v2395
      %2397 = vmatmul.f32.gmra.mxu0 %v1191
      %v2398 = vpop.f32.mrf.mxu0
      %v2399 = vadd.f32 %v2286, %v2398
      %2400 = vmatmul.f32.gmra.mxu0 %v1200
      %v2401 = vpop.f32.mrf.mxu0
      %v2402 = vadd.f32 %v2289, %v2401
      %2403 = vmatmul.f32.gmra.mxu0 %v1209
      %v2404 = vpop.f32.mrf.mxu0
      %v2405 = vadd.f32 %v2292, %v2404
      %2406 = vmatmul.f32.gmra.mxu0 %v1218
      %v2407 = vpop.f32.mrf.mxu0
      %v2408 = vadd.f32 %v2295, %v2407
      %2409 = vmatmul.f32.gmra.mxu0 %v1227
      %v2410 = vpop.f32.mrf.mxu0
      %v2411 = vadd.f32 %v2298, %v2410
      %2412 = vmatmul.f32.gmra.mxu0 %v1236
      %v2413 = vpop.f32.mrf.mxu0
      %v2414 = vadd.f32 %v2301, %v2413
      %2415 = vmatmul.f32.gmra.mxu0 %v1245
      %v2416 = vpop.f32.mrf.mxu0
      %v2417 = vadd.f32 %v2304, %v2416
      %2418 = vmatmul.f32.gmra.mxu0 %v1254
      %v2419 = vpop.f32.mrf.mxu0
      %v2420 = vadd.f32 %v2307, %v2419
      %2421 = vmatmul.f32.gmra.mxu0 %v1263
      %v2422 = vpop.f32.mrf.mxu0
      %v2423 = vadd.f32 %v2310, %v2422
      %2424 = vdwg.mxu0
      %v2425 = vld [vmem:[%s3] sm:$0x1]
      %v2427 = vperm.slane %v2425, 0
      %v2429 = vmul.f32 %v2330, %v2427
      %v2430 = vmul.f32 %v2333, %v2427
      %v2431 = vmul.f32 %v2336, %v2427
      %v2432 = vmul.f32 %v2339, %v2427
      %v2433 = vmul.f32 %v2342, %v2427
      %v2434 = vmul.f32 %v2345, %v2427
      %v2435 = vmul.f32 %v2348, %v2427
      %v2436 = vmul.f32 %v2351, %v2427
      %v2437 = vmul.f32 %v2354, %v2427
      %v2438 = vmul.f32 %v2357, %v2427
      %v2439 = vmul.f32 %v2360, %v2427
      %v2440 = vmul.f32 %v2363, %v2427
      %v2441 = vmul.f32 %v2366, %v2427
      %v2442 = vmul.f32 %v2369, %v2427
      %v2443 = vmul.f32 %v2372, %v2427
      %v2444 = vmul.f32 %v2375, %v2427
      %v2445 = vmul.f32 %v2378, %v2427
      %v2446 = vmul.f32 %v2381, %v2427
      %v2447 = vmul.f32 %v2384, %v2427
      %v2448 = vmul.f32 %v2387, %v2427
      %v2449 = vmul.f32 %v2390, %v2427
      %v2450 = vmul.f32 %v2393, %v2427
      %v2451 = vmul.f32 %v2396, %v2427
      %v2452 = vmul.f32 %v2399, %v2427
      %v2453 = vmul.f32 %v2402, %v2427
      %v2454 = vmul.f32 %v2405, %v2427
      %v2455 = vmul.f32 %v2408, %v2427
      %v2456 = vmul.f32 %v2411, %v2427
      %v2457 = vmul.f32 %v2414, %v2427
      %v2458 = vmul.f32 %v2417, %v2427
      %v2459 = vmul.f32 %v2420, %v2427
      %v2460 = vmul.f32 %v2423, %v2427
      %v2461 = vld [vmem:[%s4] sm:$0x1]
      %v2463 = vperm.slane %v2461, 0
      %v2465 = vadd.f32 %v2429, %v2463
      %v2466 = vadd.f32 %v2430, %v2463
      %v2467 = vadd.f32 %v2431, %v2463
      %v2468 = vadd.f32 %v2432, %v2463
      %v2469 = vadd.f32 %v2433, %v2463
      %v2470 = vadd.f32 %v2434, %v2463
      %v2471 = vadd.f32 %v2435, %v2463
      %v2472 = vadd.f32 %v2436, %v2463
      %v2473 = vadd.f32 %v2437, %v2463
      %v2474 = vadd.f32 %v2438, %v2463
      %v2475 = vadd.f32 %v2439, %v2463
      %v2476 = vadd.f32 %v2440, %v2463
      %v2477 = vadd.f32 %v2441, %v2463
      %v2478 = vadd.f32 %v2442, %v2463
      %v2479 = vadd.f32 %v2443, %v2463
      %v2480 = vadd.f32 %v2444, %v2463
      %v2481 = vadd.f32 %v2445, %v2463
      %v2482 = vadd.f32 %v2446, %v2463
      %v2483 = vadd.f32 %v2447, %v2463
      %v2484 = vadd.f32 %v2448, %v2463
      %v2485 = vadd.f32 %v2449, %v2463
      %v2486 = vadd.f32 %v2450, %v2463
      %v2487 = vadd.f32 %v2451, %v2463
      %v2488 = vadd.f32 %v2452, %v2463
      %v2489 = vadd.f32 %v2453, %v2463
      %v2490 = vadd.f32 %v2454, %v2463
      %v2491 = vadd.f32 %v2455, %v2463
      %v2492 = vadd.f32 %v2456, %v2463
      %v2493 = vadd.f32 %v2457, %v2463
      %v2494 = vadd.f32 %v2458, %v2463
      %v2495 = vadd.f32 %v2459, %v2463
      %v2496 = vadd.f32 %v2460, %v2463
      %v2497 = vmax.f32 %v2465, 0.0
      %v2498 = vmax.f32 %v2466, 0.0
      %v2499 = vmax.f32 %v2467, 0.0
      %v2500 = vmax.f32 %v2468, 0.0
      %v2501 = vmax.f32 %v2469, 0.0
      %v2502 = vmax.f32 %v2470, 0.0
      %v2503 = vmax.f32 %v2471, 0.0
      %v2504 = vmax.f32 %v2472, 0.0
      %v2505 = vmax.f32 %v2473, 0.0
      %v2506 = vmax.f32 %v2474, 0.0
      %v2507 = vmax.f32 %v2475, 0.0
      %v2508 = vmax.f32 %v2476, 0.0
      %v2509 = vmax.f32 %v2477, 0.0
      %v2510 = vmax.f32 %v2478, 0.0
      %v2511 = vmax.f32 %v2479, 0.0
      %v2512 = vmax.f32 %v2480, 0.0
      %v2513 = vmax.f32 %v2481, 0.0
      %v2514 = vmax.f32 %v2482, 0.0
      %v2515 = vmax.f32 %v2483, 0.0
      %v2516 = vmax.f32 %v2484, 0.0
      %v2517 = vmax.f32 %v2485, 0.0
      %v2518 = vmax.f32 %v2486, 0.0
      %v2519 = vmax.f32 %v2487, 0.0
      %v2520 = vmax.f32 %v2488, 0.0
      %v2521 = vmax.f32 %v2489, 0.0
      %v2522 = vmax.f32 %v2490, 0.0
      %v2523 = vmax.f32 %v2491, 0.0
      %v2524 = vmax.f32 %v2492, 0.0
      %v2525 = vmax.f32 %v2493, 0.0
      %v2526 = vmax.f32 %v2494, 0.0
      %v2527 = vmax.f32 %v2495, 0.0
      %v2528 = vmax.f32 %v2496, 0.0
      %2529 = vst [vmem:[#allocation3] sm:$0xff] 0.0
      %2530 = vst [vmem:[#allocation3 + $0x8] sm:$0xff] 0.0
      %2531 = vst [vmem:[#allocation3 + $0x10] sm:$0x3] 0.0
      %s2532 = scalar_lea.vmem [#allocation3], 408
      %2533 = vst [vmem:[%s2532] sm:$0xff] 0.0
      %2534 = vst [vmem:[%s2532 + $0x8] sm:$0xff] 0.0
      %2535 = vst [vmem:[%s2532 + $0x10] sm:$0x3] 0.0
      %2536 = vst [vmem:[#allocation3] sm:$0x1] 0.0
      %2537 = vst [vmem:[#allocation3 + $0x18] sm:$0x1] 0.0
      %2538 = vst [vmem:[#allocation3 + $0x30] sm:$0x1] 0.0
      %2539 = vst [vmem:[#allocation3 + $0x48] sm:$0x1] 0.0
      %2540 = vst [vmem:[#allocation3 + $0x60] sm:$0x1] 0.0
      %2541 = vst [vmem:[#allocation3 + $0x78] sm:$0x1] 0.0
      %2542 = vst [vmem:[#allocation3 + $0x90] sm:$0x1] 0.0
      %2543 = vst [vmem:[#allocation3 + $0xa8] sm:$0x1] 0.0
      %2544 = vst [vmem:[#allocation3 + $0xc0] sm:$0x1] 0.0
      %2545 = vst [vmem:[#allocation3 + $0xd8] sm:$0x1] 0.0
      %2546 = vst [vmem:[#allocation3 + $0xf0] sm:$0x1] 0.0
      %2547 = vst [vmem:[#allocation3 + $0x108] sm:$0x1] 0.0
      %2548 = vst [vmem:[#allocation3 + $0x120] sm:$0x1] 0.0
      %2549 = vst [vmem:[#allocation3 + $0x138] sm:$0x1] 0.0
      %2550 = vst [vmem:[#allocation3 + $0x150] sm:$0x1] 0.0
      %2551 = vst [vmem:[#allocation3 + $0x168] sm:$0x1] 0.0
      %2552 = vst [vmem:[#allocation3 + $0x180] sm:$0x1] 0.0
      %2553 = vst [vmem:[#allocation3 + $0x198] sm:$0x1] 0.0
      %2554 = vst [vmem:[#allocation3 + $0x11] sm:$0x1] 0.0
      %2555 = vst [vmem:[#allocation3 + $0x29] sm:$0x1] 0.0
      %2556 = vst [vmem:[#allocation3 + $0x41] sm:$0x1] 0.0
      %2557 = vst [vmem:[#allocation3 + $0x59] sm:$0x1] 0.0
      %2558 = vst [vmem:[#allocation3 + $0x71] sm:$0x1] 0.0
      %2559 = vst [vmem:[#allocation3 + $0x89] sm:$0x1] 0.0
      %2560 = vst [vmem:[#allocation3 + $0xa1] sm:$0x1] 0.0
      %2561 = vst [vmem:[#allocation3 + $0xb9] sm:$0x1] 0.0
      %2562 = vst [vmem:[#allocation3 + $0xd1] sm:$0x1] 0.0
      %2563 = vst [vmem:[#allocation3 + $0xe9] sm:$0x1] 0.0
      %2564 = vst [vmem:[#allocation3 + $0x101] sm:$0x1] 0.0
      %2565 = vst [vmem:[#allocation3 + $0x119] sm:$0x1] 0.0
      %2566 = vst [vmem:[#allocation3 + $0x131] sm:$0x1] 0.0
      %2567 = vst [vmem:[#allocation3 + $0x149] sm:$0x1] 0.0
      %2568 = vst [vmem:[#allocation3 + $0x161] sm:$0x1] 0.0
      %2569 = vst [vmem:[#allocation3 + $0x179] sm:$0x1] 0.0
      %2570 = vst [vmem:[#allocation3 + $0x191] sm:$0x1] 0.0
      %2571 = vst [vmem:[#allocation3 + $0x1a9] sm:$0x1] 0.0
      %s2572 = scalar_lea.vmem [#allocation3], 24
      %2573 = vst [vmem:[%s2572 + $0x1] sm:$0xff] %v2497
      %2574 = vst [vmem:[%s2572 + $0x9] sm:$0xff] %v2498
      %2575 = vst [vmem:[%s2572 + $0x19] sm:$0xff] %v2499
      %2576 = vst [vmem:[%s2572 + $0x21] sm:$0xff] %v2500
      %2577 = vst [vmem:[%s2572 + $0x31] sm:$0xff] %v2501
      %2578 = vst [vmem:[%s2572 + $0x39] sm:$0xff] %v2502
      %2579 = vst [vmem:[%s2572 + $0x49] sm:$0xff] %v2503
      %2580 = vst [vmem:[%s2572 + $0x51] sm:$0xff] %v2504
      %2581 = vst [vmem:[%s2572 + $0x61] sm:$0xff] %v2505
      %2582 = vst [vmem:[%s2572 + $0x69] sm:$0xff] %v2506
      %2583 = vst [vmem:[%s2572 + $0x79] sm:$0xff] %v2507
      %2584 = vst [vmem:[%s2572 + $0x81] sm:$0xff] %v2508
      %2585 = vst [vmem:[%s2572 + $0x91] sm:$0xff] %v2509
      %2586 = vst [vmem:[%s2572 + $0x99] sm:$0xff] %v2510
      %2587 = vst [vmem:[%s2572 + $0xa9] sm:$0xff] %v2511
      %2588 = vst [vmem:[%s2572 + $0xb1] sm:$0xff] %v2512
      %2589 = vst [vmem:[%s2572 + $0xc1] sm:$0xff] %v2513
      %2590 = vst [vmem:[%s2572 + $0xc9] sm:$0xff] %v2514
      %2591 = vst [vmem:[%s2572 + $0xd9] sm:$0xff] %v2515
      %2592 = vst [vmem:[%s2572 + $0xe1] sm:$0xff] %v2516
      %2593 = vst [vmem:[%s2572 + $0xf1] sm:$0xff] %v2517
      %2594 = vst [vmem:[%s2572 + $0xf9] sm:$0xff] %v2518
      %2595 = vst [vmem:[%s2572 + $0x109] sm:$0xff] %v2519
      %2596 = vst [vmem:[%s2572 + $0x111] sm:$0xff] %v2520
      %2597 = vst [vmem:[%s2572 + $0x121] sm:$0xff] %v2521
      %2598 = vst [vmem:[%s2572 + $0x129] sm:$0xff] %v2522
      %2599 = vst [vmem:[%s2572 + $0x139] sm:$0xff] %v2523
      %2600 = vst [vmem:[%s2572 + $0x141] sm:$0xff] %v2524
      %2601 = vst [vmem:[%s2572 + $0x151] sm:$0xff] %v2525
      %2602 = vst [vmem:[%s2572 + $0x159] sm:$0xff] %v2526
      %2603 = vst [vmem:[%s2572 + $0x169] sm:$0xff] %v2527
      %2604 = vst [vmem:[%s2572 + $0x171] sm:$0xff] %v2528
      %v2605 = vld [vmem:[#allocation3] sm:$0xff]
      %v2606 = vld [vmem:[#allocation3 + $0x8] sm:$0xff]
      %v2607 = vld [vmem:[#allocation3 + $0x10] sm:$0x3]
      %v2608 = vld [vmem:[#allocation3 + $0x18] sm:$0xff]
      %v2609 = vld [vmem:[#allocation3 + $0x20] sm:$0xff]
      %v2610 = vld [vmem:[#allocation3 + $0x28] sm:$0x3]
      %v2611 = vld [vmem:[#allocation3 + $0x30] sm:$0xff]
      %v2612 = vld [vmem:[#allocation3 + $0x38] sm:$0xff]
      %v2613 = vld [vmem:[#allocation3 + $0x40] sm:$0x3]
      %v2614 = vld [vmem:[#allocation3 + $0x48] sm:$0xff]
      %v2615 = vld [vmem:[#allocation3 + $0x50] sm:$0xff]
      %v2616 = vld [vmem:[#allocation3 + $0x58] sm:$0x3]
      %v2617 = vld [vmem:[#allocation3 + $0x60] sm:$0xff]
      %v2618 = vld [vmem:[#allocation3 + $0x68] sm:$0xff]
      %v2619 = vld [vmem:[#allocation3 + $0x70] sm:$0x3]
      %v2620 = vld [vmem:[#allocation3 + $0x78] sm:$0xff]
      %v2621 = vld [vmem:[#allocation3 + $0x80] sm:$0xff]
      %v2622 = vld [vmem:[#allocation3 + $0x88] sm:$0x3]
      %v2623 = vld [vmem:[#allocation3 + $0x90] sm:$0xff]
      %v2624 = vld [vmem:[#allocation3 + $0x98] sm:$0xff]
      %v2625 = vld [vmem:[#allocation3 + $0xa0] sm:$0x3]
      %v2626 = vld [vmem:[#allocation3 + $0xa8] sm:$0xff]
      %v2627 = vld [vmem:[#allocation3 + $0xb0] sm:$0xff]
      %v2628 = vld [vmem:[#allocation3 + $0xb8] sm:$0x3]
      %v2629 = vld [vmem:[#allocation3 + $0xc0] sm:$0xff]
      %v2630 = vld [vmem:[#allocation3 + $0xc8] sm:$0xff]
      %v2631 = vld [vmem:[#allocation3 + $0xd0] sm:$0x3]
      %v2632 = vld [vmem:[#allocation3 + $0xd8] sm:$0xff]
      %v2633 = vld [vmem:[#allocation3 + $0xe0] sm:$0xff]
      %v2634 = vld [vmem:[#allocation3 + $0xe8] sm:$0x3]
      %v2635 = vld [vmem:[#allocation3 + $0xf0] sm:$0xff]
      %v2636 = vld [vmem:[#allocation3 + $0xf8] sm:$0xff]
      %v2637 = vld [vmem:[#allocation3 + $0x100] sm:$0x3]
      %v2638 = vld [vmem:[#allocation3 + $0x108] sm:$0xff]
      %v2639 = vld [vmem:[#allocation3 + $0x110] sm:$0xff]
      %v2640 = vld [vmem:[#allocation3 + $0x118] sm:$0x3]
      %v2641 = vld [vmem:[#allocation3 + $0x120] sm:$0xff]
      %v2642 = vld [vmem:[#allocation3 + $0x128] sm:$0xff]
      %v2643 = vld [vmem:[#allocation3 + $0x130] sm:$0x3]
      %v2644 = vld [vmem:[#allocation3 + $0x138] sm:$0xff]
      %v2645 = vld [vmem:[#allocation3 + $0x140] sm:$0xff]
      %v2646 = vld [vmem:[#allocation3 + $0x148] sm:$0x3]
      %v2647 = vld [vmem:[#allocation3 + $0x150] sm:$0xff]
      %v2648 = vld [vmem:[#allocation3 + $0x158] sm:$0xff]
      %v2649 = vld [vmem:[#allocation3 + $0x160] sm:$0x3]
      %v2650 = vld [vmem:[#allocation3 + $0x168] sm:$0xff]
      %v2651 = vld [vmem:[#allocation3 + $0x170] sm:$0xff]
      %v2652 = vld [vmem:[#allocation3 + $0x178] sm:$0x3]
      %v2653 = vld [vmem:[#allocation3 + $0x180] sm:$0xff]
      %v2654 = vld [vmem:[#allocation3 + $0x188] sm:$0xff]
      %v2655 = vld [vmem:[#allocation3 + $0x190] sm:$0x3]
      %v2656 = vld [vmem:[#allocation3 + $0x198] sm:$0xff]
      %v2657 = vld [vmem:[#allocation3 + $0x1a0] sm:$0xff]
      %v2658 = vld [vmem:[#allocation3 + $0x1a8] sm:$0x3]
      %2659 = vst [vmem:[#allocation2] sm:$0xff] %v2605
      %2660 = vst [vmem:[#allocation2 + $0x48] sm:$0xff] %v2606
      %2661 = vst [vmem:[#allocation2 + $0x90] sm:$0xff] %v2608
      %2662 = vst [vmem:[#allocation2 + $0xd8] sm:$0xff] %v2609
      %2663 = vst [vmem:[#allocation2 + $0x120] sm:$0xff] %v2611
      %2664 = vst [vmem:[#allocation2 + $0x168] sm:$0xff] %v2612
      %2665 = vst [vmem:[#allocation2 + $0x1b0] sm:$0xff] %v2614
      %2666 = vst [vmem:[#allocation2 + $0x1f8] sm:$0xff] %v2615
      %2667 = vst [vmem:[#allocation2 + $0x240] sm:$0xff] %v2617
      %2668 = vst [vmem:[#allocation2 + $0x288] sm:$0xff] %v2618
      %2669 = vst [vmem:[#allocation2 + $0x2d0] sm:$0xff] %v2620
      %2670 = vst [vmem:[#allocation2 + $0x318] sm:$0xff] %v2621
      %2671 = vst [vmem:[#allocation2 + $0x360] sm:$0xff] %v2623
      %2672 = vst [vmem:[#allocation2 + $0x3a8] sm:$0xff] %v2624
      %2673 = vst [vmem:[#allocation2 + $0x3f0] sm:$0xff] %v2626
      %2674 = vst [vmem:[#allocation2 + $0x438] sm:$0xff] %v2627
      %2675 = vst [vmem:[#allocation2 + $0x480] sm:$0xff] %v2629
      %2676 = vst [vmem:[#allocation2 + $0x4c8] sm:$0xff] %v2630
      %2677 = vst [vmem:[#allocation2 + $0x510] sm:$0xff] %v2632
      %2678 = vst [vmem:[#allocation2 + $0x558] sm:$0xff] %v2633
      %2679 = vst [vmem:[#allocation2 + $0x5a0] sm:$0xff] %v2635
      %2680 = vst [vmem:[#allocation2 + $0x5e8] sm:$0xff] %v2636
      %2681 = vst [vmem:[#allocation2 + $0x630] sm:$0xff] %v2638
      %2682 = vst [vmem:[#allocation2 + $0x678] sm:$0xff] %v2639
      %2683 = vst [vmem:[#allocation2 + $0x6c0] sm:$0xff] %v2641
      %2684 = vst [vmem:[#allocation2 + $0x708] sm:$0xff] %v2642
      %2685 = vst [vmem:[#allocation2 + $0x750] sm:$0xff] %v2644
      %2686 = vst [vmem:[#allocation2 + $0x798] sm:$0xff] %v2645
      %2687 = vst [vmem:[#allocation2 + $0x7e0] sm:$0xff] %v2647
      %2688 = vst [vmem:[#allocation2 + $0x828] sm:$0xff] %v2648
      %2689 = vst [vmem:[#allocation2 + $0x870] sm:$0xff] %v2650
      %2690 = vst [vmem:[#allocation2 + $0x8b8] sm:$0xff] %v2651
      %v2739 = vrot.slane %v2605, 1
      %v2740 = vrot.slane %v2606, 1
      %v2741 = vsel %vm460, %v2739, %v2740
      %v2742 = vrot.slane %v2607, 1
      %v2743 = vsel %vm460, %v2740, %v2742
      %v2744 = vrot.slane %v2608, 1
      %v2745 = vrot.slane %v2609, 1
      %v2746 = vsel %vm460, %v2744, %v2745
      %v2747 = vrot.slane %v2610, 1
      %v2748 = vsel %vm460, %v2745, %v2747
      %v2749 = vrot.slane %v2611, 1
      %v2750 = vrot.slane %v2612, 1
      %v2751 = vsel %vm460, %v2749, %v2750
      %v2752 = vrot.slane %v2613, 1
      %v2753 = vsel %vm460, %v2750, %v2752
      %v2754 = vrot.slane %v2614, 1
      %v2755 = vrot.slane %v2615, 1
      %v2756 = vsel %vm460, %v2754, %v2755
      %v2757 = vrot.slane %v2616, 1
      %v2758 = vsel %vm460, %v2755, %v2757
      %v2759 = vrot.slane %v2617, 1
      %v2760 = vrot.slane %v2618, 1
      %v2761 = vsel %vm460, %v2759, %v2760
      %v2762 = vrot.slane %v2619, 1
      %v2763 = vsel %vm460, %v2760, %v2762
      %v2764 = vrot.slane %v2620, 1
      %v2765 = vrot.slane %v2621, 1
      %v2766 = vsel %vm460, %v2764, %v2765
      %v2767 = vrot.slane %v2622, 1
      %v2768 = vsel %vm460, %v2765, %v2767
      %v2769 = vrot.slane %v2623, 1
      %v2770 = vrot.slane %v2624, 1
      %v2771 = vsel %vm460, %v2769, %v2770
      %v2772 = vrot.slane %v2625, 1
      %v2773 = vsel %vm460, %v2770, %v2772
      %v2774 = vrot.slane %v2626, 1
      %v2775 = vrot.slane %v2627, 1
      %v2776 = vsel %vm460, %v2774, %v2775
      %v2777 = vrot.slane %v2628, 1
      %v2778 = vsel %vm460, %v2775, %v2777
      %v2779 = vrot.slane %v2629, 1
      %v2780 = vrot.slane %v2630, 1
      %v2781 = vsel %vm460, %v2779, %v2780
      %v2782 = vrot.slane %v2631, 1
      %v2783 = vsel %vm460, %v2780, %v2782
      %v2784 = vrot.slane %v2632, 1
      %v2785 = vrot.slane %v2633, 1
      %v2786 = vsel %vm460, %v2784, %v2785
      %v2787 = vrot.slane %v2634, 1
      %v2788 = vsel %vm460, %v2785, %v2787
      %v2789 = vrot.slane %v2635, 1
      %v2790 = vrot.slane %v2636, 1
      %v2791 = vsel %vm460, %v2789, %v2790
      %v2792 = vrot.slane %v2637, 1
      %v2793 = vsel %vm460, %v2790, %v2792
      %v2794 = vrot.slane %v2638, 1
      %v2795 = vrot.slane %v2639, 1
      %v2796 = vsel %vm460, %v2794, %v2795
      %v2797 = vrot.slane %v2640, 1
      %v2798 = vsel %vm460, %v2795, %v2797
      %v2799 = vrot.slane %v2641, 1
      %v2800 = vrot.slane %v2642, 1
      %v2801 = vsel %vm460, %v2799, %v2800
      %v2802 = vrot.slane %v2643, 1
      %v2803 = vsel %vm460, %v2800, %v2802
      %v2804 = vrot.slane %v2644, 1
      %v2805 = vrot.slane %v2645, 1
      %v2806 = vsel %vm460, %v2804, %v2805
      %v2807 = vrot.slane %v2646, 1
      %v2808 = vsel %vm460, %v2805, %v2807
      %v2809 = vrot.slane %v2647, 1
      %v2810 = vrot.slane %v2648, 1
      %v2811 = vsel %vm460, %v2809, %v2810
      %v2812 = vrot.slane %v2649, 1
      %v2813 = vsel %vm460, %v2810, %v2812
      %v2814 = vrot.slane %v2650, 1
      %v2815 = vrot.slane %v2651, 1
      %v2816 = vsel %vm460, %v2814, %v2815
      %v2817 = vrot.slane %v2652, 1
      %v2818 = vsel %vm460, %v2815, %v2817
      %2851 = vst [vmem:[#allocation2 + $0x8] sm:$0xff] %v2741
      %2852 = vst [vmem:[#allocation2 + $0x50] sm:$0xff] %v2743
      %2853 = vst [vmem:[#allocation2 + $0x98] sm:$0xff] %v2746
      %2854 = vst [vmem:[#allocation2 + $0xe0] sm:$0xff] %v2748
      %2855 = vst [vmem:[#allocation2 + $0x128] sm:$0xff] %v2751
      %2856 = vst [vmem:[#allocation2 + $0x170] sm:$0xff] %v2753
      %2857 = vst [vmem:[#allocation2 + $0x1b8] sm:$0xff] %v2756
      %2858 = vst [vmem:[#allocation2 + $0x200] sm:$0xff] %v2758
      %2859 = vst [vmem:[#allocation2 + $0x248] sm:$0xff] %v2761
      %2860 = vst [vmem:[#allocation2 + $0x290] sm:$0xff] %v2763
      %2861 = vst [vmem:[#allocation2 + $0x2d8] sm:$0xff] %v2766
      %2862 = vst [vmem:[#allocation2 + $0x320] sm:$0xff] %v2768
      %2863 = vst [vmem:[#allocation2 + $0x368] sm:$0xff] %v2771
      %2864 = vst [vmem:[#allocation2 + $0x3b0] sm:$0xff] %v2773
      %2865 = vst [vmem:[#allocation2 + $0x3f8] sm:$0xff] %v2776
      %2866 = vst [vmem:[#allocation2 + $0x440] sm:$0xff] %v2778
      %2867 = vst [vmem:[#allocation2 + $0x488] sm:$0xff] %v2781
      %2868 = vst [vmem:[#allocation2 + $0x4d0] sm:$0xff] %v2783
      %2869 = vst [vmem:[#allocation2 + $0x518] sm:$0xff] %v2786
      %2870 = vst [vmem:[#allocation2 + $0x560] sm:$0xff] %v2788
      %2871 = vst [vmem:[#allocation2 + $0x5a8] sm:$0xff] %v2791
      %2872 = vst [vmem:[#allocation2 + $0x5f0] sm:$0xff] %v2793
      %2873 = vst [vmem:[#allocation2 + $0x638] sm:$0xff] %v2796
      %2874 = vst [vmem:[#allocation2 + $0x680] sm:$0xff] %v2798
      %2875 = vst [vmem:[#allocation2 + $0x6c8] sm:$0xff] %v2801
      %2876 = vst [vmem:[#allocation2 + $0x710] sm:$0xff] %v2803
      %2877 = vst [vmem:[#allocation2 + $0x758] sm:$0xff] %v2806
      %2878 = vst [vmem:[#allocation2 + $0x7a0] sm:$0xff] %v2808
      %2879 = vst [vmem:[#allocation2 + $0x7e8] sm:$0xff] %v2811
      %2880 = vst [vmem:[#allocation2 + $0x830] sm:$0xff] %v2813
      %2881 = vst [vmem:[#allocation2 + $0x878] sm:$0xff] %v2816
      %2882 = vst [vmem:[#allocation2 + $0x8c0] sm:$0xff] %v2818
      %v2883 = vrot.slane %v2605, 2
      %v2884 = vrot.slane %v2606, 2
      %v2885 = vsel %vm605, %v2883, %v2884
      %v2886 = vrot.slane %v2607, 2
      %v2887 = vsel %vm605, %v2884, %v2886
      %v2888 = vrot.slane %v2608, 2
      %v2889 = vrot.slane %v2609, 2
      %v2890 = vsel %vm605, %v2888, %v2889
      %v2891 = vrot.slane %v2610, 2
      %v2892 = vsel %vm605, %v2889, %v2891
      %v2893 = vrot.slane %v2611, 2
      %v2894 = vrot.slane %v2612, 2
      %v2895 = vsel %vm605, %v2893, %v2894
      %v2896 = vrot.slane %v2613, 2
      %v2897 = vsel %vm605, %v2894, %v2896
      %v2898 = vrot.slane %v2614, 2
      %v2899 = vrot.slane %v2615, 2
      %v2900 = vsel %vm605, %v2898, %v2899
      %v2901 = vrot.slane %v2616, 2
      %v2902 = vsel %vm605, %v2899, %v2901
      %v2903 = vrot.slane %v2617, 2
      %v2904 = vrot.slane %v2618, 2
      %v2905 = vsel %vm605, %v2903, %v2904
      %v2906 = vrot.slane %v2619, 2
      %v2907 = vsel %vm605, %v2904, %v2906
      %v2908 = vrot.slane %v2620, 2
      %v2909 = vrot.slane %v2621, 2
      %v2910 = vsel %vm605, %v2908, %v2909
      %v2911 = vrot.slane %v2622, 2
      %v2912 = vsel %vm605, %v2909, %v2911
      %v2913 = vrot.slane %v2623, 2
      %v2914 = vrot.slane %v2624, 2
      %v2915 = vsel %vm605, %v2913, %v2914
      %v2916 = vrot.slane %v2625, 2
      %v2917 = vsel %vm605, %v2914, %v2916
      %v2918 = vrot.slane %v2626, 2
      %v2919 = vrot.slane %v2627, 2
      %v2920 = vsel %vm605, %v2918, %v2919
      %v2921 = vrot.slane %v2628, 2
      %v2922 = vsel %vm605, %v2919, %v2921
      %v2923 = vrot.slane %v2629, 2
      %v2924 = vrot.slane %v2630, 2
      %v2925 = vsel %vm605, %v2923, %v2924
      %v2926 = vrot.slane %v2631, 2
      %v2927 = vsel %vm605, %v2924, %v2926
      %v2928 = vrot.slane %v2632, 2
      %v2929 = vrot.slane %v2633, 2
      %v2930 = vsel %vm605, %v2928, %v2929
      %v2931 = vrot.slane %v2634, 2
      %v2932 = vsel %vm605, %v2929, %v2931
      %v2933 = vrot.slane %v2635, 2
      %v2934 = vrot.slane %v2636, 2
      %v2935 = vsel %vm605, %v2933, %v2934
      %v2936 = vrot.slane %v2637, 2
      %v2937 = vsel %vm605, %v2934, %v2936
      %v2938 = vrot.slane %v2638, 2
      %v2939 = vrot.slane %v2639, 2
      %v2940 = vsel %vm605, %v2938, %v2939
      %v2941 = vrot.slane %v2640, 2
      %v2942 = vsel %vm605, %v2939, %v2941
      %v2943 = vrot.slane %v2641, 2
      %v2944 = vrot.slane %v2642, 2
      %v2945 = vsel %vm605, %v2943, %v2944
      %v2946 = vrot.slane %v2643, 2
      %v2947 = vsel %vm605, %v2944, %v2946
      %v2948 = vrot.slane %v2644, 2
      %v2949 = vrot.slane %v2645, 2
      %v2950 = vsel %vm605, %v2948, %v2949
      %v2951 = vrot.slane %v2646, 2
      %v2952 = vsel %vm605, %v2949, %v2951
      %v2953 = vrot.slane %v2647, 2
      %v2954 = vrot.slane %v2648, 2
      %v2955 = vsel %vm605, %v2953, %v2954
      %v2956 = vrot.slane %v2649, 2
      %v2957 = vsel %vm605, %v2954, %v2956
      %v2958 = vrot.slane %v2650, 2
      %v2959 = vrot.slane %v2651, 2
      %v2960 = vsel %vm605, %v2958, %v2959
      %v2961 = vrot.slane %v2652, 2
      %v2962 = vsel %vm605, %v2959, %v2961
      %2995 = vst [vmem:[#allocation2 + $0x10] sm:$0xff] %v2885
      %2996 = vst [vmem:[#allocation2 + $0x58] sm:$0xff] %v2887
      %2997 = vst [vmem:[#allocation2 + $0xa0] sm:$0xff] %v2890
      %2998 = vst [vmem:[#allocation2 + $0xe8] sm:$0xff] %v2892
      %2999 = vst [vmem:[#allocation2 + $0x130] sm:$0xff] %v2895
      %3000 = vst [vmem:[#allocation2 + $0x178] sm:$0xff] %v2897
      %3001 = vst [vmem:[#allocation2 + $0x1c0] sm:$0xff] %v2900
      %3002 = vst [vmem:[#allocation2 + $0x208] sm:$0xff] %v2902
      %3003 = vst [vmem:[#allocation2 + $0x250] sm:$0xff] %v2905
      %3004 = vst [vmem:[#allocation2 + $0x298] sm:$0xff] %v2907
      %3005 = vst [vmem:[#allocation2 + $0x2e0] sm:$0xff] %v2910
      %3006 = vst [vmem:[#allocation2 + $0x328] sm:$0xff] %v2912
      %3007 = vst [vmem:[#allocation2 + $0x370] sm:$0xff] %v2915
      %3008 = vst [vmem:[#allocation2 + $0x3b8] sm:$0xff] %v2917
      %3009 = vst [vmem:[#allocation2 + $0x400] sm:$0xff] %v2920
      %3010 = vst [vmem:[#allocation2 + $0x448] sm:$0xff] %v2922
      %3011 = vst [vmem:[#allocation2 + $0x490] sm:$0xff] %v2925
      %3012 = vst [vmem:[#allocation2 + $0x4d8] sm:$0xff] %v2927
      %3013 = vst [vmem:[#allocation2 + $0x520] sm:$0xff] %v2930
      %3014 = vst [vmem:[#allocation2 + $0x568] sm:$0xff] %v2932
      %3015 = vst [vmem:[#allocation2 + $0x5b0] sm:$0xff] %v2935
      %3016 = vst [vmem:[#allocation2 + $0x5f8] sm:$0xff] %v2937
      %3017 = vst [vmem:[#allocation2 + $0x640] sm:$0xff] %v2940
      %3018 = vst [vmem:[#allocation2 + $0x688] sm:$0xff] %v2942
      %3019 = vst [vmem:[#allocation2 + $0x6d0] sm:$0xff] %v2945
      %3020 = vst [vmem:[#allocation2 + $0x718] sm:$0xff] %v2947
      %3021 = vst [vmem:[#allocation2 + $0x760] sm:$0xff] %v2950
      %3022 = vst [vmem:[#allocation2 + $0x7a8] sm:$0xff] %v2952
      %3023 = vst [vmem:[#allocation2 + $0x7f0] sm:$0xff] %v2955
      %3024 = vst [vmem:[#allocation2 + $0x838] sm:$0xff] %v2957
      %3025 = vst [vmem:[#allocation2 + $0x880] sm:$0xff] %v2960
      %3026 = vst [vmem:[#allocation2 + $0x8c8] sm:$0xff] %v2962
      %3027 = vst [vmem:[#allocation2 + $0x18] sm:$0xff] %v2608
      %3028 = vst [vmem:[#allocation2 + $0x60] sm:$0xff] %v2609
      %3029 = vst [vmem:[#allocation2 + $0xa8] sm:$0xff] %v2611
      %3030 = vst [vmem:[#allocation2 + $0xf0] sm:$0xff] %v2612
      %3031 = vst [vmem:[#allocation2 + $0x138] sm:$0xff] %v2614
      %3032 = vst [vmem:[#allocation2 + $0x180] sm:$0xff] %v2615
      %3033 = vst [vmem:[#allocation2 + $0x1c8] sm:$0xff] %v2617
      %3034 = vst [vmem:[#allocation2 + $0x210] sm:$0xff] %v2618
      %3035 = vst [vmem:[#allocation2 + $0x258] sm:$0xff] %v2620
      %3036 = vst [vmem:[#allocation2 + $0x2a0] sm:$0xff] %v2621
      %3037 = vst [vmem:[#allocation2 + $0x2e8] sm:$0xff] %v2623
      %3038 = vst [vmem:[#allocation2 + $0x330] sm:$0xff] %v2624
      %3039 = vst [vmem:[#allocation2 + $0x378] sm:$0xff] %v2626
      %3040 = vst [vmem:[#allocation2 + $0x3c0] sm:$0xff] %v2627
      %3041 = vst [vmem:[#allocation2 + $0x408] sm:$0xff] %v2629
      %3042 = vst [vmem:[#allocation2 + $0x450] sm:$0xff] %v2630
      %3043 = vst [vmem:[#allocation2 + $0x498] sm:$0xff] %v2632
      %3044 = vst [vmem:[#allocation2 + $0x4e0] sm:$0xff] %v2633
      %3045 = vst [vmem:[#allocation2 + $0x528] sm:$0xff] %v2635
      %3046 = vst [vmem:[#allocation2 + $0x570] sm:$0xff] %v2636
      %3047 = vst [vmem:[#allocation2 + $0x5b8] sm:$0xff] %v2638
      %3048 = vst [vmem:[#allocation2 + $0x600] sm:$0xff] %v2639
      %3049 = vst [vmem:[#allocation2 + $0x648] sm:$0xff] %v2641
      %3050 = vst [vmem:[#allocation2 + $0x690] sm:$0xff] %v2642
      %3051 = vst [vmem:[#allocation2 + $0x6d8] sm:$0xff] %v2644
      %3052 = vst [vmem:[#allocation2 + $0x720] sm:$0xff] %v2645
      %3053 = vst [vmem:[#allocation2 + $0x768] sm:$0xff] %v2647
      %3054 = vst [vmem:[#allocation2 + $0x7b0] sm:$0xff] %v2648
      %3055 = vst [vmem:[#allocation2 + $0x7f8] sm:$0xff] %v2650
      %3056 = vst [vmem:[#allocation2 + $0x840] sm:$0xff] %v2651
      %3057 = vst [vmem:[#allocation2 + $0x888] sm:$0xff] %v2653
      %3058 = vst [vmem:[#allocation2 + $0x8d0] sm:$0xff] %v2654
      %v3062 = vrot.slane %v2653, 1
      %v3063 = vrot.slane %v2654, 1
      %v3064 = vsel %vm460, %v3062, %v3063
      %v3065 = vrot.slane %v2655, 1
      %v3066 = vsel %vm460, %v3063, %v3065
      %3069 = vst [vmem:[#allocation2 + $0x20] sm:$0xff] %v2746
      %3070 = vst [vmem:[#allocation2 + $0x68] sm:$0xff] %v2748
      %3071 = vst [vmem:[#allocation2 + $0xb0] sm:$0xff] %v2751
      %3072 = vst [vmem:[#allocation2 + $0xf8] sm:$0xff] %v2753
      %3073 = vst [vmem:[#allocation2 + $0x140] sm:$0xff] %v2756
      %3074 = vst [vmem:[#allocation2 + $0x188] sm:$0xff] %v2758
      %3075 = vst [vmem:[#allocation2 + $0x1d0] sm:$0xff] %v2761
      %3076 = vst [vmem:[#allocation2 + $0x218] sm:$0xff] %v2763
      %3077 = vst [vmem:[#allocation2 + $0x260] sm:$0xff] %v2766
      %3078 = vst [vmem:[#allocation2 + $0x2a8] sm:$0xff] %v2768
      %3079 = vst [vmem:[#allocation2 + $0x2f0] sm:$0xff] %v2771
      %3080 = vst [vmem:[#allocation2 + $0x338] sm:$0xff] %v2773
      %3081 = vst [vmem:[#allocation2 + $0x380] sm:$0xff] %v2776
      %3082 = vst [vmem:[#allocation2 + $0x3c8] sm:$0xff] %v2778
      %3083 = vst [vmem:[#allocation2 + $0x410] sm:$0xff] %v2781
      %3084 = vst [vmem:[#allocation2 + $0x458] sm:$0xff] %v2783
      %3085 = vst [vmem:[#allocation2 + $0x4a0] sm:$0xff] %v2786
      %3086 = vst [vmem:[#allocation2 + $0x4e8] sm:$0xff] %v2788
      %3087 = vst [vmem:[#allocation2 + $0x530] sm:$0xff] %v2791
      %3088 = vst [vmem:[#allocation2 + $0x578] sm:$0xff] %v2793
      %3089 = vst [vmem:[#allocation2 + $0x5c0] sm:$0xff] %v2796
      %3090 = vst [vmem:[#allocation2 + $0x608] sm:$0xff] %v2798
      %3091 = vst [vmem:[#allocation2 + $0x650] sm:$0xff] %v2801
      %3092 = vst [vmem:[#allocation2 + $0x698] sm:$0xff] %v2803
      %3093 = vst [vmem:[#allocation2 + $0x6e0] sm:$0xff] %v2806
      %3094 = vst [vmem:[#allocation2 + $0x728] sm:$0xff] %v2808
      %3095 = vst [vmem:[#allocation2 + $0x770] sm:$0xff] %v2811
      %3096 = vst [vmem:[#allocation2 + $0x7b8] sm:$0xff] %v2813
      %3097 = vst [vmem:[#allocation2 + $0x800] sm:$0xff] %v2816
      %3098 = vst [vmem:[#allocation2 + $0x848] sm:$0xff] %v2818
      %3099 = vst [vmem:[#allocation2 + $0x890] sm:$0xff] %v3064
      %3100 = vst [vmem:[#allocation2 + $0x8d8] sm:$0xff] %v3066
      %v3101 = vrot.slane %v2653, 2
      %v3102 = vrot.slane %v2654, 2
      %v3103 = vsel %vm605, %v3101, %v3102
      %v3104 = vrot.slane %v2655, 2
      %v3105 = vsel %vm605, %v3102, %v3104
      %3108 = vst [vmem:[#allocation2 + $0x28] sm:$0xff] %v2890
      %3109 = vst [vmem:[#allocation2 + $0x70] sm:$0xff] %v2892
      %3110 = vst [vmem:[#allocation2 + $0xb8] sm:$0xff] %v2895
      %3111 = vst [vmem:[#allocation2 + $0x100] sm:$0xff] %v2897
      %3112 = vst [vmem:[#allocation2 + $0x148] sm:$0xff] %v2900
      %3113 = vst [vmem:[#allocation2 + $0x190] sm:$0xff] %v2902
      %3114 = vst [vmem:[#allocation2 + $0x1d8] sm:$0xff] %v2905
      %3115 = vst [vmem:[#allocation2 + $0x220] sm:$0xff] %v2907
      %3116 = vst [vmem:[#allocation2 + $0x268] sm:$0xff] %v2910
      %3117 = vst [vmem:[#allocation2 + $0x2b0] sm:$0xff] %v2912
      %3118 = vst [vmem:[#allocation2 + $0x2f8] sm:$0xff] %v2915
      %3119 = vst [vmem:[#allocation2 + $0x340] sm:$0xff] %v2917
      %3120 = vst [vmem:[#allocation2 + $0x388] sm:$0xff] %v2920
      %3121 = vst [vmem:[#allocation2 + $0x3d0] sm:$0xff] %v2922
      %3122 = vst [vmem:[#allocation2 + $0x418] sm:$0xff] %v2925
      %3123 = vst [vmem:[#allocation2 + $0x460] sm:$0xff] %v2927
      %3124 = vst [vmem:[#allocation2 + $0x4a8] sm:$0xff] %v2930
      %3125 = vst [vmem:[#allocation2 + $0x4f0] sm:$0xff] %v2932
      %3126 = vst [vmem:[#allocation2 + $0x538] sm:$0xff] %v2935
      %3127 = vst [vmem:[#allocation2 + $0x580] sm:$0xff] %v2937
      %3128 = vst [vmem:[#allocation2 + $0x5c8] sm:$0xff] %v2940
      %3129 = vst [vmem:[#allocation2 + $0x610] sm:$0xff] %v2942
      %3130 = vst [vmem:[#allocation2 + $0x658] sm:$0xff] %v2945
      %3131 = vst [vmem:[#allocation2 + $0x6a0] sm:$0xff] %v2947
      %3132 = vst [vmem:[#allocation2 + $0x6e8] sm:$0xff] %v2950
      %3133 = vst [vmem:[#allocation2 + $0x730] sm:$0xff] %v2952
      %3134 = vst [vmem:[#allocation2 + $0x778] sm:$0xff] %v2955
      %3135 = vst [vmem:[#allocation2 + $0x7c0] sm:$0xff] %v2957
      %3136 = vst [vmem:[#allocation2 + $0x808] sm:$0xff] %v2960
      %3137 = vst [vmem:[#allocation2 + $0x850] sm:$0xff] %v2962
      %3138 = vst [vmem:[#allocation2 + $0x898] sm:$0xff] %v3103
      %3139 = vst [vmem:[#allocation2 + $0x8e0] sm:$0xff] %v3105
      %3140 = vst [vmem:[#allocation2 + $0x30] sm:$0xff] %v2611
      %3141 = vst [vmem:[#allocation2 + $0x78] sm:$0xff] %v2612
      %3142 = vst [vmem:[#allocation2 + $0xc0] sm:$0xff] %v2614
      %3143 = vst [vmem:[#allocation2 + $0x108] sm:$0xff] %v2615
      %3144 = vst [vmem:[#allocation2 + $0x150] sm:$0xff] %v2617
      %3145 = vst [vmem:[#allocation2 + $0x198] sm:$0xff] %v2618
      %3146 = vst [vmem:[#allocation2 + $0x1e0] sm:$0xff] %v2620
      %3147 = vst [vmem:[#allocation2 + $0x228] sm:$0xff] %v2621
      %3148 = vst [vmem:[#allocation2 + $0x270] sm:$0xff] %v2623
      %3149 = vst [vmem:[#allocation2 + $0x2b8] sm:$0xff] %v2624
      %3150 = vst [vmem:[#allocation2 + $0x300] sm:$0xff] %v2626
      %3151 = vst [vmem:[#allocation2 + $0x348] sm:$0xff] %v2627
      %3152 = vst [vmem:[#allocation2 + $0x390] sm:$0xff] %v2629
      %3153 = vst [vmem:[#allocation2 + $0x3d8] sm:$0xff] %v2630
      %3154 = vst [vmem:[#allocation2 + $0x420] sm:$0xff] %v2632
      %3155 = vst [vmem:[#allocation2 + $0x468] sm:$0xff] %v2633
      %3156 = vst [vmem:[#allocation2 + $0x4b0] sm:$0xff] %v2635
      %3157 = vst [vmem:[#allocation2 + $0x4f8] sm:$0xff] %v2636
      %3158 = vst [vmem:[#allocation2 + $0x540] sm:$0xff] %v2638
      %3159 = vst [vmem:[#allocation2 + $0x588] sm:$0xff] %v2639
      %3160 = vst [vmem:[#allocation2 + $0x5d0] sm:$0xff] %v2641
      %3161 = vst [vmem:[#allocation2 + $0x618] sm:$0xff] %v2642
      %3162 = vst [vmem:[#allocation2 + $0x660] sm:$0xff] %v2644
      %3163 = vst [vmem:[#allocation2 + $0x6a8] sm:$0xff] %v2645
      %3164 = vst [vmem:[#allocation2 + $0x6f0] sm:$0xff] %v2647
      %3165 = vst [vmem:[#allocation2 + $0x738] sm:$0xff] %v2648
      %3166 = vst [vmem:[#allocation2 + $0x780] sm:$0xff] %v2650
      %3167 = vst [vmem:[#allocation2 + $0x7c8] sm:$0xff] %v2651
      %3168 = vst [vmem:[#allocation2 + $0x810] sm:$0xff] %v2653
      %3169 = vst [vmem:[#allocation2 + $0x858] sm:$0xff] %v2654
      %3170 = vst [vmem:[#allocation2 + $0x8a0] sm:$0xff] %v2656
      %3171 = vst [vmem:[#allocation2 + $0x8e8] sm:$0xff] %v2657
      %v3175 = vrot.slane %v2656, 1
      %v3176 = vrot.slane %v2657, 1
      %v3177 = vsel %vm460, %v3175, %v3176
      %v3178 = vrot.slane %v2658, 1
      %v3179 = vsel %vm460, %v3176, %v3178
      %3182 = vst [vmem:[#allocation2 + $0x38] sm:$0xff] %v2751
      %3183 = vst [vmem:[#allocation2 + $0x80] sm:$0xff] %v2753
      %3184 = vst [vmem:[#allocation2 + $0xc8] sm:$0xff] %v2756
      %3185 = vst [vmem:[#allocation2 + $0x110] sm:$0xff] %v2758
      %3186 = vst [vmem:[#allocation2 + $0x158] sm:$0xff] %v2761
      %3187 = vst [vmem:[#allocation2 + $0x1a0] sm:$0xff] %v2763
      %3188 = vst [vmem:[#allocation2 + $0x1e8] sm:$0xff] %v2766
      %3189 = vst [vmem:[#allocation2 + $0x230] sm:$0xff] %v2768
      %3190 = vst [vmem:[#allocation2 + $0x278] sm:$0xff] %v2771
      %3191 = vst [vmem:[#allocation2 + $0x2c0] sm:$0xff] %v2773
      %3192 = vst [vmem:[#allocation2 + $0x308] sm:$0xff] %v2776
      %3193 = vst [vmem:[#allocation2 + $0x350] sm:$0xff] %v2778
      %3194 = vst [vmem:[#allocation2 + $0x398] sm:$0xff] %v2781
      %3195 = vst [vmem:[#allocation2 + $0x3e0] sm:$0xff] %v2783
      %3196 = vst [vmem:[#allocation2 + $0x428] sm:$0xff] %v2786
      %3197 = vst [vmem:[#allocation2 + $0x470] sm:$0xff] %v2788
      %3198 = vst [vmem:[#allocation2 + $0x4b8] sm:$0xff] %v2791
      %3199 = vst [vmem:[#allocation2 + $0x500] sm:$0xff] %v2793
      %3200 = vst [vmem:[#allocation2 + $0x548] sm:$0xff] %v2796
      %3201 = vst [vmem:[#allocation2 + $0x590] sm:$0xff] %v2798
      %3202 = vst [vmem:[#allocation2 + $0x5d8] sm:$0xff] %v2801
      %3203 = vst [vmem:[#allocation2 + $0x620] sm:$0xff] %v2803
      %3204 = vst [vmem:[#allocation2 + $0x668] sm:$0xff] %v2806
      %3205 = vst [vmem:[#allocation2 + $0x6b0] sm:$0xff] %v2808
      %3206 = vst [vmem:[#allocation2 + $0x6f8] sm:$0xff] %v2811
      %3207 = vst [vmem:[#allocation2 + $0x740] sm:$0xff] %v2813
      %3208 = vst [vmem:[#allocation2 + $0x788] sm:$0xff] %v2816
      %3209 = vst [vmem:[#allocation2 + $0x7d0] sm:$0xff] %v2818
      %3210 = vst [vmem:[#allocation2 + $0x818] sm:$0xff] %v3064
      %3211 = vst [vmem:[#allocation2 + $0x860] sm:$0xff] %v3066
      %3212 = vst [vmem:[#allocation2 + $0x8a8] sm:$0xff] %v3177
      %3213 = vst [vmem:[#allocation2 + $0x8f0] sm:$0xff] %v3179
      %v3214 = vrot.slane %v2656, 2
      %v3215 = vrot.slane %v2657, 2
      %v3216 = vsel %vm605, %v3214, %v3215
      %v3217 = vrot.slane %v2658, 2
      %v3218 = vsel %vm605, %v3215, %v3217
      %3221 = vst [vmem:[#allocation2 + $0x40] sm:$0xff] %v2895
      %3222 = vst [vmem:[#allocation2 + $0x88] sm:$0xff] %v2897
      %3223 = vst [vmem:[#allocation2 + $0xd0] sm:$0xff] %v2900
      %3224 = vst [vmem:[#allocation2 + $0x118] sm:$0xff] %v2902
      %3225 = vst [vmem:[#allocation2 + $0x160] sm:$0xff] %v2905
      %3226 = vst [vmem:[#allocation2 + $0x1a8] sm:$0xff] %v2907
      %3227 = vst [vmem:[#allocation2 + $0x1f0] sm:$0xff] %v2910
      %3228 = vst [vmem:[#allocation2 + $0x238] sm:$0xff] %v2912
      %3229 = vst [vmem:[#allocation2 + $0x280] sm:$0xff] %v2915
      %3230 = vst [vmem:[#allocation2 + $0x2c8] sm:$0xff] %v2917
      %3231 = vst [vmem:[#allocation2 + $0x310] sm:$0xff] %v2920
      %3232 = vst [vmem:[#allocation2 + $0x358] sm:$0xff] %v2922
      %3233 = vst [vmem:[#allocation2 + $0x3a0] sm:$0xff] %v2925
      %3234 = vst [vmem:[#allocation2 + $0x3e8] sm:$0xff] %v2927
      %3235 = vst [vmem:[#allocation2 + $0x430] sm:$0xff] %v2930
      %3236 = vst [vmem:[#allocation2 + $0x478] sm:$0xff] %v2932
      %3237 = vst [vmem:[#allocation2 + $0x4c0] sm:$0xff] %v2935
      %3238 = vst [vmem:[#allocation2 + $0x508] sm:$0xff] %v2937
      %3239 = vst [vmem:[#allocation2 + $0x550] sm:$0xff] %v2940
      %3240 = vst [vmem:[#allocation2 + $0x598] sm:$0xff] %v2942
      %3241 = vst [vmem:[#allocation2 + $0x5e0] sm:$0xff] %v2945
      %3242 = vst [vmem:[#allocation2 + $0x628] sm:$0xff] %v2947
      %3243 = vst [vmem:[#allocation2 + $0x670] sm:$0xff] %v2950
      %3244 = vst [vmem:[#allocation2 + $0x6b8] sm:$0xff] %v2952
      %3245 = vst [vmem:[#allocation2 + $0x700] sm:$0xff] %v2955
      %3246 = vst [vmem:[#allocation2 + $0x748] sm:$0xff] %v2957
      %3247 = vst [vmem:[#allocation2 + $0x790] sm:$0xff] %v2960
      %3248 = vst [vmem:[#allocation2 + $0x7d8] sm:$0xff] %v2962
      %3249 = vst [vmem:[#allocation2 + $0x820] sm:$0xff] %v3103
      %3250 = vst [vmem:[#allocation2 + $0x868] sm:$0xff] %v3105
      %3251 = vst [vmem:[#allocation2 + $0x8b0] sm:$0xff] %v3216
      %3252 = vst [vmem:[#allocation2 + $0x8f8] sm:$0xff] %v3218
      %v3253 = vld [vmem:[#allocation2] sm:$0xff]
      %v3254 = vld [vmem:[#allocation2 + $0x8] sm:$0xff]
      %v3255 = vld [vmem:[#allocation2 + $0x10] sm:$0xff]
      %v3256 = vld [vmem:[#allocation2 + $0x18] sm:$0xff]
      %v3257 = vld [vmem:[#allocation2 + $0x20] sm:$0xff]
      %v3258 = vld [vmem:[#allocation2 + $0x28] sm:$0xff]
      %v3259 = vld [vmem:[#allocation2 + $0x30] sm:$0xff]
      %v3260 = vld [vmem:[#allocation2 + $0x38] sm:$0xff]
      %v3261 = vld [vmem:[#allocation2 + $0x40] sm:$0xff]
      %v3262 = vld [vmem:[#allocation2 + $0x48] sm:$0xff]
      %v3263 = vld [vmem:[#allocation2 + $0x50] sm:$0xff]
      %v3264 = vld [vmem:[#allocation2 + $0x58] sm:$0xff]
      %v3265 = vld [vmem:[#allocation2 + $0x60] sm:$0xff]
      %v3266 = vld [vmem:[#allocation2 + $0x68] sm:$0xff]
      %v3267 = vld [vmem:[#allocation2 + $0x70] sm:$0xff]
      %v3268 = vld [vmem:[#allocation2 + $0x78] sm:$0xff]
      %v3269 = vld [vmem:[#allocation2 + $0x80] sm:$0xff]
      %v3270 = vld [vmem:[#allocation2 + $0x88] sm:$0xff]
      %v3271 = vld [vmem:[#allocation2 + $0x90] sm:$0xff]
      %v3272 = vld [vmem:[#allocation2 + $0x98] sm:$0xff]
      %v3273 = vld [vmem:[#allocation2 + $0xa0] sm:$0xff]
      %v3274 = vld [vmem:[#allocation2 + $0xa8] sm:$0xff]
      %v3275 = vld [vmem:[#allocation2 + $0xb0] sm:$0xff]
      %v3276 = vld [vmem:[#allocation2 + $0xb8] sm:$0xff]
      %v3277 = vld [vmem:[#allocation2 + $0xc0] sm:$0xff]
      %v3278 = vld [vmem:[#allocation2 + $0xc8] sm:$0xff]
      %v3279 = vld [vmem:[#allocation2 + $0xd0] sm:$0xff]
      %v3280 = vld [vmem:[#allocation2 + $0xd8] sm:$0xff]
      %v3281 = vld [vmem:[#allocation2 + $0xe0] sm:$0xff]
      %v3282 = vld [vmem:[#allocation2 + $0xe8] sm:$0xff]
      %v3283 = vld [vmem:[#allocation2 + $0xf0] sm:$0xff]
      %v3284 = vld [vmem:[#allocation2 + $0xf8] sm:$0xff]
      %v3285 = vld [vmem:[#allocation2 + $0x100] sm:$0xff]
      %v3286 = vld [vmem:[#allocation2 + $0x108] sm:$0xff]
      %v3287 = vld [vmem:[#allocation2 + $0x110] sm:$0xff]
      %v3288 = vld [vmem:[#allocation2 + $0x118] sm:$0xff]
      %v3289 = vld [vmem:[#allocation2 + $0x120] sm:$0xff]
      %v3290 = vld [vmem:[#allocation2 + $0x128] sm:$0xff]
      %v3291 = vld [vmem:[#allocation2 + $0x130] sm:$0xff]
      %v3292 = vld [vmem:[#allocation2 + $0x138] sm:$0xff]
      %v3293 = vld [vmem:[#allocation2 + $0x140] sm:$0xff]
      %v3294 = vld [vmem:[#allocation2 + $0x148] sm:$0xff]
      %v3295 = vld [vmem:[#allocation2 + $0x150] sm:$0xff]
      %v3296 = vld [vmem:[#allocation2 + $0x158] sm:$0xff]
      %v3297 = vld [vmem:[#allocation2 + $0x160] sm:$0xff]
      %v3298 = vld [vmem:[#allocation2 + $0x168] sm:$0xff]
      %v3299 = vld [vmem:[#allocation2 + $0x170] sm:$0xff]
      %v3300 = vld [vmem:[#allocation2 + $0x178] sm:$0xff]
      %v3301 = vld [vmem:[#allocation2 + $0x180] sm:$0xff]
      %v3302 = vld [vmem:[#allocation2 + $0x188] sm:$0xff]
      %v3303 = vld [vmem:[#allocation2 + $0x190] sm:$0xff]
      %v3304 = vld [vmem:[#allocation2 + $0x198] sm:$0xff]
      %v3305 = vld [vmem:[#allocation2 + $0x1a0] sm:$0xff]
      %v3306 = vld [vmem:[#allocation2 + $0x1a8] sm:$0xff]
      %v3307 = vld [vmem:[#allocation2 + $0x1b0] sm:$0xff]
      %v3308 = vld [vmem:[#allocation2 + $0x1b8] sm:$0xff]
      %v3309 = vld [vmem:[#allocation2 + $0x1c0] sm:$0xff]
      %v3310 = vld [vmem:[#allocation2 + $0x1c8] sm:$0xff]
      %v3311 = vld [vmem:[#allocation2 + $0x1d0] sm:$0xff]
      %v3312 = vld [vmem:[#allocation2 + $0x1d8] sm:$0xff]
      %v3313 = vld [vmem:[#allocation2 + $0x1e0] sm:$0xff]
      %v3314 = vld [vmem:[#allocation2 + $0x1e8] sm:$0xff]
      %v3315 = vld [vmem:[#allocation2 + $0x1f0] sm:$0xff]
      %v3316 = vld [vmem:[#allocation2 + $0x1f8] sm:$0xff]
      %v3317 = vld [vmem:[#allocation2 + $0x200] sm:$0xff]
      %v3318 = vld [vmem:[#allocation2 + $0x208] sm:$0xff]
      %v3319 = vld [vmem:[#allocation2 + $0x210] sm:$0xff]
      %v3320 = vld [vmem:[#allocation2 + $0x218] sm:$0xff]
      %v3321 = vld [vmem:[#allocation2 + $0x220] sm:$0xff]
      %v3322 = vld [vmem:[#allocation2 + $0x228] sm:$0xff]
      %v3323 = vld [vmem:[#allocation2 + $0x230] sm:$0xff]
      %v3324 = vld [vmem:[#allocation2 + $0x238] sm:$0xff]
      %v3325 = vld [vmem:[#allocation2 + $0x240] sm:$0xff]
      %v3326 = vld [vmem:[#allocation2 + $0x248] sm:$0xff]
      %v3327 = vld [vmem:[#allocation2 + $0x250] sm:$0xff]
      %v3328 = vld [vmem:[#allocation2 + $0x258] sm:$0xff]
      %v3329 = vld [vmem:[#allocation2 + $0x260] sm:$0xff]
      %v3330 = vld [vmem:[#allocation2 + $0x268] sm:$0xff]
      %v3331 = vld [vmem:[#allocation2 + $0x270] sm:$0xff]
      %v3332 = vld [vmem:[#allocation2 + $0x278] sm:$0xff]
      %v3333 = vld [vmem:[#allocation2 + $0x280] sm:$0xff]
      %v3334 = vld [vmem:[#allocation2 + $0x288] sm:$0xff]
      %v3335 = vld [vmem:[#allocation2 + $0x290] sm:$0xff]
      %v3336 = vld [vmem:[#allocation2 + $0x298] sm:$0xff]
      %v3337 = vld [vmem:[#allocation2 + $0x2a0] sm:$0xff]
      %v3338 = vld [vmem:[#allocation2 + $0x2a8] sm:$0xff]
      %v3339 = vld [vmem:[#allocation2 + $0x2b0] sm:$0xff]
      %v3340 = vld [vmem:[#allocation2 + $0x2b8] sm:$0xff]
      %v3341 = vld [vmem:[#allocation2 + $0x2c0] sm:$0xff]
      %v3342 = vld [vmem:[#allocation2 + $0x2c8] sm:$0xff]
      %v3343 = vld [vmem:[#allocation2 + $0x2d0] sm:$0xff]
      %v3344 = vld [vmem:[#allocation2 + $0x2d8] sm:$0xff]
      %v3345 = vld [vmem:[#allocation2 + $0x2e0] sm:$0xff]
      %v3346 = vld [vmem:[#allocation2 + $0x2e8] sm:$0xff]
      %v3347 = vld [vmem:[#allocation2 + $0x2f0] sm:$0xff]
      %v3348 = vld [vmem:[#allocation2 + $0x2f8] sm:$0xff]
      %v3349 = vld [vmem:[#allocation2 + $0x300] sm:$0xff]
      %v3350 = vld [vmem:[#allocation2 + $0x308] sm:$0xff]
      %v3351 = vld [vmem:[#allocation2 + $0x310] sm:$0xff]
      %v3352 = vld [vmem:[#allocation2 + $0x318] sm:$0xff]
      %v3353 = vld [vmem:[#allocation2 + $0x320] sm:$0xff]
      %v3354 = vld [vmem:[#allocation2 + $0x328] sm:$0xff]
      %v3355 = vld [vmem:[#allocation2 + $0x330] sm:$0xff]
      %v3356 = vld [vmem:[#allocation2 + $0x338] sm:$0xff]
      %v3357 = vld [vmem:[#allocation2 + $0x340] sm:$0xff]
      %v3358 = vld [vmem:[#allocation2 + $0x348] sm:$0xff]
      %v3359 = vld [vmem:[#allocation2 + $0x350] sm:$0xff]
      %v3360 = vld [vmem:[#allocation2 + $0x358] sm:$0xff]
      %v3361 = vld [vmem:[#allocation2 + $0x360] sm:$0xff]
      %v3362 = vld [vmem:[#allocation2 + $0x368] sm:$0xff]
      %v3363 = vld [vmem:[#allocation2 + $0x370] sm:$0xff]
      %v3364 = vld [vmem:[#allocation2 + $0x378] sm:$0xff]
      %v3365 = vld [vmem:[#allocation2 + $0x380] sm:$0xff]
      %v3366 = vld [vmem:[#allocation2 + $0x388] sm:$0xff]
      %v3367 = vld [vmem:[#allocation2 + $0x390] sm:$0xff]
      %v3368 = vld [vmem:[#allocation2 + $0x398] sm:$0xff]
      %v3369 = vld [vmem:[#allocation2 + $0x3a0] sm:$0xff]
      %v3370 = vld [vmem:[#allocation2 + $0x3a8] sm:$0xff]
      %v3371 = vld [vmem:[#allocation2 + $0x3b0] sm:$0xff]
      %v3372 = vld [vmem:[#allocation2 + $0x3b8] sm:$0xff]
      %v3373 = vld [vmem:[#allocation2 + $0x3c0] sm:$0xff]
      %v3374 = vld [vmem:[#allocation2 + $0x3c8] sm:$0xff]
      %v3375 = vld [vmem:[#allocation2 + $0x3d0] sm:$0xff]
      %v3376 = vld [vmem:[#allocation2 + $0x3d8] sm:$0xff]
      %v3377 = vld [vmem:[#allocation2 + $0x3e0] sm:$0xff]
      %v3378 = vld [vmem:[#allocation2 + $0x3e8] sm:$0xff]
      %v3379 = vld [vmem:[#allocation2 + $0x3f0] sm:$0xff]
      %v3380 = vld [vmem:[#allocation2 + $0x3f8] sm:$0xff]
      %v3381 = vld [vmem:[#allocation2 + $0x400] sm:$0xff]
      %v3382 = vld [vmem:[#allocation2 + $0x408] sm:$0xff]
      %v3383 = vld [vmem:[#allocation2 + $0x410] sm:$0xff]
      %v3384 = vld [vmem:[#allocation2 + $0x418] sm:$0xff]
      %v3385 = vld [vmem:[#allocation2 + $0x420] sm:$0xff]
      %v3386 = vld [vmem:[#allocation2 + $0x428] sm:$0xff]
      %v3387 = vld [vmem:[#allocation2 + $0x430] sm:$0xff]
      %v3388 = vld [vmem:[#allocation2 + $0x438] sm:$0xff]
      %v3389 = vld [vmem:[#allocation2 + $0x440] sm:$0xff]
      %v3390 = vld [vmem:[#allocation2 + $0x448] sm:$0xff]
      %v3391 = vld [vmem:[#allocation2 + $0x450] sm:$0xff]
      %v3392 = vld [vmem:[#allocation2 + $0x458] sm:$0xff]
      %v3393 = vld [vmem:[#allocation2 + $0x460] sm:$0xff]
      %v3394 = vld [vmem:[#allocation2 + $0x468] sm:$0xff]
      %v3395 = vld [vmem:[#allocation2 + $0x470] sm:$0xff]
      %v3396 = vld [vmem:[#allocation2 + $0x478] sm:$0xff]
      %v3397 = vld [vmem:[#allocation2 + $0x480] sm:$0xff]
      %v3398 = vld [vmem:[#allocation2 + $0x488] sm:$0xff]
      %v3399 = vld [vmem:[#allocation2 + $0x490] sm:$0xff]
      %v3400 = vld [vmem:[#allocation2 + $0x498] sm:$0xff]
      %v3401 = vld [vmem:[#allocation2 + $0x4a0] sm:$0xff]
      %v3402 = vld [vmem:[#allocation2 + $0x4a8] sm:$0xff]
      %v3403 = vld [vmem:[#allocation2 + $0x4b0] sm:$0xff]
      %v3404 = vld [vmem:[#allocation2 + $0x4b8] sm:$0xff]
      %v3405 = vld [vmem:[#allocation2 + $0x4c0] sm:$0xff]
      %v3406 = vld [vmem:[#allocation2 + $0x4c8] sm:$0xff]
      %v3407 = vld [vmem:[#allocation2 + $0x4d0] sm:$0xff]
      %v3408 = vld [vmem:[#allocation2 + $0x4d8] sm:$0xff]
      %v3409 = vld [vmem:[#allocation2 + $0x4e0] sm:$0xff]
      %v3410 = vld [vmem:[#allocation2 + $0x4e8] sm:$0xff]
      %v3411 = vld [vmem:[#allocation2 + $0x4f0] sm:$0xff]
      %v3412 = vld [vmem:[#allocation2 + $0x4f8] sm:$0xff]
      %v3413 = vld [vmem:[#allocation2 + $0x500] sm:$0xff]
      %v3414 = vld [vmem:[#allocation2 + $0x508] sm:$0xff]
      %v3415 = vld [vmem:[#allocation2 + $0x510] sm:$0xff]
      %v3416 = vld [vmem:[#allocation2 + $0x518] sm:$0xff]
      %v3417 = vld [vmem:[#allocation2 + $0x520] sm:$0xff]
      %v3418 = vld [vmem:[#allocation2 + $0x528] sm:$0xff]
      %v3419 = vld [vmem:[#allocation2 + $0x530] sm:$0xff]
      %v3420 = vld [vmem:[#allocation2 + $0x538] sm:$0xff]
      %v3421 = vld [vmem:[#allocation2 + $0x540] sm:$0xff]
      %v3422 = vld [vmem:[#allocation2 + $0x548] sm:$0xff]
      %v3423 = vld [vmem:[#allocation2 + $0x550] sm:$0xff]
      %v3424 = vld [vmem:[#allocation2 + $0x558] sm:$0xff]
      %v3425 = vld [vmem:[#allocation2 + $0x560] sm:$0xff]
      %v3426 = vld [vmem:[#allocation2 + $0x568] sm:$0xff]
      %v3427 = vld [vmem:[#allocation2 + $0x570] sm:$0xff]
      %v3428 = vld [vmem:[#allocation2 + $0x578] sm:$0xff]
      %v3429 = vld [vmem:[#allocation2 + $0x580] sm:$0xff]
      %v3430 = vld [vmem:[#allocation2 + $0x588] sm:$0xff]
      %v3431 = vld [vmem:[#allocation2 + $0x590] sm:$0xff]
      %v3432 = vld [vmem:[#allocation2 + $0x598] sm:$0xff]
      %v3433 = vld [vmem:[#allocation2 + $0x5a0] sm:$0xff]
      %v3434 = vld [vmem:[#allocation2 + $0x5a8] sm:$0xff]
      %v3435 = vld [vmem:[#allocation2 + $0x5b0] sm:$0xff]
      %v3436 = vld [vmem:[#allocation2 + $0x5b8] sm:$0xff]
      %v3437 = vld [vmem:[#allocation2 + $0x5c0] sm:$0xff]
      %v3438 = vld [vmem:[#allocation2 + $0x5c8] sm:$0xff]
      %v3439 = vld [vmem:[#allocation2 + $0x5d0] sm:$0xff]
      %v3440 = vld [vmem:[#allocation2 + $0x5d8] sm:$0xff]
      %v3441 = vld [vmem:[#allocation2 + $0x5e0] sm:$0xff]
      %v3442 = vld [vmem:[#allocation2 + $0x5e8] sm:$0xff]
      %v3443 = vld [vmem:[#allocation2 + $0x5f0] sm:$0xff]
      %v3444 = vld [vmem:[#allocation2 + $0x5f8] sm:$0xff]
      %v3445 = vld [vmem:[#allocation2 + $0x600] sm:$0xff]
      %v3446 = vld [vmem:[#allocation2 + $0x608] sm:$0xff]
      %v3447 = vld [vmem:[#allocation2 + $0x610] sm:$0xff]
      %v3448 = vld [vmem:[#allocation2 + $0x618] sm:$0xff]
      %v3449 = vld [vmem:[#allocation2 + $0x620] sm:$0xff]
      %v3450 = vld [vmem:[#allocation2 + $0x628] sm:$0xff]
      %v3451 = vld [vmem:[#allocation2 + $0x630] sm:$0xff]
      %v3452 = vld [vmem:[#allocation2 + $0x638] sm:$0xff]
      %v3453 = vld [vmem:[#allocation2 + $0x640] sm:$0xff]
      %v3454 = vld [vmem:[#allocation2 + $0x648] sm:$0xff]
      %v3455 = vld [vmem:[#allocation2 + $0x650] sm:$0xff]
      %v3456 = vld [vmem:[#allocation2 + $0x658] sm:$0xff]
      %v3457 = vld [vmem:[#allocation2 + $0x660] sm:$0xff]
      %v3458 = vld [vmem:[#allocation2 + $0x668] sm:$0xff]
      %v3459 = vld [vmem:[#allocation2 + $0x670] sm:$0xff]
      %v3460 = vld [vmem:[#allocation2 + $0x678] sm:$0xff]
      %v3461 = vld [vmem:[#allocation2 + $0x680] sm:$0xff]
      %v3462 = vld [vmem:[#allocation2 + $0x688] sm:$0xff]
      %v3463 = vld [vmem:[#allocation2 + $0x690] sm:$0xff]
      %v3464 = vld [vmem:[#allocation2 + $0x698] sm:$0xff]
      %v3465 = vld [vmem:[#allocation2 + $0x6a0] sm:$0xff]
      %v3466 = vld [vmem:[#allocation2 + $0x6a8] sm:$0xff]
      %v3467 = vld [vmem:[#allocation2 + $0x6b0] sm:$0xff]
      %v3468 = vld [vmem:[#allocation2 + $0x6b8] sm:$0xff]
      %v3469 = vld [vmem:[#allocation2 + $0x6c0] sm:$0xff]
      %v3470 = vld [vmem:[#allocation2 + $0x6c8] sm:$0xff]
      %v3471 = vld [vmem:[#allocation2 + $0x6d0] sm:$0xff]
      %v3472 = vld [vmem:[#allocation2 + $0x6d8] sm:$0xff]
      %v3473 = vld [vmem:[#allocation2 + $0x6e0] sm:$0xff]
      %v3474 = vld [vmem:[#allocation2 + $0x6e8] sm:$0xff]
      %v3475 = vld [vmem:[#allocation2 + $0x6f0] sm:$0xff]
      %v3476 = vld [vmem:[#allocation2 + $0x6f8] sm:$0xff]
      %v3477 = vld [vmem:[#allocation2 + $0x700] sm:$0xff]
      %v3478 = vld [vmem:[#allocation2 + $0x708] sm:$0xff]
      %v3479 = vld [vmem:[#allocation2 + $0x710] sm:$0xff]
      %v3480 = vld [vmem:[#allocation2 + $0x718] sm:$0xff]
      %v3481 = vld [vmem:[#allocation2 + $0x720] sm:$0xff]
      %v3482 = vld [vmem:[#allocation2 + $0x728] sm:$0xff]
      %v3483 = vld [vmem:[#allocation2 + $0x730] sm:$0xff]
      %v3484 = vld [vmem:[#allocation2 + $0x738] sm:$0xff]
      %v3485 = vld [vmem:[#allocation2 + $0x740] sm:$0xff]
      %v3486 = vld [vmem:[#allocation2 + $0x748] sm:$0xff]
      %v3487 = vld [vmem:[#allocation2 + $0x750] sm:$0xff]
      %v3488 = vld [vmem:[#allocation2 + $0x758] sm:$0xff]
      %v3489 = vld [vmem:[#allocation2 + $0x760] sm:$0xff]
      %v3490 = vld [vmem:[#allocation2 + $0x768] sm:$0xff]
      %v3491 = vld [vmem:[#allocation2 + $0x770] sm:$0xff]
      %v3492 = vld [vmem:[#allocation2 + $0x778] sm:$0xff]
      %v3493 = vld [vmem:[#allocation2 + $0x780] sm:$0xff]
      %v3494 = vld [vmem:[#allocation2 + $0x788] sm:$0xff]
      %v3495 = vld [vmem:[#allocation2 + $0x790] sm:$0xff]
      %v3496 = vld [vmem:[#allocation2 + $0x798] sm:$0xff]
      %v3497 = vld [vmem:[#allocation2 + $0x7a0] sm:$0xff]
      %v3498 = vld [vmem:[#allocation2 + $0x7a8] sm:$0xff]
      %v3499 = vld [vmem:[#allocation2 + $0x7b0] sm:$0xff]
      %v3500 = vld [vmem:[#allocation2 + $0x7b8] sm:$0xff]
      %v3501 = vld [vmem:[#allocation2 + $0x7c0] sm:$0xff]
      %v3502 = vld [vmem:[#allocation2 + $0x7c8] sm:$0xff]
      %v3503 = vld [vmem:[#allocation2 + $0x7d0] sm:$0xff]
      %v3504 = vld [vmem:[#allocation2 + $0x7d8] sm:$0xff]
      %v3505 = vld [vmem:[#allocation2 + $0x7e0] sm:$0xff]
      %v3506 = vld [vmem:[#allocation2 + $0x7e8] sm:$0xff]
      %v3507 = vld [vmem:[#allocation2 + $0x7f0] sm:$0xff]
      %v3508 = vld [vmem:[#allocation2 + $0x7f8] sm:$0xff]
      %v3509 = vld [vmem:[#allocation2 + $0x800] sm:$0xff]
      %v3510 = vld [vmem:[#allocation2 + $0x808] sm:$0xff]
      %v3511 = vld [vmem:[#allocation2 + $0x810] sm:$0xff]
      %v3512 = vld [vmem:[#allocation2 + $0x818] sm:$0xff]
      %v3513 = vld [vmem:[#allocation2 + $0x820] sm:$0xff]
      %v3514 = vld [vmem:[#allocation2 + $0x828] sm:$0xff]
      %v3515 = vld [vmem:[#allocation2 + $0x830] sm:$0xff]
      %v3516 = vld [vmem:[#allocation2 + $0x838] sm:$0xff]
      %v3517 = vld [vmem:[#allocation2 + $0x840] sm:$0xff]
      %v3518 = vld [vmem:[#allocation2 + $0x848] sm:$0xff]
      %v3519 = vld [vmem:[#allocation2 + $0x850] sm:$0xff]
      %v3520 = vld [vmem:[#allocation2 + $0x858] sm:$0xff]
      %v3521 = vld [vmem:[#allocation2 + $0x860] sm:$0xff]
      %v3522 = vld [vmem:[#allocation2 + $0x868] sm:$0xff]
      %v3523 = vld [vmem:[#allocation2 + $0x870] sm:$0xff]
      %v3524 = vld [vmem:[#allocation2 + $0x878] sm:$0xff]
      %v3525 = vld [vmem:[#allocation2 + $0x880] sm:$0xff]
      %v3526 = vld [vmem:[#allocation2 + $0x888] sm:$0xff]
      %v3527 = vld [vmem:[#allocation2 + $0x890] sm:$0xff]
      %v3528 = vld [vmem:[#allocation2 + $0x898] sm:$0xff]
      %v3529 = vld [vmem:[#allocation2 + $0x8a0] sm:$0xff]
      %v3530 = vld [vmem:[#allocation2 + $0x8a8] sm:$0xff]
      %v3531 = vld [vmem:[#allocation2 + $0x8b0] sm:$0xff]
      %v3532 = vld [vmem:[#allocation2 + $0x8b8] sm:$0xff]
      %v3533 = vld [vmem:[#allocation2 + $0x8c0] sm:$0xff]
      %v3534 = vld [vmem:[#allocation2 + $0x8c8] sm:$0xff]
      %v3535 = vld [vmem:[#allocation2 + $0x8d0] sm:$0xff]
      %v3536 = vld [vmem:[#allocation2 + $0x8d8] sm:$0xff]
      %v3537 = vld [vmem:[#allocation2 + $0x8e0] sm:$0xff]
      %v3538 = vld [vmem:[#allocation2 + $0x8e8] sm:$0xff]
      %v3539 = vld [vmem:[#allocation2 + $0x8f0] sm:$0xff]
      %v3540 = vld [vmem:[#allocation2 + $0x8f8] sm:$0xff]
      %v3541 = vld [vmem:[%s5] sm:$0xff]
      %v3542 = vld [vmem:[%s5 + $0x8] sm:$0xff]
      %v3543 = vld [vmem:[%s5 + $0x10] sm:$0xff]
      %v3544 = vld [vmem:[%s5 + $0x18] sm:$0xff]
      %v3545 = vld [vmem:[%s5 + $0x20] sm:$0xff]
      %v3546 = vld [vmem:[%s5 + $0x28] sm:$0xff]
      %v3547 = vld [vmem:[%s5 + $0x30] sm:$0xff]
      %v3548 = vld [vmem:[%s5 + $0x38] sm:$0xff]
      %v3549 = vld [vmem:[%s5 + $0x40] sm:$0xff]
      %v3550 = vld [vmem:[%s5 + $0x48] sm:$0xff]
      %v3551 = vld [vmem:[%s5 + $0x50] sm:$0xff]
      %v3552 = vld [vmem:[%s5 + $0x58] sm:$0xff]
      %v3553 = vld [vmem:[%s5 + $0x60] sm:$0xff]
      %v3554 = vld [vmem:[%s5 + $0x68] sm:$0xff]
      %v3555 = vld [vmem:[%s5 + $0x70] sm:$0xff]
      %v3556 = vld [vmem:[%s5 + $0x78] sm:$0xff]
      %v3557 = vld [vmem:[%s5 + $0x80] sm:$0xff]
      %v3558 = vld [vmem:[%s5 + $0x88] sm:$0xff]
      %v3559 = vld [vmem:[%s5 + $0x90] sm:$0xff]
      %v3560 = vld [vmem:[%s5 + $0x98] sm:$0xff]
      %v3561 = vld [vmem:[%s5 + $0xa0] sm:$0xff]
      %v3562 = vld [vmem:[%s5 + $0xa8] sm:$0xff]
      %v3563 = vld [vmem:[%s5 + $0xb0] sm:$0xff]
      %v3564 = vld [vmem:[%s5 + $0xb8] sm:$0xff]
      %v3565 = vld [vmem:[%s5 + $0xc0] sm:$0xff]
      %v3566 = vld [vmem:[%s5 + $0xc8] sm:$0xff]
      %v3567 = vld [vmem:[%s5 + $0xd0] sm:$0xff]
      %v3568 = vld [vmem:[%s5 + $0xd8] sm:$0xff]
      %v3569 = vld [vmem:[%s5 + $0xe0] sm:$0xff]
      %v3570 = vld [vmem:[%s5 + $0xe8] sm:$0xff]
      %v3571 = vld [vmem:[%s5 + $0xf0] sm:$0xff]
      %v3572 = vld [vmem:[%s5 + $0xf8] sm:$0xff]
      %v3573 = vld [vmem:[%s5 + $0x100] sm:$0xff]
      %v3574 = vld [vmem:[%s5 + $0x108] sm:$0xff]
      %v3575 = vld [vmem:[%s5 + $0x110] sm:$0xff]
      %v3576 = vld [vmem:[%s5 + $0x118] sm:$0xff]
      %v3577 = vld [vmem:[%s5 + $0x120] sm:$0xff]
      %v3578 = vld [vmem:[%s5 + $0x128] sm:$0xff]
      %v3579 = vld [vmem:[%s5 + $0x130] sm:$0xff]
      %v3580 = vld [vmem:[%s5 + $0x138] sm:$0xff]
      %v3581 = vld [vmem:[%s5 + $0x140] sm:$0xff]
      %v3582 = vld [vmem:[%s5 + $0x148] sm:$0xff]
      %v3583 = vld [vmem:[%s5 + $0x150] sm:$0xff]
      %v3584 = vld [vmem:[%s5 + $0x158] sm:$0xff]
      %v3585 = vld [vmem:[%s5 + $0x160] sm:$0xff]
      %v3586 = vld [vmem:[%s5 + $0x168] sm:$0xff]
      %v3587 = vld [vmem:[%s5 + $0x170] sm:$0xff]
      %v3588 = vld [vmem:[%s5 + $0x178] sm:$0xff]
      %v3589 = vld [vmem:[%s5 + $0x180] sm:$0xff]
      %v3590 = vld [vmem:[%s5 + $0x188] sm:$0xff]
      %v3591 = vld [vmem:[%s5 + $0x190] sm:$0xff]
      %v3592 = vld [vmem:[%s5 + $0x198] sm:$0xff]
      %v3593 = vld [vmem:[%s5 + $0x1a0] sm:$0xff]
      %v3594 = vld [vmem:[%s5 + $0x1a8] sm:$0xff]
      %v3595 = vld [vmem:[%s5 + $0x1b0] sm:$0xff]
      %v3596 = vld [vmem:[%s5 + $0x1b8] sm:$0xff]
      %v3597 = vld [vmem:[%s5 + $0x1c0] sm:$0xff]
      %v3598 = vld [vmem:[%s5 + $0x1c8] sm:$0xff]
      %v3599 = vld [vmem:[%s5 + $0x1d0] sm:$0xff]
      %v3600 = vld [vmem:[%s5 + $0x1d8] sm:$0xff]
      %v3601 = vld [vmem:[%s5 + $0x1e0] sm:$0xff]
      %v3602 = vld [vmem:[%s5 + $0x1e8] sm:$0xff]
      %v3603 = vld [vmem:[%s5 + $0x1f0] sm:$0xff]
      %v3604 = vld [vmem:[%s5 + $0x1f8] sm:$0xff]
      %v3605 = vld [vmem:[%s5 + $0x200] sm:$0xff]
      %v3606 = vld [vmem:[%s5 + $0x208] sm:$0xff]
      %v3607 = vld [vmem:[%s5 + $0x210] sm:$0xff]
      %v3608 = vld [vmem:[%s5 + $0x218] sm:$0xff]
      %v3609 = vld [vmem:[%s5 + $0x220] sm:$0xff]
      %v3610 = vld [vmem:[%s5 + $0x228] sm:$0xff]
      %v3611 = vld [vmem:[%s5 + $0x230] sm:$0xff]
      %v3612 = vld [vmem:[%s5 + $0x238] sm:$0xff]
      %v3613 = vld [vmem:[%s5 + $0x240] sm:$0xff]
      %v3614 = vld [vmem:[%s5 + $0x248] sm:$0xff]
      %v3615 = vld [vmem:[%s5 + $0x250] sm:$0xff]
      %v3616 = vld [vmem:[%s5 + $0x258] sm:$0xff]
      %v3617 = vld [vmem:[%s5 + $0x260] sm:$0xff]
      %v3618 = vld [vmem:[%s5 + $0x268] sm:$0xff]
      %v3619 = vld [vmem:[%s5 + $0x270] sm:$0xff]
      %v3620 = vld [vmem:[%s5 + $0x278] sm:$0xff]
      %v3621 = vld [vmem:[%s5 + $0x280] sm:$0xff]
      %v3622 = vld [vmem:[%s5 + $0x288] sm:$0xff]
      %v3623 = vld [vmem:[%s5 + $0x290] sm:$0xff]
      %v3624 = vld [vmem:[%s5 + $0x298] sm:$0xff]
      %v3625 = vld [vmem:[%s5 + $0x2a0] sm:$0xff]
      %v3626 = vld [vmem:[%s5 + $0x2a8] sm:$0xff]
      %v3627 = vld [vmem:[%s5 + $0x2b0] sm:$0xff]
      %v3628 = vld [vmem:[%s5 + $0x2b8] sm:$0xff]
      %v3629 = vld [vmem:[%s5 + $0x2c0] sm:$0xff]
      %v3630 = vld [vmem:[%s5 + $0x2c8] sm:$0xff]
      %v3631 = vld [vmem:[%s5 + $0x2d0] sm:$0xff]
      %v3632 = vld [vmem:[%s5 + $0x2d8] sm:$0xff]
      %v3633 = vld [vmem:[%s5 + $0x2e0] sm:$0xff]
      %v3634 = vld [vmem:[%s5 + $0x2e8] sm:$0xff]
      %v3635 = vld [vmem:[%s5 + $0x2f0] sm:$0xff]
      %v3636 = vld [vmem:[%s5 + $0x2f8] sm:$0xff]
      %v3637 = vld [vmem:[%s5 + $0x300] sm:$0xff]
      %v3638 = vld [vmem:[%s5 + $0x308] sm:$0xff]
      %v3639 = vld [vmem:[%s5 + $0x310] sm:$0xff]
      %v3640 = vld [vmem:[%s5 + $0x318] sm:$0xff]
      %v3641 = vld [vmem:[%s5 + $0x320] sm:$0xff]
      %v3642 = vld [vmem:[%s5 + $0x328] sm:$0xff]
      %v3643 = vld [vmem:[%s5 + $0x330] sm:$0xff]
      %v3644 = vld [vmem:[%s5 + $0x338] sm:$0xff]
      %v3645 = vld [vmem:[%s5 + $0x340] sm:$0xff]
      %v3646 = vld [vmem:[%s5 + $0x348] sm:$0xff]
      %v3647 = vld [vmem:[%s5 + $0x350] sm:$0xff]
      %v3648 = vld [vmem:[%s5 + $0x358] sm:$0xff]
      %v3649 = vld [vmem:[%s5 + $0x360] sm:$0xff]
      %v3650 = vld [vmem:[%s5 + $0x368] sm:$0xff]
      %v3651 = vld [vmem:[%s5 + $0x370] sm:$0xff]
      %v3652 = vld [vmem:[%s5 + $0x378] sm:$0xff]
      %v3653 = vld [vmem:[%s5 + $0x380] sm:$0xff]
      %v3654 = vld [vmem:[%s5 + $0x388] sm:$0xff]
      %v3655 = vld [vmem:[%s5 + $0x390] sm:$0xff]
      %v3656 = vld [vmem:[%s5 + $0x398] sm:$0xff]
      %v3657 = vld [vmem:[%s5 + $0x3a0] sm:$0xff]
      %v3658 = vld [vmem:[%s5 + $0x3a8] sm:$0xff]
      %v3659 = vld [vmem:[%s5 + $0x3b0] sm:$0xff]
      %v3660 = vld [vmem:[%s5 + $0x3b8] sm:$0xff]
      %v3661 = vld [vmem:[%s5 + $0x3c0] sm:$0xff]
      %v3662 = vld [vmem:[%s5 + $0x3c8] sm:$0xff]
      %v3663 = vld [vmem:[%s5 + $0x3d0] sm:$0xff]
      %v3664 = vld [vmem:[%s5 + $0x3d8] sm:$0xff]
      %v3665 = vld [vmem:[%s5 + $0x3e0] sm:$0xff]
      %v3666 = vld [vmem:[%s5 + $0x3e8] sm:$0xff]
      %v3667 = vld [vmem:[%s5 + $0x3f0] sm:$0xff]
      %v3668 = vld [vmem:[%s5 + $0x3f8] sm:$0xff]
      %v3669 = vld [vmem:[%s5 + $0x400] sm:$0xff]
      %v3670 = vld [vmem:[%s5 + $0x408] sm:$0xff]
      %v3671 = vld [vmem:[%s5 + $0x410] sm:$0xff]
      %v3672 = vld [vmem:[%s5 + $0x418] sm:$0xff]
      %v3673 = vld [vmem:[%s5 + $0x420] sm:$0xff]
      %v3674 = vld [vmem:[%s5 + $0x428] sm:$0xff]
      %v3675 = vld [vmem:[%s5 + $0x430] sm:$0xff]
      %v3676 = vld [vmem:[%s5 + $0x438] sm:$0xff]
      %v3677 = vld [vmem:[%s5 + $0x440] sm:$0xff]
      %v3678 = vld [vmem:[%s5 + $0x448] sm:$0xff]
      %v3679 = vld [vmem:[%s5 + $0x450] sm:$0xff]
      %v3680 = vld [vmem:[%s5 + $0x458] sm:$0xff]
      %v3681 = vld [vmem:[%s5 + $0x460] sm:$0xff]
      %v3682 = vld [vmem:[%s5 + $0x468] sm:$0xff]
      %v3683 = vld [vmem:[%s5 + $0x470] sm:$0xff]
      %v3684 = vld [vmem:[%s5 + $0x478] sm:$0xff]
      %3685 = vmatpush.msra.mxu0 %v3556
      %3686 = vmatpush.msra.mxu0 %v3555
      %3687 = vmatpush.msra.mxu0 %v3554
      %3688 = vmatpush.msra.mxu0 %v3553
      %3689 = vmatpush.msra.mxu0 %v3552
      %3690 = vmatpush.msra.mxu0 %v3551
      %3691 = vmatpush.msra.mxu0 %v3550
      %3692 = vmatpush.msra.mxu0 %v3549
      %3693 = vmatpush.msra.mxu0 %v3548
      %3694 = vmatpush.msra.mxu0 %v3547
      %3695 = vmatpush.msra.mxu0 %v3546
      %3696 = vmatpush.msra.mxu0 %v3545
      %3697 = vmatpush.msra.mxu0 %v3544
      %3698 = vmatpush.msra.mxu0 %v3543
      %3699 = vmatpush.msra.mxu0 %v3542
      %3700 = vmatpush.msra.mxu0 %v3541
      %3701 = vmatmul.f32.gmra.mxu0 %v3253
      %v3702 = vpop.f32.mrf.mxu0
      %v3703 = vadd.f32 0.0, %v3702
      %3704 = vmatmul.f32.gmra.mxu0 %v3262
      %v3705 = vpop.f32.mrf.mxu0
      %v3706 = vadd.f32 0.0, %v3705
      %3707 = vmatmul.f32.gmra.mxu0 %v3271
      %v3708 = vpop.f32.mrf.mxu0
      %v3709 = vadd.f32 0.0, %v3708
      %3710 = vmatmul.f32.gmra.mxu0 %v3280
      %v3711 = vpop.f32.mrf.mxu0
      %v3712 = vadd.f32 0.0, %v3711
      %3713 = vmatmul.f32.gmra.mxu0 %v3289
      %v3714 = vpop.f32.mrf.mxu0
      %v3715 = vadd.f32 0.0, %v3714
      %3716 = vmatmul.f32.gmra.mxu0 %v3298
      %v3717 = vpop.f32.mrf.mxu0
      %v3718 = vadd.f32 0.0, %v3717
      %3719 = vmatmul.f32.gmra.mxu0 %v3307
      %v3720 = vpop.f32.mrf.mxu0
      %v3721 = vadd.f32 0.0, %v3720
      %3722 = vmatmul.f32.gmra.mxu0 %v3316
      %v3723 = vpop.f32.mrf.mxu0
      %v3724 = vadd.f32 0.0, %v3723
      %3725 = vmatmul.f32.gmra.mxu0 %v3325
      %v3726 = vpop.f32.mrf.mxu0
      %v3727 = vadd.f32 0.0, %v3726
      %3728 = vmatmul.f32.gmra.mxu0 %v3334
      %v3729 = vpop.f32.mrf.mxu0
      %v3730 = vadd.f32 0.0, %v3729
      %3731 = vmatmul.f32.gmra.mxu0 %v3343
      %v3732 = vpop.f32.mrf.mxu0
      %v3733 = vadd.f32 0.0, %v3732
      %3734 = vmatmul.f32.gmra.mxu0 %v3352
      %v3735 = vpop.f32.mrf.mxu0
      %v3736 = vadd.f32 0.0, %v3735
      %3737 = vmatmul.f32.gmra.mxu0 %v3361
      %v3738 = vpop.f32.mrf.mxu0
      %v3739 = vadd.f32 0.0, %v3738
      %3740 = vmatmul.f32.gmra.mxu0 %v3370
      %v3741 = vpop.f32.mrf.mxu0
      %v3742 = vadd.f32 0.0, %v3741
      %3743 = vmatmul.f32.gmra.mxu0 %v3379
      %v3744 = vpop.f32.mrf.mxu0
      %v3745 = vadd.f32 0.0, %v3744
      %3746 = vmatmul.f32.gmra.mxu0 %v3388
      %v3747 = vpop.f32.mrf.mxu0
      %v3748 = vadd.f32 0.0, %v3747
      %3749 = vmatmul.f32.gmra.mxu0 %v3397
      %v3750 = vpop.f32.mrf.mxu0
      %v3751 = vadd.f32 0.0, %v3750
      %3752 = vmatmul.f32.gmra.mxu0 %v3406
      %v3753 = vpop.f32.mrf.mxu0
      %v3754 = vadd.f32 0.0, %v3753
      %3755 = vmatmul.f32.gmra.mxu0 %v3415
      %v3756 = vpop.f32.mrf.mxu0
      %v3757 = vadd.f32 0.0, %v3756
      %3758 = vmatmul.f32.gmra.mxu0 %v3424
      %v3759 = vpop.f32.mrf.mxu0
      %v3760 = vadd.f32 0.0, %v3759
      %3761 = vmatmul.f32.gmra.mxu0 %v3433
      %v3762 = vpop.f32.mrf.mxu0
      %v3763 = vadd.f32 0.0, %v3762
      %3764 = vmatmul.f32.gmra.mxu0 %v3442
      %v3765 = vpop.f32.mrf.mxu0
      %v3766 = vadd.f32 0.0, %v3765
      %3767 = vmatmul.f32.gmra.mxu0 %v3451
      %v3768 = vpop.f32.mrf.mxu0
      %v3769 = vadd.f32 0.0, %v3768
      %3770 = vmatmul.f32.gmra.mxu0 %v3460
      %v3771 = vpop.f32.mrf.mxu0
      %v3772 = vadd.f32 0.0, %v3771
      %3773 = vmatmul.f32.gmra.mxu0 %v3469
      %v3774 = vpop.f32.mrf.mxu0
      %v3775 = vadd.f32 0.0, %v3774
      %3776 = vmatmul.f32.gmra.mxu0 %v3478
      %v3777 = vpop.f32.mrf.mxu0
      %v3778 = vadd.f32 0.0, %v3777
      %3779 = vmatmul.f32.gmra.mxu0 %v3487
      %v3780 = vpop.f32.mrf.mxu0
      %v3781 = vadd.f32 0.0, %v3780
      %3782 = vmatmul.f32.gmra.mxu0 %v3496
      %v3783 = vpop.f32.mrf.mxu0
      %v3784 = vadd.f32 0.0, %v3783
      %3785 = vmatmul.f32.gmra.mxu0 %v3505
      %v3786 = vpop.f32.mrf.mxu0
      %v3787 = vadd.f32 0.0, %v3786
      %3788 = vmatmul.f32.gmra.mxu0 %v3514
      %v3789 = vpop.f32.mrf.mxu0
      %v3790 = vadd.f32 0.0, %v3789
      %3791 = vmatmul.f32.gmra.mxu0 %v3523
      %v3792 = vpop.f32.mrf.mxu0
      %v3793 = vadd.f32 0.0, %v3792
      %3794 = vmatmul.f32.gmra.mxu0 %v3532
      %v3795 = vpop.f32.mrf.mxu0
      %v3796 = vadd.f32 0.0, %v3795
      %3797 = vdwg.mxu0
      %3798 = vmatpush.msra.mxu0 %v3572
      %3799 = vmatpush.msra.mxu0 %v3571
      %3800 = vmatpush.msra.mxu0 %v3570
      %3801 = vmatpush.msra.mxu0 %v3569
      %3802 = vmatpush.msra.mxu0 %v3568
      %3803 = vmatpush.msra.mxu0 %v3567
      %3804 = vmatpush.msra.mxu0 %v3566
      %3805 = vmatpush.msra.mxu0 %v3565
      %3806 = vmatpush.msra.mxu0 %v3564
      %3807 = vmatpush.msra.mxu0 %v3563
      %3808 = vmatpush.msra.mxu0 %v3562
      %3809 = vmatpush.msra.mxu0 %v3561
      %3810 = vmatpush.msra.mxu0 %v3560
      %3811 = vmatpush.msra.mxu0 %v3559
      %3812 = vmatpush.msra.mxu0 %v3558
      %3813 = vmatpush.msra.mxu0 %v3557
      %3814 = vmatmul.f32.gmra.mxu0 %v3254
      %v3815 = vpop.f32.mrf.mxu0
      %v3816 = vadd.f32 %v3703, %v3815
      %3817 = vmatmul.f32.gmra.mxu0 %v3263
      %v3818 = vpop.f32.mrf.mxu0
      %v3819 = vadd.f32 %v3706, %v3818
      %3820 = vmatmul.f32.gmra.mxu0 %v3272
      %v3821 = vpop.f32.mrf.mxu0
      %v3822 = vadd.f32 %v3709, %v3821
      %3823 = vmatmul.f32.gmra.mxu0 %v3281
      %v3824 = vpop.f32.mrf.mxu0
      %v3825 = vadd.f32 %v3712, %v3824
      %3826 = vmatmul.f32.gmra.mxu0 %v3290
      %v3827 = vpop.f32.mrf.mxu0
      %v3828 = vadd.f32 %v3715, %v3827
      %3829 = vmatmul.f32.gmra.mxu0 %v3299
      %v3830 = vpop.f32.mrf.mxu0
      %v3831 = vadd.f32 %v3718, %v3830
      %3832 = vmatmul.f32.gmra.mxu0 %v3308
      %v3833 = vpop.f32.mrf.mxu0
      %v3834 = vadd.f32 %v3721, %v3833
      %3835 = vmatmul.f32.gmra.mxu0 %v3317
      %v3836 = vpop.f32.mrf.mxu0
      %v3837 = vadd.f32 %v3724, %v3836
      %3838 = vmatmul.f32.gmra.mxu0 %v3326
      %v3839 = vpop.f32.mrf.mxu0
      %v3840 = vadd.f32 %v3727, %v3839
      %3841 = vmatmul.f32.gmra.mxu0 %v3335
      %v3842 = vpop.f32.mrf.mxu0
      %v3843 = vadd.f32 %v3730, %v3842
      %3844 = vmatmul.f32.gmra.mxu0 %v3344
      %v3845 = vpop.f32.mrf.mxu0
      %v3846 = vadd.f32 %v3733, %v3845
      %3847 = vmatmul.f32.gmra.mxu0 %v3353
      %v3848 = vpop.f32.mrf.mxu0
      %v3849 = vadd.f32 %v3736, %v3848
      %3850 = vmatmul.f32.gmra.mxu0 %v3362
      %v3851 = vpop.f32.mrf.mxu0
      %v3852 = vadd.f32 %v3739, %v3851
      %3853 = vmatmul.f32.gmra.mxu0 %v3371
      %v3854 = vpop.f32.mrf.mxu0
      %v3855 = vadd.f32 %v3742, %v3854
      %3856 = vmatmul.f32.gmra.mxu0 %v3380
      %v3857 = vpop.f32.mrf.mxu0
      %v3858 = vadd.f32 %v3745, %v3857
      %3859 = vmatmul.f32.gmra.mxu0 %v3389
      %v3860 = vpop.f32.mrf.mxu0
      %v3861 = vadd.f32 %v3748, %v3860
      %3862 = vmatmul.f32.gmra.mxu0 %v3398
      %v3863 = vpop.f32.mrf.mxu0
      %v3864 = vadd.f32 %v3751, %v3863
      %3865 = vmatmul.f32.gmra.mxu0 %v3407
      %v3866 = vpop.f32.mrf.mxu0
      %v3867 = vadd.f32 %v3754, %v3866
      %3868 = vmatmul.f32.gmra.mxu0 %v3416
      %v3869 = vpop.f32.mrf.mxu0
      %v3870 = vadd.f32 %v3757, %v3869
      %3871 = vmatmul.f32.gmra.mxu0 %v3425
      %v3872 = vpop.f32.mrf.mxu0
      %v3873 = vadd.f32 %v3760, %v3872
      %3874 = vmatmul.f32.gmra.mxu0 %v3434
      %v3875 = vpop.f32.mrf.mxu0
      %v3876 = vadd.f32 %v3763, %v3875
      %3877 = vmatmul.f32.gmra.mxu0 %v3443
      %v3878 = vpop.f32.mrf.mxu0
      %v3879 = vadd.f32 %v3766, %v3878
      %3880 = vmatmul.f32.gmra.mxu0 %v3452
      %v3881 = vpop.f32.mrf.mxu0
      %v3882 = vadd.f32 %v3769, %v3881
      %3883 = vmatmul.f32.gmra.mxu0 %v3461
      %v3884 = vpop.f32.mrf.mxu0
      %v3885 = vadd.f32 %v3772, %v3884
      %3886 = vmatmul.f32.gmra.mxu0 %v3470
      %v3887 = vpop.f32.mrf.mxu0
      %v3888 = vadd.f32 %v3775, %v3887
      %3889 = vmatmul.f32.gmra.mxu0 %v3479
      %v3890 = vpop.f32.mrf.mxu0
      %v3891 = vadd.f32 %v3778, %v3890
      %3892 = vmatmul.f32.gmra.mxu0 %v3488
      %v3893 = vpop.f32.mrf.mxu0
      %v3894 = vadd.f32 %v3781, %v3893
      %3895 = vmatmul.f32.gmra.mxu0 %v3497
      %v3896 = vpop.f32.mrf.mxu0
      %v3897 = vadd.f32 %v3784, %v3896
      %3898 = vmatmul.f32.gmra.mxu0 %v3506
      %v3899 = vpop.f32.mrf.mxu0
      %v3900 = vadd.f32 %v3787, %v3899
      %3901 = vmatmul.f32.gmra.mxu0 %v3515
      %v3902 = vpop.f32.mrf.mxu0
      %v3903 = vadd.f32 %v3790, %v3902
      %3904 = vmatmul.f32.gmra.mxu0 %v3524
      %v3905 = vpop.f32.mrf.mxu0
      %v3906 = vadd.f32 %v3793, %v3905
      %3907 = vmatmul.f32.gmra.mxu0 %v3533
      %v3908 = vpop.f32.mrf.mxu0
      %v3909 = vadd.f32 %v3796, %v3908
      %3910 = vdwg.mxu0
      %3911 = vmatpush.msra.mxu0 %v3588
      %3912 = vmatpush.msra.mxu0 %v3587
      %3913 = vmatpush.msra.mxu0 %v3586
      %3914 = vmatpush.msra.mxu0 %v3585
      %3915 = vmatpush.msra.mxu0 %v3584
      %3916 = vmatpush.msra.mxu0 %v3583
      %3917 = vmatpush.msra.mxu0 %v3582
      %3918 = vmatpush.msra.mxu0 %v3581
      %3919 = vmatpush.msra.mxu0 %v3580
      %3920 = vmatpush.msra.mxu0 %v3579
      %3921 = vmatpush.msra.mxu0 %v3578
      %3922 = vmatpush.msra.mxu0 %v3577
      %3923 = vmatpush.msra.mxu0 %v3576
      %3924 = vmatpush.msra.mxu0 %v3575
      %3925 = vmatpush.msra.mxu0 %v3574
      %3926 = vmatpush.msra.mxu0 %v3573
      %3927 = vmatmul.f32.gmra.mxu0 %v3255
      %v3928 = vpop.f32.mrf.mxu0
      %v3929 = vadd.f32 %v3816, %v3928
      %3930 = vmatmul.f32.gmra.mxu0 %v3264
      %v3931 = vpop.f32.mrf.mxu0
      %v3932 = vadd.f32 %v3819, %v3931
      %3933 = vmatmul.f32.gmra.mxu0 %v3273
      %v3934 = vpop.f32.mrf.mxu0
      %v3935 = vadd.f32 %v3822, %v3934
      %3936 = vmatmul.f32.gmra.mxu0 %v3282
      %v3937 = vpop.f32.mrf.mxu0
      %v3938 = vadd.f32 %v3825, %v3937
      %3939 = vmatmul.f32.gmra.mxu0 %v3291
      %v3940 = vpop.f32.mrf.mxu0
      %v3941 = vadd.f32 %v3828, %v3940
      %3942 = vmatmul.f32.gmra.mxu0 %v3300
      %v3943 = vpop.f32.mrf.mxu0
      %v3944 = vadd.f32 %v3831, %v3943
      %3945 = vmatmul.f32.gmra.mxu0 %v3309
      %v3946 = vpop.f32.mrf.mxu0
      %v3947 = vadd.f32 %v3834, %v3946
      %3948 = vmatmul.f32.gmra.mxu0 %v3318
      %v3949 = vpop.f32.mrf.mxu0
      %v3950 = vadd.f32 %v3837, %v3949
      %3951 = vmatmul.f32.gmra.mxu0 %v3327
      %v3952 = vpop.f32.mrf.mxu0
      %v3953 = vadd.f32 %v3840, %v3952
      %3954 = vmatmul.f32.gmra.mxu0 %v3336
      %v3955 = vpop.f32.mrf.mxu0
      %v3956 = vadd.f32 %v3843, %v3955
      %3957 = vmatmul.f32.gmra.mxu0 %v3345
      %v3958 = vpop.f32.mrf.mxu0
      %v3959 = vadd.f32 %v3846, %v3958
      %3960 = vmatmul.f32.gmra.mxu0 %v3354
      %v3961 = vpop.f32.mrf.mxu0
      %v3962 = vadd.f32 %v3849, %v3961
      %3963 = vmatmul.f32.gmra.mxu0 %v3363
      %v3964 = vpop.f32.mrf.mxu0
      %v3965 = vadd.f32 %v3852, %v3964
      %3966 = vmatmul.f32.gmra.mxu0 %v3372
      %v3967 = vpop.f32.mrf.mxu0
      %v3968 = vadd.f32 %v3855, %v3967
      %3969 = vmatmul.f32.gmra.mxu0 %v3381
      %v3970 = vpop.f32.mrf.mxu0
      %v3971 = vadd.f32 %v3858, %v3970
      %3972 = vmatmul.f32.gmra.mxu0 %v3390
      %v3973 = vpop.f32.mrf.mxu0
      %v3974 = vadd.f32 %v3861, %v3973
      %3975 = vmatmul.f32.gmra.mxu0 %v3399
      %v3976 = vpop.f32.mrf.mxu0
      %v3977 = vadd.f32 %v3864, %v3976
      %3978 = vmatmul.f32.gmra.mxu0 %v3408
      %v3979 = vpop.f32.mrf.mxu0
      %v3980 = vadd.f32 %v3867, %v3979
      %3981 = vmatmul.f32.gmra.mxu0 %v3417
      %v3982 = vpop.f32.mrf.mxu0
      %v3983 = vadd.f32 %v3870, %v3982
      %3984 = vmatmul.f32.gmra.mxu0 %v3426
      %v3985 = vpop.f32.mrf.mxu0
      %v3986 = vadd.f32 %v3873, %v3985
      %3987 = vmatmul.f32.gmra.mxu0 %v3435
      %v3988 = vpop.f32.mrf.mxu0
      %v3989 = vadd.f32 %v3876, %v3988
      %3990 = vmatmul.f32.gmra.mxu0 %v3444
      %v3991 = vpop.f32.mrf.mxu0
      %v3992 = vadd.f32 %v3879, %v3991
      %3993 = vmatmul.f32.gmra.mxu0 %v3453
      %v3994 = vpop.f32.mrf.mxu0
      %v3995 = vadd.f32 %v3882, %v3994
      %3996 = vmatmul.f32.gmra.mxu0 %v3462
      %v3997 = vpop.f32.mrf.mxu0
      %v3998 = vadd.f32 %v3885, %v3997
      %3999 = vmatmul.f32.gmra.mxu0 %v3471
      %v4000 = vpop.f32.mrf.mxu0
      %v4001 = vadd.f32 %v3888, %v4000
      %4002 = vmatmul.f32.gmra.mxu0 %v3480
      %v4003 = vpop.f32.mrf.mxu0
      %v4004 = vadd.f32 %v3891, %v4003
      %4005 = vmatmul.f32.gmra.mxu0 %v3489
      %v4006 = vpop.f32.mrf.mxu0
      %v4007 = vadd.f32 %v3894, %v4006
      %4008 = vmatmul.f32.gmra.mxu0 %v3498
      %v4009 = vpop.f32.mrf.mxu0
      %v4010 = vadd.f32 %v3897, %v4009
      %4011 = vmatmul.f32.gmra.mxu0 %v3507
      %v4012 = vpop.f32.mrf.mxu0
      %v4013 = vadd.f32 %v3900, %v4012
      %4014 = vmatmul.f32.gmra.mxu0 %v3516
      %v4015 = vpop.f32.mrf.mxu0
      %v4016 = vadd.f32 %v3903, %v4015
      %4017 = vmatmul.f32.gmra.mxu0 %v3525
      %v4018 = vpop.f32.mrf.mxu0
      %v4019 = vadd.f32 %v3906, %v4018
      %4020 = vmatmul.f32.gmra.mxu0 %v3534
      %v4021 = vpop.f32.mrf.mxu0
      %v4022 = vadd.f32 %v3909, %v4021
      %4023 = vdwg.mxu0
      %4024 = vmatpush.msra.mxu0 %v3604
      %4025 = vmatpush.msra.mxu0 %v3603
      %4026 = vmatpush.msra.mxu0 %v3602
      %4027 = vmatpush.msra.mxu0 %v3601
      %4028 = vmatpush.msra.mxu0 %v3600
      %4029 = vmatpush.msra.mxu0 %v3599
      %4030 = vmatpush.msra.mxu0 %v3598
      %4031 = vmatpush.msra.mxu0 %v3597
      %4032 = vmatpush.msra.mxu0 %v3596
      %4033 = vmatpush.msra.mxu0 %v3595
      %4034 = vmatpush.msra.mxu0 %v3594
      %4035 = vmatpush.msra.mxu0 %v3593
      %4036 = vmatpush.msra.mxu0 %v3592
      %4037 = vmatpush.msra.mxu0 %v3591
      %4038 = vmatpush.msra.mxu0 %v3590
      %4039 = vmatpush.msra.mxu0 %v3589
      %4040 = vmatmul.f32.gmra.mxu0 %v3256
      %v4041 = vpop.f32.mrf.mxu0
      %v4042 = vadd.f32 %v3929, %v4041
      %4043 = vmatmul.f32.gmra.mxu0 %v3265
      %v4044 = vpop.f32.mrf.mxu0
      %v4045 = vadd.f32 %v3932, %v4044
      %4046 = vmatmul.f32.gmra.mxu0 %v3274
      %v4047 = vpop.f32.mrf.mxu0
      %v4048 = vadd.f32 %v3935, %v4047
      %4049 = vmatmul.f32.gmra.mxu0 %v3283
      %v4050 = vpop.f32.mrf.mxu0
      %v4051 = vadd.f32 %v3938, %v4050
      %4052 = vmatmul.f32.gmra.mxu0 %v3292
      %v4053 = vpop.f32.mrf.mxu0
      %v4054 = vadd.f32 %v3941, %v4053
      %4055 = vmatmul.f32.gmra.mxu0 %v3301
      %v4056 = vpop.f32.mrf.mxu0
      %v4057 = vadd.f32 %v3944, %v4056
      %4058 = vmatmul.f32.gmra.mxu0 %v3310
      %v4059 = vpop.f32.mrf.mxu0
      %v4060 = vadd.f32 %v3947, %v4059
      %4061 = vmatmul.f32.gmra.mxu0 %v3319
      %v4062 = vpop.f32.mrf.mxu0
      %v4063 = vadd.f32 %v3950, %v4062
      %4064 = vmatmul.f32.gmra.mxu0 %v3328
      %v4065 = vpop.f32.mrf.mxu0
      %v4066 = vadd.f32 %v3953, %v4065
      %4067 = vmatmul.f32.gmra.mxu0 %v3337
      %v4068 = vpop.f32.mrf.mxu0
      %v4069 = vadd.f32 %v3956, %v4068
      %4070 = vmatmul.f32.gmra.mxu0 %v3346
      %v4071 = vpop.f32.mrf.mxu0
      %v4072 = vadd.f32 %v3959, %v4071
      %4073 = vmatmul.f32.gmra.mxu0 %v3355
      %v4074 = vpop.f32.mrf.mxu0
      %v4075 = vadd.f32 %v3962, %v4074
      %4076 = vmatmul.f32.gmra.mxu0 %v3364
      %v4077 = vpop.f32.mrf.mxu0
      %v4078 = vadd.f32 %v3965, %v4077
      %4079 = vmatmul.f32.gmra.mxu0 %v3373
      %v4080 = vpop.f32.mrf.mxu0
      %v4081 = vadd.f32 %v3968, %v4080
      %4082 = vmatmul.f32.gmra.mxu0 %v3382
      %v4083 = vpop.f32.mrf.mxu0
      %v4084 = vadd.f32 %v3971, %v4083
      %4085 = vmatmul.f32.gmra.mxu0 %v3391
      %v4086 = vpop.f32.mrf.mxu0
      %v4087 = vadd.f32 %v3974, %v4086
      %4088 = vmatmul.f32.gmra.mxu0 %v3400
      %v4089 = vpop.f32.mrf.mxu0
      %v4090 = vadd.f32 %v3977, %v4089
      %4091 = vmatmul.f32.gmra.mxu0 %v3409
      %v4092 = vpop.f32.mrf.mxu0
      %v4093 = vadd.f32 %v3980, %v4092
      %4094 = vmatmul.f32.gmra.mxu0 %v3418
      %v4095 = vpop.f32.mrf.mxu0
      %v4096 = vadd.f32 %v3983, %v4095
      %4097 = vmatmul.f32.gmra.mxu0 %v3427
      %v4098 = vpop.f32.mrf.mxu0
      %v4099 = vadd.f32 %v3986, %v4098
      %4100 = vmatmul.f32.gmra.mxu0 %v3436
      %v4101 = vpop.f32.mrf.mxu0
      %v4102 = vadd.f32 %v3989, %v4101
      %4103 = vmatmul.f32.gmra.mxu0 %v3445
      %v4104 = vpop.f32.mrf.mxu0
      %v4105 = vadd.f32 %v3992, %v4104
      %4106 = vmatmul.f32.gmra.mxu0 %v3454
      %v4107 = vpop.f32.mrf.mxu0
      %v4108 = vadd.f32 %v3995, %v4107
      %4109 = vmatmul.f32.gmra.mxu0 %v3463
      %v4110 = vpop.f32.mrf.mxu0
      %v4111 = vadd.f32 %v3998, %v4110
      %4112 = vmatmul.f32.gmra.mxu0 %v3472
      %v4113 = vpop.f32.mrf.mxu0
      %v4114 = vadd.f32 %v4001, %v4113
      %4115 = vmatmul.f32.gmra.mxu0 %v3481
      %v4116 = vpop.f32.mrf.mxu0
      %v4117 = vadd.f32 %v4004, %v4116
      %4118 = vmatmul.f32.gmra.mxu0 %v3490
      %v4119 = vpop.f32.mrf.mxu0
      %v4120 = vadd.f32 %v4007, %v4119
      %4121 = vmatmul.f32.gmra.mxu0 %v3499
      %v4122 = vpop.f32.mrf.mxu0
      %v4123 = vadd.f32 %v4010, %v4122
      %4124 = vmatmul.f32.gmra.mxu0 %v3508
      %v4125 = vpop.f32.mrf.mxu0
      %v4126 = vadd.f32 %v4013, %v4125
      %4127 = vmatmul.f32.gmra.mxu0 %v3517
      %v4128 = vpop.f32.mrf.mxu0
      %v4129 = vadd.f32 %v4016, %v4128
      %4130 = vmatmul.f32.gmra.mxu0 %v3526
      %v4131 = vpop.f32.mrf.mxu0
      %v4132 = vadd.f32 %v4019, %v4131
      %4133 = vmatmul.f32.gmra.mxu0 %v3535
      %v4134 = vpop.f32.mrf.mxu0
      %v4135 = vadd.f32 %v4022, %v4134
      %4136 = vdwg.mxu0
      %4137 = vmatpush.msra.mxu0 %v3620
      %4138 = vmatpush.msra.mxu0 %v3619
      %4139 = vmatpush.msra.mxu0 %v3618
      %4140 = vmatpush.msra.mxu0 %v3617
      %4141 = vmatpush.msra.mxu0 %v3616
      %4142 = vmatpush.msra.mxu0 %v3615
      %4143 = vmatpush.msra.mxu0 %v3614
      %4144 = vmatpush.msra.mxu0 %v3613
      %4145 = vmatpush.msra.mxu0 %v3612
      %4146 = vmatpush.msra.mxu0 %v3611
      %4147 = vmatpush.msra.mxu0 %v3610
      %4148 = vmatpush.msra.mxu0 %v3609
      %4149 = vmatpush.msra.mxu0 %v3608
      %4150 = vmatpush.msra.mxu0 %v3607
      %4151 = vmatpush.msra.mxu0 %v3606
      %4152 = vmatpush.msra.mxu0 %v3605
      %4153 = vmatmul.f32.gmra.mxu0 %v3257
      %v4154 = vpop.f32.mrf.mxu0
      %v4155 = vadd.f32 %v4042, %v4154
      %4156 = vmatmul.f32.gmra.mxu0 %v3266
      %v4157 = vpop.f32.mrf.mxu0
      %v4158 = vadd.f32 %v4045, %v4157
      %4159 = vmatmul.f32.gmra.mxu0 %v3275
      %v4160 = vpop.f32.mrf.mxu0
      %v4161 = vadd.f32 %v4048, %v4160
      %4162 = vmatmul.f32.gmra.mxu0 %v3284
      %v4163 = vpop.f32.mrf.mxu0
      %v4164 = vadd.f32 %v4051, %v4163
      %4165 = vmatmul.f32.gmra.mxu0 %v3293
      %v4166 = vpop.f32.mrf.mxu0
      %v4167 = vadd.f32 %v4054, %v4166
      %4168 = vmatmul.f32.gmra.mxu0 %v3302
      %v4169 = vpop.f32.mrf.mxu0
      %v4170 = vadd.f32 %v4057, %v4169
      %4171 = vmatmul.f32.gmra.mxu0 %v3311
      %v4172 = vpop.f32.mrf.mxu0
      %v4173 = vadd.f32 %v4060, %v4172
      %4174 = vmatmul.f32.gmra.mxu0 %v3320
      %v4175 = vpop.f32.mrf.mxu0
      %v4176 = vadd.f32 %v4063, %v4175
      %4177 = vmatmul.f32.gmra.mxu0 %v3329
      %v4178 = vpop.f32.mrf.mxu0
      %v4179 = vadd.f32 %v4066, %v4178
      %4180 = vmatmul.f32.gmra.mxu0 %v3338
      %v4181 = vpop.f32.mrf.mxu0
      %v4182 = vadd.f32 %v4069, %v4181
      %4183 = vmatmul.f32.gmra.mxu0 %v3347
      %v4184 = vpop.f32.mrf.mxu0
      %v4185 = vadd.f32 %v4072, %v4184
      %4186 = vmatmul.f32.gmra.mxu0 %v3356
      %v4187 = vpop.f32.mrf.mxu0
      %v4188 = vadd.f32 %v4075, %v4187
      %4189 = vmatmul.f32.gmra.mxu0 %v3365
      %v4190 = vpop.f32.mrf.mxu0
      %v4191 = vadd.f32 %v4078, %v4190
      %4192 = vmatmul.f32.gmra.mxu0 %v3374
      %v4193 = vpop.f32.mrf.mxu0
      %v4194 = vadd.f32 %v4081, %v4193
      %4195 = vmatmul.f32.gmra.mxu0 %v3383
      %v4196 = vpop.f32.mrf.mxu0
      %v4197 = vadd.f32 %v4084, %v4196
      %4198 = vmatmul.f32.gmra.mxu0 %v3392
      %v4199 = vpop.f32.mrf.mxu0
      %v4200 = vadd.f32 %v4087, %v4199
      %4201 = vmatmul.f32.gmra.mxu0 %v3401
      %v4202 = vpop.f32.mrf.mxu0
      %v4203 = vadd.f32 %v4090, %v4202
      %4204 = vmatmul.f32.gmra.mxu0 %v3410
      %v4205 = vpop.f32.mrf.mxu0
      %v4206 = vadd.f32 %v4093, %v4205
      %4207 = vmatmul.f32.gmra.mxu0 %v3419
      %v4208 = vpop.f32.mrf.mxu0
      %v4209 = vadd.f32 %v4096, %v4208
      %4210 = vmatmul.f32.gmra.mxu0 %v3428
      %v4211 = vpop.f32.mrf.mxu0
      %v4212 = vadd.f32 %v4099, %v4211
      %4213 = vmatmul.f32.gmra.mxu0 %v3437
      %v4214 = vpop.f32.mrf.mxu0
      %v4215 = vadd.f32 %v4102, %v4214
      %4216 = vmatmul.f32.gmra.mxu0 %v3446
      %v4217 = vpop.f32.mrf.mxu0
      %v4218 = vadd.f32 %v4105, %v4217
      %4219 = vmatmul.f32.gmra.mxu0 %v3455
      %v4220 = vpop.f32.mrf.mxu0
      %v4221 = vadd.f32 %v4108, %v4220
      %4222 = vmatmul.f32.gmra.mxu0 %v3464
      %v4223 = vpop.f32.mrf.mxu0
      %v4224 = vadd.f32 %v4111, %v4223
      %4225 = vmatmul.f32.gmra.mxu0 %v3473
      %v4226 = vpop.f32.mrf.mxu0
      %v4227 = vadd.f32 %v4114, %v4226
      %4228 = vmatmul.f32.gmra.mxu0 %v3482
      %v4229 = vpop.f32.mrf.mxu0
      %v4230 = vadd.f32 %v4117, %v4229
      %4231 = vmatmul.f32.gmra.mxu0 %v3491
      %v4232 = vpop.f32.mrf.mxu0
      %v4233 = vadd.f32 %v4120, %v4232
      %4234 = vmatmul.f32.gmra.mxu0 %v3500
      %v4235 = vpop.f32.mrf.mxu0
      %v4236 = vadd.f32 %v4123, %v4235
      %4237 = vmatmul.f32.gmra.mxu0 %v3509
      %v4238 = vpop.f32.mrf.mxu0
      %v4239 = vadd.f32 %v4126, %v4238
      %4240 = vmatmul.f32.gmra.mxu0 %v3518
      %v4241 = vpop.f32.mrf.mxu0
      %v4242 = vadd.f32 %v4129, %v4241
      %4243 = vmatmul.f32.gmra.mxu0 %v3527
      %v4244 = vpop.f32.mrf.mxu0
      %v4245 = vadd.f32 %v4132, %v4244
      %4246 = vmatmul.f32.gmra.mxu0 %v3536
      %v4247 = vpop.f32.mrf.mxu0
      %v4248 = vadd.f32 %v4135, %v4247
      %4249 = vdwg.mxu0
      %4250 = vmatpush.msra.mxu0 %v3636
      %4251 = vmatpush.msra.mxu0 %v3635
      %4252 = vmatpush.msra.mxu0 %v3634
      %4253 = vmatpush.msra.mxu0 %v3633
      %4254 = vmatpush.msra.mxu0 %v3632
      %4255 = vmatpush.msra.mxu0 %v3631
      %4256 = vmatpush.msra.mxu0 %v3630
      %4257 = vmatpush.msra.mxu0 %v3629
      %4258 = vmatpush.msra.mxu0 %v3628
      %4259 = vmatpush.msra.mxu0 %v3627
      %4260 = vmatpush.msra.mxu0 %v3626
      %4261 = vmatpush.msra.mxu0 %v3625
      %4262 = vmatpush.msra.mxu0 %v3624
      %4263 = vmatpush.msra.mxu0 %v3623
      %4264 = vmatpush.msra.mxu0 %v3622
      %4265 = vmatpush.msra.mxu0 %v3621
      %4266 = vmatmul.f32.gmra.mxu0 %v3258
      %v4267 = vpop.f32.mrf.mxu0
      %v4268 = vadd.f32 %v4155, %v4267
      %4269 = vmatmul.f32.gmra.mxu0 %v3267
      %v4270 = vpop.f32.mrf.mxu0
      %v4271 = vadd.f32 %v4158, %v4270
      %4272 = vmatmul.f32.gmra.mxu0 %v3276
      %v4273 = vpop.f32.mrf.mxu0
      %v4274 = vadd.f32 %v4161, %v4273
      %4275 = vmatmul.f32.gmra.mxu0 %v3285
      %v4276 = vpop.f32.mrf.mxu0
      %v4277 = vadd.f32 %v4164, %v4276
      %4278 = vmatmul.f32.gmra.mxu0 %v3294
      %v4279 = vpop.f32.mrf.mxu0
      %v4280 = vadd.f32 %v4167, %v4279
      %4281 = vmatmul.f32.gmra.mxu0 %v3303
      %v4282 = vpop.f32.mrf.mxu0
      %v4283 = vadd.f32 %v4170, %v4282
      %4284 = vmatmul.f32.gmra.mxu0 %v3312
      %v4285 = vpop.f32.mrf.mxu0
      %v4286 = vadd.f32 %v4173, %v4285
      %4287 = vmatmul.f32.gmra.mxu0 %v3321
      %v4288 = vpop.f32.mrf.mxu0
      %v4289 = vadd.f32 %v4176, %v4288
      %4290 = vmatmul.f32.gmra.mxu0 %v3330
      %v4291 = vpop.f32.mrf.mxu0
      %v4292 = vadd.f32 %v4179, %v4291
      %4293 = vmatmul.f32.gmra.mxu0 %v3339
      %v4294 = vpop.f32.mrf.mxu0
      %v4295 = vadd.f32 %v4182, %v4294
      %4296 = vmatmul.f32.gmra.mxu0 %v3348
      %v4297 = vpop.f32.mrf.mxu0
      %v4298 = vadd.f32 %v4185, %v4297
      %4299 = vmatmul.f32.gmra.mxu0 %v3357
      %v4300 = vpop.f32.mrf.mxu0
      %v4301 = vadd.f32 %v4188, %v4300
      %4302 = vmatmul.f32.gmra.mxu0 %v3366
      %v4303 = vpop.f32.mrf.mxu0
      %v4304 = vadd.f32 %v4191, %v4303
      %4305 = vmatmul.f32.gmra.mxu0 %v3375
      %v4306 = vpop.f32.mrf.mxu0
      %v4307 = vadd.f32 %v4194, %v4306
      %4308 = vmatmul.f32.gmra.mxu0 %v3384
      %v4309 = vpop.f32.mrf.mxu0
      %v4310 = vadd.f32 %v4197, %v4309
      %4311 = vmatmul.f32.gmra.mxu0 %v3393
      %v4312 = vpop.f32.mrf.mxu0
      %v4313 = vadd.f32 %v4200, %v4312
      %4314 = vmatmul.f32.gmra.mxu0 %v3402
      %v4315 = vpop.f32.mrf.mxu0
      %v4316 = vadd.f32 %v4203, %v4315
      %4317 = vmatmul.f32.gmra.mxu0 %v3411
      %v4318 = vpop.f32.mrf.mxu0
      %v4319 = vadd.f32 %v4206, %v4318
      %4320 = vmatmul.f32.gmra.mxu0 %v3420
      %v4321 = vpop.f32.mrf.mxu0
      %v4322 = vadd.f32 %v4209, %v4321
      %4323 = vmatmul.f32.gmra.mxu0 %v3429
      %v4324 = vpop.f32.mrf.mxu0
      %v4325 = vadd.f32 %v4212, %v4324
      %4326 = vmatmul.f32.gmra.mxu0 %v3438
      %v4327 = vpop.f32.mrf.mxu0
      %v4328 = vadd.f32 %v4215, %v4327
      %4329 = vmatmul.f32.gmra.mxu0 %v3447
      %v4330 = vpop.f32.mrf.mxu0
      %v4331 = vadd.f32 %v4218, %v4330
      %4332 = vmatmul.f32.gmra.mxu0 %v3456
      %v4333 = vpop.f32.mrf.mxu0
      %v4334 = vadd.f32 %v4221, %v4333
      %4335 = vmatmul.f32.gmra.mxu0 %v3465
      %v4336 = vpop.f32.mrf.mxu0
      %v4337 = vadd.f32 %v4224, %v4336
      %4338 = vmatmul.f32.gmra.mxu0 %v3474
      %v4339 = vpop.f32.mrf.mxu0
      %v4340 = vadd.f32 %v4227, %v4339
      %4341 = vmatmul.f32.gmra.mxu0 %v3483
      %v4342 = vpop.f32.mrf.mxu0
      %v4343 = vadd.f32 %v4230, %v4342
      %4344 = vmatmul.f32.gmra.mxu0 %v3492
      %v4345 = vpop.f32.mrf.mxu0
      %v4346 = vadd.f32 %v4233, %v4345
      %4347 = vmatmul.f32.gmra.mxu0 %v3501
      %v4348 = vpop.f32.mrf.mxu0
      %v4349 = vadd.f32 %v4236, %v4348
      %4350 = vmatmul.f32.gmra.mxu0 %v3510
      %v4351 = vpop.f32.mrf.mxu0
      %v4352 = vadd.f32 %v4239, %v4351
      %4353 = vmatmul.f32.gmra.mxu0 %v3519
      %v4354 = vpop.f32.mrf.mxu0
      %v4355 = vadd.f32 %v4242, %v4354
      %4356 = vmatmul.f32.gmra.mxu0 %v3528
      %v4357 = vpop.f32.mrf.mxu0
      %v4358 = vadd.f32 %v4245, %v4357
      %4359 = vmatmul.f32.gmra.mxu0 %v3537
      %v4360 = vpop.f32.mrf.mxu0
      %v4361 = vadd.f32 %v4248, %v4360
      %4362 = vdwg.mxu0
      %4363 = vmatpush.msra.mxu0 %v3652
      %4364 = vmatpush.msra.mxu0 %v3651
      %4365 = vmatpush.msra.mxu0 %v3650
      %4366 = vmatpush.msra.mxu0 %v3649
      %4367 = vmatpush.msra.mxu0 %v3648
      %4368 = vmatpush.msra.mxu0 %v3647
      %4369 = vmatpush.msra.mxu0 %v3646
      %4370 = vmatpush.msra.mxu0 %v3645
      %4371 = vmatpush.msra.mxu0 %v3644
      %4372 = vmatpush.msra.mxu0 %v3643
      %4373 = vmatpush.msra.mxu0 %v3642
      %4374 = vmatpush.msra.mxu0 %v3641
      %4375 = vmatpush.msra.mxu0 %v3640
      %4376 = vmatpush.msra.mxu0 %v3639
      %4377 = vmatpush.msra.mxu0 %v3638
      %4378 = vmatpush.msra.mxu0 %v3637
      %4379 = vmatmul.f32.gmra.mxu0 %v3259
      %v4380 = vpop.f32.mrf.mxu0
      %v4381 = vadd.f32 %v4268, %v4380
      %4382 = vmatmul.f32.gmra.mxu0 %v3268
      %v4383 = vpop.f32.mrf.mxu0
      %v4384 = vadd.f32 %v4271, %v4383
      %4385 = vmatmul.f32.gmra.mxu0 %v3277
      %v4386 = vpop.f32.mrf.mxu0
      %v4387 = vadd.f32 %v4274, %v4386
      %4388 = vmatmul.f32.gmra.mxu0 %v3286
      %v4389 = vpop.f32.mrf.mxu0
      %v4390 = vadd.f32 %v4277, %v4389
      %4391 = vmatmul.f32.gmra.mxu0 %v3295
      %v4392 = vpop.f32.mrf.mxu0
      %v4393 = vadd.f32 %v4280, %v4392
      %4394 = vmatmul.f32.gmra.mxu0 %v3304
      %v4395 = vpop.f32.mrf.mxu0
      %v4396 = vadd.f32 %v4283, %v4395
      %4397 = vmatmul.f32.gmra.mxu0 %v3313
      %v4398 = vpop.f32.mrf.mxu0
      %v4399 = vadd.f32 %v4286, %v4398
      %4400 = vmatmul.f32.gmra.mxu0 %v3322
      %v4401 = vpop.f32.mrf.mxu0
      %v4402 = vadd.f32 %v4289, %v4401
      %4403 = vmatmul.f32.gmra.mxu0 %v3331
      %v4404 = vpop.f32.mrf.mxu0
      %v4405 = vadd.f32 %v4292, %v4404
      %4406 = vmatmul.f32.gmra.mxu0 %v3340
      %v4407 = vpop.f32.mrf.mxu0
      %v4408 = vadd.f32 %v4295, %v4407
      %4409 = vmatmul.f32.gmra.mxu0 %v3349
      %v4410 = vpop.f32.mrf.mxu0
      %v4411 = vadd.f32 %v4298, %v4410
      %4412 = vmatmul.f32.gmra.mxu0 %v3358
      %v4413 = vpop.f32.mrf.mxu0
      %v4414 = vadd.f32 %v4301, %v4413
      %4415 = vmatmul.f32.gmra.mxu0 %v3367
      %v4416 = vpop.f32.mrf.mxu0
      %v4417 = vadd.f32 %v4304, %v4416
      %4418 = vmatmul.f32.gmra.mxu0 %v3376
      %v4419 = vpop.f32.mrf.mxu0
      %v4420 = vadd.f32 %v4307, %v4419
      %4421 = vmatmul.f32.gmra.mxu0 %v3385
      %v4422 = vpop.f32.mrf.mxu0
      %v4423 = vadd.f32 %v4310, %v4422
      %4424 = vmatmul.f32.gmra.mxu0 %v3394
      %v4425 = vpop.f32.mrf.mxu0
      %v4426 = vadd.f32 %v4313, %v4425
      %4427 = vmatmul.f32.gmra.mxu0 %v3403
      %v4428 = vpop.f32.mrf.mxu0
      %v4429 = vadd.f32 %v4316, %v4428
      %4430 = vmatmul.f32.gmra.mxu0 %v3412
      %v4431 = vpop.f32.mrf.mxu0
      %v4432 = vadd.f32 %v4319, %v4431
      %4433 = vmatmul.f32.gmra.mxu0 %v3421
      %v4434 = vpop.f32.mrf.mxu0
      %v4435 = vadd.f32 %v4322, %v4434
      %4436 = vmatmul.f32.gmra.mxu0 %v3430
      %v4437 = vpop.f32.mrf.mxu0
      %v4438 = vadd.f32 %v4325, %v4437
      %4439 = vmatmul.f32.gmra.mxu0 %v3439
      %v4440 = vpop.f32.mrf.mxu0
      %v4441 = vadd.f32 %v4328, %v4440
      %4442 = vmatmul.f32.gmra.mxu0 %v3448
      %v4443 = vpop.f32.mrf.mxu0
      %v4444 = vadd.f32 %v4331, %v4443
      %4445 = vmatmul.f32.gmra.mxu0 %v3457
      %v4446 = vpop.f32.mrf.mxu0
      %v4447 = vadd.f32 %v4334, %v4446
      %4448 = vmatmul.f32.gmra.mxu0 %v3466
      %v4449 = vpop.f32.mrf.mxu0
      %v4450 = vadd.f32 %v4337, %v4449
      %4451 = vmatmul.f32.gmra.mxu0 %v3475
      %v4452 = vpop.f32.mrf.mxu0
      %v4453 = vadd.f32 %v4340, %v4452
      %4454 = vmatmul.f32.gmra.mxu0 %v3484
      %v4455 = vpop.f32.mrf.mxu0
      %v4456 = vadd.f32 %v4343, %v4455
      %4457 = vmatmul.f32.gmra.mxu0 %v3493
      %v4458 = vpop.f32.mrf.mxu0
      %v4459 = vadd.f32 %v4346, %v4458
      %4460 = vmatmul.f32.gmra.mxu0 %v3502
      %v4461 = vpop.f32.mrf.mxu0
      %v4462 = vadd.f32 %v4349, %v4461
      %4463 = vmatmul.f32.gmra.mxu0 %v3511
      %v4464 = vpop.f32.mrf.mxu0
      %v4465 = vadd.f32 %v4352, %v4464
      %4466 = vmatmul.f32.gmra.mxu0 %v3520
      %v4467 = vpop.f32.mrf.mxu0
      %v4468 = vadd.f32 %v4355, %v4467
      %4469 = vmatmul.f32.gmra.mxu0 %v3529
      %v4470 = vpop.f32.mrf.mxu0
      %v4471 = vadd.f32 %v4358, %v4470
      %4472 = vmatmul.f32.gmra.mxu0 %v3538
      %v4473 = vpop.f32.mrf.mxu0
      %v4474 = vadd.f32 %v4361, %v4473
      %4475 = vdwg.mxu0
      %4476 = vmatpush.msra.mxu0 %v3668
      %4477 = vmatpush.msra.mxu0 %v3667
      %4478 = vmatpush.msra.mxu0 %v3666
      %4479 = vmatpush.msra.mxu0 %v3665
      %4480 = vmatpush.msra.mxu0 %v3664
      %4481 = vmatpush.msra.mxu0 %v3663
      %4482 = vmatpush.msra.mxu0 %v3662
      %4483 = vmatpush.msra.mxu0 %v3661
      %4484 = vmatpush.msra.mxu0 %v3660
      %4485 = vmatpush.msra.mxu0 %v3659
      %4486 = vmatpush.msra.mxu0 %v3658
      %4487 = vmatpush.msra.mxu0 %v3657
      %4488 = vmatpush.msra.mxu0 %v3656
      %4489 = vmatpush.msra.mxu0 %v3655
      %4490 = vmatpush.msra.mxu0 %v3654
      %4491 = vmatpush.msra.mxu0 %v3653
      %4492 = vmatmul.f32.gmra.mxu0 %v3260
      %v4493 = vpop.f32.mrf.mxu0
      %v4494 = vadd.f32 %v4381, %v4493
      %4495 = vmatmul.f32.gmra.mxu0 %v3269
      %v4496 = vpop.f32.mrf.mxu0
      %v4497 = vadd.f32 %v4384, %v4496
      %4498 = vmatmul.f32.gmra.mxu0 %v3278
      %v4499 = vpop.f32.mrf.mxu0
      %v4500 = vadd.f32 %v4387, %v4499
      %4501 = vmatmul.f32.gmra.mxu0 %v3287
      %v4502 = vpop.f32.mrf.mxu0
      %v4503 = vadd.f32 %v4390, %v4502
      %4504 = vmatmul.f32.gmra.mxu0 %v3296
      %v4505 = vpop.f32.mrf.mxu0
      %v4506 = vadd.f32 %v4393, %v4505
      %4507 = vmatmul.f32.gmra.mxu0 %v3305
      %v4508 = vpop.f32.mrf.mxu0
      %v4509 = vadd.f32 %v4396, %v4508
      %4510 = vmatmul.f32.gmra.mxu0 %v3314
      %v4511 = vpop.f32.mrf.mxu0
      %v4512 = vadd.f32 %v4399, %v4511
      %4513 = vmatmul.f32.gmra.mxu0 %v3323
      %v4514 = vpop.f32.mrf.mxu0
      %v4515 = vadd.f32 %v4402, %v4514
      %4516 = vmatmul.f32.gmra.mxu0 %v3332
      %v4517 = vpop.f32.mrf.mxu0
      %v4518 = vadd.f32 %v4405, %v4517
      %4519 = vmatmul.f32.gmra.mxu0 %v3341
      %v4520 = vpop.f32.mrf.mxu0
      %v4521 = vadd.f32 %v4408, %v4520
      %4522 = vmatmul.f32.gmra.mxu0 %v3350
      %v4523 = vpop.f32.mrf.mxu0
      %v4524 = vadd.f32 %v4411, %v4523
      %4525 = vmatmul.f32.gmra.mxu0 %v3359
      %v4526 = vpop.f32.mrf.mxu0
      %v4527 = vadd.f32 %v4414, %v4526
      %4528 = vmatmul.f32.gmra.mxu0 %v3368
      %v4529 = vpop.f32.mrf.mxu0
      %v4530 = vadd.f32 %v4417, %v4529
      %4531 = vmatmul.f32.gmra.mxu0 %v3377
      %v4532 = vpop.f32.mrf.mxu0
      %v4533 = vadd.f32 %v4420, %v4532
      %4534 = vmatmul.f32.gmra.mxu0 %v3386
      %v4535 = vpop.f32.mrf.mxu0
      %v4536 = vadd.f32 %v4423, %v4535
      %4537 = vmatmul.f32.gmra.mxu0 %v3395
      %v4538 = vpop.f32.mrf.mxu0
      %v4539 = vadd.f32 %v4426, %v4538
      %4540 = vmatmul.f32.gmra.mxu0 %v3404
      %v4541 = vpop.f32.mrf.mxu0
      %v4542 = vadd.f32 %v4429, %v4541
      %4543 = vmatmul.f32.gmra.mxu0 %v3413
      %v4544 = vpop.f32.mrf.mxu0
      %v4545 = vadd.f32 %v4432, %v4544
      %4546 = vmatmul.f32.gmra.mxu0 %v3422
      %v4547 = vpop.f32.mrf.mxu0
      %v4548 = vadd.f32 %v4435, %v4547
      %4549 = vmatmul.f32.gmra.mxu0 %v3431
      %v4550 = vpop.f32.mrf.mxu0
      %v4551 = vadd.f32 %v4438, %v4550
      %4552 = vmatmul.f32.gmra.mxu0 %v3440
      %v4553 = vpop.f32.mrf.mxu0
      %v4554 = vadd.f32 %v4441, %v4553
      %4555 = vmatmul.f32.gmra.mxu0 %v3449
      %v4556 = vpop.f32.mrf.mxu0
      %v4557 = vadd.f32 %v4444, %v4556
      %4558 = vmatmul.f32.gmra.mxu0 %v3458
      %v4559 = vpop.f32.mrf.mxu0
      %v4560 = vadd.f32 %v4447, %v4559
      %4561 = vmatmul.f32.gmra.mxu0 %v3467
      %v4562 = vpop.f32.mrf.mxu0
      %v4563 = vadd.f32 %v4450, %v4562
      %4564 = vmatmul.f32.gmra.mxu0 %v3476
      %v4565 = vpop.f32.mrf.mxu0
      %v4566 = vadd.f32 %v4453, %v4565
      %4567 = vmatmul.f32.gmra.mxu0 %v3485
      %v4568 = vpop.f32.mrf.mxu0
      %v4569 = vadd.f32 %v4456, %v4568
      %4570 = vmatmul.f32.gmra.mxu0 %v3494
      %v4571 = vpop.f32.mrf.mxu0
      %v4572 = vadd.f32 %v4459, %v4571
      %4573 = vmatmul.f32.gmra.mxu0 %v3503
      %v4574 = vpop.f32.mrf.mxu0
      %v4575 = vadd.f32 %v4462, %v4574
      %4576 = vmatmul.f32.gmra.mxu0 %v3512
      %v4577 = vpop.f32.mrf.mxu0
      %v4578 = vadd.f32 %v4465, %v4577
      %4579 = vmatmul.f32.gmra.mxu0 %v3521
      %v4580 = vpop.f32.mrf.mxu0
      %v4581 = vadd.f32 %v4468, %v4580
      %4582 = vmatmul.f32.gmra.mxu0 %v3530
      %v4583 = vpop.f32.mrf.mxu0
      %v4584 = vadd.f32 %v4471, %v4583
      %4585 = vmatmul.f32.gmra.mxu0 %v3539
      %v4586 = vpop.f32.mrf.mxu0
      %v4587 = vadd.f32 %v4474, %v4586
      %4588 = vdwg.mxu0
      %4589 = vmatpush.msra.mxu0 %v3684
      %4590 = vmatpush.msra.mxu0 %v3683
      %4591 = vmatpush.msra.mxu0 %v3682
      %4592 = vmatpush.msra.mxu0 %v3681
      %4593 = vmatpush.msra.mxu0 %v3680
      %4594 = vmatpush.msra.mxu0 %v3679
      %4595 = vmatpush.msra.mxu0 %v3678
      %4596 = vmatpush.msra.mxu0 %v3677
      %4597 = vmatpush.msra.mxu0 %v3676
      %4598 = vmatpush.msra.mxu0 %v3675
      %4599 = vmatpush.msra.mxu0 %v3674
      %4600 = vmatpush.msra.mxu0 %v3673
      %4601 = vmatpush.msra.mxu0 %v3672
      %4602 = vmatpush.msra.mxu0 %v3671
      %4603 = vmatpush.msra.mxu0 %v3670
      %4604 = vmatpush.msra.mxu0 %v3669
      %4605 = vmatmul.f32.gmra.mxu0 %v3261
      %v4606 = vpop.f32.mrf.mxu0
      %v4607 = vadd.f32 %v4494, %v4606
      %4608 = vmatmul.f32.gmra.mxu0 %v3270
      %v4609 = vpop.f32.mrf.mxu0
      %v4610 = vadd.f32 %v4497, %v4609
      %4611 = vmatmul.f32.gmra.mxu0 %v3279
      %v4612 = vpop.f32.mrf.mxu0
      %v4613 = vadd.f32 %v4500, %v4612
      %4614 = vmatmul.f32.gmra.mxu0 %v3288
      %v4615 = vpop.f32.mrf.mxu0
      %v4616 = vadd.f32 %v4503, %v4615
      %4617 = vmatmul.f32.gmra.mxu0 %v3297
      %v4618 = vpop.f32.mrf.mxu0
      %v4619 = vadd.f32 %v4506, %v4618
      %4620 = vmatmul.f32.gmra.mxu0 %v3306
      %v4621 = vpop.f32.mrf.mxu0
      %v4622 = vadd.f32 %v4509, %v4621
      %4623 = vmatmul.f32.gmra.mxu0 %v3315
      %v4624 = vpop.f32.mrf.mxu0
      %v4625 = vadd.f32 %v4512, %v4624
      %4626 = vmatmul.f32.gmra.mxu0 %v3324
      %v4627 = vpop.f32.mrf.mxu0
      %v4628 = vadd.f32 %v4515, %v4627
      %4629 = vmatmul.f32.gmra.mxu0 %v3333
      %v4630 = vpop.f32.mrf.mxu0
      %v4631 = vadd.f32 %v4518, %v4630
      %4632 = vmatmul.f32.gmra.mxu0 %v3342
      %v4633 = vpop.f32.mrf.mxu0
      %v4634 = vadd.f32 %v4521, %v4633
      %4635 = vmatmul.f32.gmra.mxu0 %v3351
      %v4636 = vpop.f32.mrf.mxu0
      %v4637 = vadd.f32 %v4524, %v4636
      %4638 = vmatmul.f32.gmra.mxu0 %v3360
      %v4639 = vpop.f32.mrf.mxu0
      %v4640 = vadd.f32 %v4527, %v4639
      %4641 = vmatmul.f32.gmra.mxu0 %v3369
      %v4642 = vpop.f32.mrf.mxu0
      %v4643 = vadd.f32 %v4530, %v4642
      %4644 = vmatmul.f32.gmra.mxu0 %v3378
      %v4645 = vpop.f32.mrf.mxu0
      %v4646 = vadd.f32 %v4533, %v4645
      %4647 = vmatmul.f32.gmra.mxu0 %v3387
      %v4648 = vpop.f32.mrf.mxu0
      %v4649 = vadd.f32 %v4536, %v4648
      %4650 = vmatmul.f32.gmra.mxu0 %v3396
      %v4651 = vpop.f32.mrf.mxu0
      %v4652 = vadd.f32 %v4539, %v4651
      %4653 = vmatmul.f32.gmra.mxu0 %v3405
      %v4654 = vpop.f32.mrf.mxu0
      %v4655 = vadd.f32 %v4542, %v4654
      %4656 = vmatmul.f32.gmra.mxu0 %v3414
      %v4657 = vpop.f32.mrf.mxu0
      %v4658 = vadd.f32 %v4545, %v4657
      %4659 = vmatmul.f32.gmra.mxu0 %v3423
      %v4660 = vpop.f32.mrf.mxu0
      %v4661 = vadd.f32 %v4548, %v4660
      %4662 = vmatmul.f32.gmra.mxu0 %v3432
      %v4663 = vpop.f32.mrf.mxu0
      %v4664 = vadd.f32 %v4551, %v4663
      %4665 = vmatmul.f32.gmra.mxu0 %v3441
      %v4666 = vpop.f32.mrf.mxu0
      %v4667 = vadd.f32 %v4554, %v4666
      %4668 = vmatmul.f32.gmra.mxu0 %v3450
      %v4669 = vpop.f32.mrf.mxu0
      %v4670 = vadd.f32 %v4557, %v4669
      %4671 = vmatmul.f32.gmra.mxu0 %v3459
      %v4672 = vpop.f32.mrf.mxu0
      %v4673 = vadd.f32 %v4560, %v4672
      %4674 = vmatmul.f32.gmra.mxu0 %v3468
      %v4675 = vpop.f32.mrf.mxu0
      %v4676 = vadd.f32 %v4563, %v4675
      %4677 = vmatmul.f32.gmra.mxu0 %v3477
      %v4678 = vpop.f32.mrf.mxu0
      %v4679 = vadd.f32 %v4566, %v4678
      %4680 = vmatmul.f32.gmra.mxu0 %v3486
      %v4681 = vpop.f32.mrf.mxu0
      %v4682 = vadd.f32 %v4569, %v4681
      %4683 = vmatmul.f32.gmra.mxu0 %v3495
      %v4684 = vpop.f32.mrf.mxu0
      %v4685 = vadd.f32 %v4572, %v4684
      %4686 = vmatmul.f32.gmra.mxu0 %v3504
      %v4687 = vpop.f32.mrf.mxu0
      %v4688 = vadd.f32 %v4575, %v4687
      %4689 = vmatmul.f32.gmra.mxu0 %v3513
      %v4690 = vpop.f32.mrf.mxu0
      %v4691 = vadd.f32 %v4578, %v4690
      %4692 = vmatmul.f32.gmra.mxu0 %v3522
      %v4693 = vpop.f32.mrf.mxu0
      %v4694 = vadd.f32 %v4581, %v4693
      %4695 = vmatmul.f32.gmra.mxu0 %v3531
      %v4696 = vpop.f32.mrf.mxu0
      %v4697 = vadd.f32 %v4584, %v4696
      %4698 = vmatmul.f32.gmra.mxu0 %v3540
      %v4699 = vpop.f32.mrf.mxu0
      %v4700 = vadd.f32 %v4587, %v4699
      %4701 = vdwg.mxu0
      %v4702 = vld [vmem:[%s315] sm:$0xff]
      %v4703 = vld [vmem:[%s315 + $0x8] sm:$0xff]
      %v4704 = vld [vmem:[%s315 + $0x10] sm:$0xff]
      %v4705 = vld [vmem:[%s315 + $0x18] sm:$0xff]
      %v4706 = vld [vmem:[%s315 + $0x20] sm:$0xff]
      %v4707 = vld [vmem:[%s315 + $0x28] sm:$0xff]
      %v4708 = vld [vmem:[%s315 + $0x30] sm:$0xff]
      %v4709 = vld [vmem:[%s315 + $0x38] sm:$0xff]
      %v4710 = vld [vmem:[%s315 + $0x40] sm:$0xff]
      %v4711 = vld [vmem:[%s315 + $0x48] sm:$0xff]
      %v4712 = vld [vmem:[%s315 + $0x50] sm:$0xff]
      %v4713 = vld [vmem:[%s315 + $0x58] sm:$0xff]
      %v4714 = vld [vmem:[%s315 + $0x60] sm:$0xff]
      %v4715 = vld [vmem:[%s315 + $0x68] sm:$0xff]
      %v4716 = vld [vmem:[%s315 + $0x70] sm:$0xff]
      %v4717 = vld [vmem:[%s315 + $0x78] sm:$0xff]
      %v4718 = vld [vmem:[%s315 + $0x80] sm:$0xff]
      %v4719 = vld [vmem:[%s315 + $0x88] sm:$0xff]
      %v4720 = vld [vmem:[%s315 + $0x90] sm:$0xff]
      %v4721 = vld [vmem:[%s315 + $0x98] sm:$0xff]
      %v4722 = vld [vmem:[%s315 + $0xa0] sm:$0xff]
      %v4723 = vld [vmem:[%s315 + $0xa8] sm:$0xff]
      %v4724 = vld [vmem:[%s315 + $0xb0] sm:$0xff]
      %v4725 = vld [vmem:[%s315 + $0xb8] sm:$0xff]
      %v4726 = vld [vmem:[%s315 + $0xc0] sm:$0xff]
      %v4727 = vld [vmem:[%s315 + $0xc8] sm:$0xff]
      %v4728 = vld [vmem:[%s315 + $0xd0] sm:$0xff]
      %v4729 = vld [vmem:[%s315 + $0xd8] sm:$0xff]
      %v4730 = vld [vmem:[%s315 + $0xe0] sm:$0xff]
      %v4731 = vld [vmem:[%s315 + $0xe8] sm:$0xff]
      %v4732 = vld [vmem:[%s315 + $0xf0] sm:$0xff]
      %v4733 = vld [vmem:[%s315 + $0xf8] sm:$0xff]
      %v4734 = vld [vmem:[%s6] sm:$0x1]
      %v4736 = vperm.slane %v4734, 0
      %v4738 = vmul.f32 %v4607, %v4736
      %v4739 = vmul.f32 %v4610, %v4736
      %v4740 = vmul.f32 %v4613, %v4736
      %v4741 = vmul.f32 %v4616, %v4736
      %v4742 = vmul.f32 %v4619, %v4736
      %v4743 = vmul.f32 %v4622, %v4736
      %v4744 = vmul.f32 %v4625, %v4736
      %v4745 = vmul.f32 %v4628, %v4736
      %v4746 = vmul.f32 %v4631, %v4736
      %v4747 = vmul.f32 %v4634, %v4736
      %v4748 = vmul.f32 %v4637, %v4736
      %v4749 = vmul.f32 %v4640, %v4736
      %v4750 = vmul.f32 %v4643, %v4736
      %v4751 = vmul.f32 %v4646, %v4736
      %v4752 = vmul.f32 %v4649, %v4736
      %v4753 = vmul.f32 %v4652, %v4736
      %v4754 = vmul.f32 %v4655, %v4736
      %v4755 = vmul.f32 %v4658, %v4736
      %v4756 = vmul.f32 %v4661, %v4736
      %v4757 = vmul.f32 %v4664, %v4736
      %v4758 = vmul.f32 %v4667, %v4736
      %v4759 = vmul.f32 %v4670, %v4736
      %v4760 = vmul.f32 %v4673, %v4736
      %v4761 = vmul.f32 %v4676, %v4736
      %v4762 = vmul.f32 %v4679, %v4736
      %v4763 = vmul.f32 %v4682, %v4736
      %v4764 = vmul.f32 %v4685, %v4736
      %v4765 = vmul.f32 %v4688, %v4736
      %v4766 = vmul.f32 %v4691, %v4736
      %v4767 = vmul.f32 %v4694, %v4736
      %v4768 = vmul.f32 %v4697, %v4736
      %v4769 = vmul.f32 %v4700, %v4736
      %v4770 = vld [vmem:[%s7] sm:$0x1]
      %v4772 = vperm.slane %v4770, 0
      %v4774 = vadd.f32 %v4738, %v4772
      %v4775 = vadd.f32 %v4739, %v4772
      %v4776 = vadd.f32 %v4740, %v4772
      %v4777 = vadd.f32 %v4741, %v4772
      %v4778 = vadd.f32 %v4742, %v4772
      %v4779 = vadd.f32 %v4743, %v4772
      %v4780 = vadd.f32 %v4744, %v4772
      %v4781 = vadd.f32 %v4745, %v4772
      %v4782 = vadd.f32 %v4746, %v4772
      %v4783 = vadd.f32 %v4747, %v4772
      %v4784 = vadd.f32 %v4748, %v4772
      %v4785 = vadd.f32 %v4749, %v4772
      %v4786 = vadd.f32 %v4750, %v4772
      %v4787 = vadd.f32 %v4751, %v4772
      %v4788 = vadd.f32 %v4752, %v4772
      %v4789 = vadd.f32 %v4753, %v4772
      %v4790 = vadd.f32 %v4754, %v4772
      %v4791 = vadd.f32 %v4755, %v4772
      %v4792 = vadd.f32 %v4756, %v4772
      %v4793 = vadd.f32 %v4757, %v4772
      %v4794 = vadd.f32 %v4758, %v4772
      %v4795 = vadd.f32 %v4759, %v4772
      %v4796 = vadd.f32 %v4760, %v4772
      %v4797 = vadd.f32 %v4761, %v4772
      %v4798 = vadd.f32 %v4762, %v4772
      %v4799 = vadd.f32 %v4763, %v4772
      %v4800 = vadd.f32 %v4764, %v4772
      %v4801 = vadd.f32 %v4765, %v4772
      %v4802 = vadd.f32 %v4766, %v4772
      %v4803 = vadd.f32 %v4767, %v4772
      %v4804 = vadd.f32 %v4768, %v4772
      %v4805 = vadd.f32 %v4769, %v4772
      %v4806 = vadd.f32 %v4774, %v4702
      %v4807 = vadd.f32 %v4775, %v4703
      %v4808 = vadd.f32 %v4776, %v4704
      %v4809 = vadd.f32 %v4777, %v4705
      %v4810 = vadd.f32 %v4778, %v4706
      %v4811 = vadd.f32 %v4779, %v4707
      %v4812 = vadd.f32 %v4780, %v4708
      %v4813 = vadd.f32 %v4781, %v4709
      %v4814 = vadd.f32 %v4782, %v4710
      %v4815 = vadd.f32 %v4783, %v4711
      %v4816 = vadd.f32 %v4784, %v4712
      %v4817 = vadd.f32 %v4785, %v4713
      %v4818 = vadd.f32 %v4786, %v4714
      %v4819 = vadd.f32 %v4787, %v4715
      %v4820 = vadd.f32 %v4788, %v4716
      %v4821 = vadd.f32 %v4789, %v4717
      %v4822 = vadd.f32 %v4790, %v4718
      %v4823 = vadd.f32 %v4791, %v4719
      %v4824 = vadd.f32 %v4792, %v4720
      %v4825 = vadd.f32 %v4793, %v4721
      %v4826 = vadd.f32 %v4794, %v4722
      %v4827 = vadd.f32 %v4795, %v4723
      %v4828 = vadd.f32 %v4796, %v4724
      %v4829 = vadd.f32 %v4797, %v4725
      %v4830 = vadd.f32 %v4798, %v4726
      %v4831 = vadd.f32 %v4799, %v4727
      %v4832 = vadd.f32 %v4800, %v4728
      %v4833 = vadd.f32 %v4801, %v4729
      %v4834 = vadd.f32 %v4802, %v4730
      %v4835 = vadd.f32 %v4803, %v4731
      %v4836 = vadd.f32 %v4804, %v4732
      %v4837 = vadd.f32 %v4805, %v4733
      %v4838 = vmax.f32 %v4806, 0.0
      %v4839 = vmax.f32 %v4807, 0.0
      %v4840 = vmax.f32 %v4808, 0.0
      %v4841 = vmax.f32 %v4809, 0.0
      %v4842 = vmax.f32 %v4810, 0.0
      %v4843 = vmax.f32 %v4811, 0.0
      %v4844 = vmax.f32 %v4812, 0.0
      %v4845 = vmax.f32 %v4813, 0.0
      %v4846 = vmax.f32 %v4814, 0.0
      %v4847 = vmax.f32 %v4815, 0.0
      %v4848 = vmax.f32 %v4816, 0.0
      %v4849 = vmax.f32 %v4817, 0.0
      %v4850 = vmax.f32 %v4818, 0.0
      %v4851 = vmax.f32 %v4819, 0.0
      %v4852 = vmax.f32 %v4820, 0.0
      %v4853 = vmax.f32 %v4821, 0.0
      %v4854 = vmax.f32 %v4822, 0.0
      %v4855 = vmax.f32 %v4823, 0.0
      %v4856 = vmax.f32 %v4824, 0.0
      %v4857 = vmax.f32 %v4825, 0.0
      %v4858 = vmax.f32 %v4826, 0.0
      %v4859 = vmax.f32 %v4827, 0.0
      %v4860 = vmax.f32 %v4828, 0.0
      %v4861 = vmax.f32 %v4829, 0.0
      %v4862 = vmax.f32 %v4830, 0.0
      %v4863 = vmax.f32 %v4831, 0.0
      %v4864 = vmax.f32 %v4832, 0.0
      %v4865 = vmax.f32 %v4833, 0.0
      %v4866 = vmax.f32 %v4834, 0.0
      %v4867 = vmax.f32 %v4835, 0.0
      %v4868 = vmax.f32 %v4836, 0.0
      %v4869 = vmax.f32 %v4837, 0.0
      %4870 = vst [vmem:[%s325] sm:$0xff] %v4838
      %4871 = vst [vmem:[%s325 + $0x8] sm:$0xff] %v4839
      %4872 = vst [vmem:[%s325 + $0x10] sm:$0xff] %v4840
      %4873 = vst [vmem:[%s325 + $0x18] sm:$0xff] %v4841
      %4874 = vst [vmem:[%s325 + $0x20] sm:$0xff] %v4842
      %4875 = vst [vmem:[%s325 + $0x28] sm:$0xff] %v4843
      %4876 = vst [vmem:[%s325 + $0x30] sm:$0xff] %v4844
      %4877 = vst [vmem:[%s325 + $0x38] sm:$0xff] %v4845
      %4878 = vst [vmem:[%s325 + $0x40] sm:$0xff] %v4846
      %4879 = vst [vmem:[%s325 + $0x48] sm:$0xff] %v4847
      %4880 = vst [vmem:[%s325 + $0x50] sm:$0xff] %v4848
      %4881 = vst [vmem:[%s325 + $0x58] sm:$0xff] %v4849
      %4882 = vst [vmem:[%s325 + $0x60] sm:$0xff] %v4850
      %4883 = vst [vmem:[%s325 + $0x68] sm:$0xff] %v4851
      %4884 = vst [vmem:[%s325 + $0x70] sm:$0xff] %v4852
      %4885 = vst [vmem:[%s325 + $0x78] sm:$0xff] %v4853
      %4886 = vst [vmem:[%s325 + $0x80] sm:$0xff] %v4854
      %4887 = vst [vmem:[%s325 + $0x88] sm:$0xff] %v4855
      %4888 = vst [vmem:[%s325 + $0x90] sm:$0xff] %v4856
      %4889 = vst [vmem:[%s325 + $0x98] sm:$0xff] %v4857
      %4890 = vst [vmem:[%s325 + $0xa0] sm:$0xff] %v4858
      %4891 = vst [vmem:[%s325 + $0xa8] sm:$0xff] %v4859
      %4892 = vst [vmem:[%s325 + $0xb0] sm:$0xff] %v4860
      %4893 = vst [vmem:[%s325 + $0xb8] sm:$0xff] %v4861
      %4894 = vst [vmem:[%s325 + $0xc0] sm:$0xff] %v4862
      %4895 = vst [vmem:[%s325 + $0xc8] sm:$0xff] %v4863
      %4896 = vst [vmem:[%s325 + $0xd0] sm:$0xff] %v4864
      %4897 = vst [vmem:[%s325 + $0xd8] sm:$0xff] %v4865
      %4898 = vst [vmem:[%s325 + $0xe0] sm:$0xff] %v4866
      %4899 = vst [vmem:[%s325 + $0xe8] sm:$0xff] %v4867
      %4900 = vst [vmem:[%s325 + $0xf0] sm:$0xff] %v4868
      %4901 = vst [vmem:[%s325 + $0xf8] sm:$0xff] %v4869
      %p4902 = scmp.lt.s32.totalorder %s19, 1
      %s4903 = scalar_select %p4902, %s19, 1
      %s4904 = smul.addr %s4903, 32
      %s4905 = smul.addr %s4904, 8
      %s4906 = scalar_lea.vmem %s8, %s4905
      // Predicated region
      $region53: #{resblock_pallas.1} parent=51 // pred_check
        %p4907 = pneg %p215
      $region54: #{resblock_pallas.1} parent=51 // pred_check_branch
        %4909 = sbr.rel (%p4907) target = $region56
      $region55: #{resblock_pallas.1} parent=51 // pred_region
        _
      $region56: #{resblock_pallas.1} parent=51 // pred_fallthru
        _
    $region52: #{resblock_pallas.1} parent=5 // pred_fallthru
      _
    %p4910 = scmp.le.s32.totalorder 2, %s14
    // Predicated region
    $region57: #{resblock_pallas.1} parent=5 // pred_check
      %p4911 = pneg %p4910
    $region58: #{resblock_pallas.1} parent=5 // pred_check_branch
      %4913 = sbr.rel (%p4911) target = $region60
    $region59: #{resblock_pallas.1} parent=5 // pred_region
      %s4914 = ssub.s32 %s14, 2
      // Predicated region
      $region61: #{resblock_pallas.1} parent=59 // pred_check
        %p4915 = pneg %p221
      $region62: #{resblock_pallas.1} parent=59 // pred_check_branch
        %4917 = sbr.rel (%p4915) target = $region64
      $region63: #{resblock_pallas.1} parent=59 // pred_region
        %p4918 = scmp.lt.s32.totalorder %s20, 1
        %s4919 = scalar_select %p4918, %s20, 1
        %s4920 = smul.addr %s4919, 32
        %s4921 = smul.addr %s4920, 8
        %s4922 = scalar_lea.vmem %s8, %s4921
      $region64: #{resblock_pallas.1} parent=59 // pred_fallthru
        _
    $region60: #{resblock_pallas.1} parent=5 // pred_fallthru
      _
  $region6: #{resblock_pallas.1} parent=0 // loop_footer
    %s18 = sadd.s32 1, %s14
  $region7: #{resblock_pallas.1} parent=0 // loop_footer_branch
    %13 = sbr.rel target = $region3
  $region8: #{resblock_pallas.1} parent=0 // loop_exit
    _

</llo_original>
